<compile_context>
chip_gen: v5e
topology: v5e:2x2
jax: 0.10.0
libtpu: 0.0.40
codegen_flags: <defaults>
</compile_context>

<pallas_src>
import jax
import jax.numpy as jnp
from jax.experimental import pallas as pl
from jax.experimental.pallas import tpu as pltpu

NUM_RES_BLOCKS = 2  # RAMTHead default num_res_blocks


def ramt_head_kernel(x_ref, w0_ref, b0_ref,
                     rw1_ref, rb1_ref, rw2_ref, rb2_ref,
                     hw1_ref, hb1_ref, w2_ref, hb2_ref,
                     out_ref):
    f32, bf16 = jnp.float32, jnp.bfloat16

    # stem: Linear -> ReLU  (Dropout == identity in eval mode)
    h = jnp.dot(x_ref[...], w0_ref[...], preferred_element_type=f32)
    h = jnp.maximum(h + b0_ref[...], 0.0)

    # residual dense blocks (BatchNorm folded into the linears at init)
    for r in range(rw1_ref.shape[0]):        # static, short -> fully unrolled
        res = h
        o = jnp.dot(h.astype(bf16), rw1_ref[r], preferred_element_type=f32)
        o = jnp.maximum(o + rb1_ref[r], 0.0)
        o = jnp.dot(o.astype(bf16), rw2_ref[r], preferred_element_type=f32)
        o = jnp.maximum(o + rb2_ref[r], 0.0)
        h = o + res

    # multitask heads, first layer: one wide fused MXU matmul over all tasks
    hh = jnp.dot(h.astype(bf16), hw1_ref[...], preferred_element_type=f32)
    hh = jnp.maximum(hh + hb1_ref[...], 0.0)          # (TB, T*HH), task-major

    # second layer: per-task dot product = VPU multiply + XLU lane-reduce
    # (replaces the ~98%-zero block-diagonal MXU matmul)
    w2 = w2_ref[...]                                   # (T, HH) f32
    tb, t_tasks = out_ref.shape
    hh_dim = w2.shape[1]
    col = jax.lax.broadcasted_iota(jnp.int32, (tb, t_tasks), 1)
    acc = jnp.zeros((tb, t_tasks), f32)
    for t in range(t_tasks):                           # static, unrolled (23)
        seg = hh[:, t * hh_dim:(t + 1) * hh_dim]                      # (TB, HH)
        dot_t = jnp.sum(seg * w2[t:t + 1, :], axis=-1, keepdims=True)  # (TB, 1)
        acc = acc + jnp.where(col == t, dot_t, 0.0)

    logits = acc + hb2_ref[...]
    out_ref[...] = jax.nn.sigmoid(logits).astype(out_ref.dtype)


def ramt_head_forward(x, p, *, tb=128):
    """Batch-tiled Pallas call. tb=128 fits all generations (multiple of the
    128 MXU rows on v5e; well under the 32 MiB scoped VMEM default on v7x)."""
    B, in_f = x.shape
    rh = p["w0"].shape[1]
    t_tasks, hh = p["w2"].shape
    nres = p["rw1"].shape[0]

    bp = ((B + tb - 1) // tb) * tb           # pad batch to a tile multiple
    x_p = x.astype(jnp.bfloat16)
    if bp != B:
        x_p = jnp.pad(x_p, ((0, bp - B), (0, 0)))

    bf = lambda a: a.astype(jnp.bfloat16)
    args = (x_p, bf(p["w0"]), p["b0"],
            bf(p["rw1"]), p["rb1"], bf(p["rw2"]), p["rb2"],
            bf(p["hw1"]), p["hb1"], p["w2"], p["hb2"])

    def resident_spec(a):
        # full-array block, always block 0 -> stays VMEM-resident across steps
        zeros = (0,) * a.ndim
        return pl.BlockSpec(a.shape, lambda i, _z=zeros: _z)

    flops = 2 * bp * (in_f * rh + nres * 2 * rh * rh
                      + rh * t_tasks * hh + t_tasks * hh)
    bytes_accessed = sum(int(a.size) * a.dtype.itemsize for a in args) \
        + bp * t_tasks * 4

    out = pl.pallas_call(
        ramt_head_kernel,
        out_shape=jax.ShapeDtypeStruct((bp, t_tasks), jnp.float32),
        grid=(bp // tb,),
        in_specs=[pl.BlockSpec((tb, in_f), lambda i: (i, 0))]
                 + [resident_spec(a) for a in args[1:]],
        out_specs=pl.BlockSpec((tb, t_tasks), lambda i: (i, 0)),
        compiler_params=pltpu.CompilerParams(
            dimension_semantics=("parallel",)),
        cost_estimate=pl.CostEstimate(
            flops=flops,
            transcendentals=bp * t_tasks,
            bytes_accessed=bytes_accessed),
    )(*args)
    return out[:B]


def init_params(key, in_features, res_hidden, num_tasks, head_hidden,
                num_res_blocks=NUM_RES_BLOCKS):
    """Deterministic synthetic parameters (PyTorch-style init), BN pre-folded."""
    eps = 1e-5
    keys = iter(jax.random.split(key, 4 + 4 * num_res_blocks + 2 * num_tasks))
    nxt = lambda: next(keys)

    def lin(k, fan_in, fan_out):
        kw, kb = jax.random.split(k)
        bound = 1.0 / jnp.sqrt(jnp.float32(fan_in))
        w = jax.random.uniform(kw, (fan_in, fan_out), jnp.float32, -bound, bound)
        b = jax.random.uniform(kb, (fan_out,), jnp.float32, -bound, bound)
        return w, b

    def bn_affine(k, n):
        k1, k2, k3, k4 = jax.random.split(k, 4)
        gamma = 1.0 + 0.1 * jax.random.normal(k1, (n,), jnp.float32)
        beta = 0.1 * jax.random.normal(k2, (n,), jnp.float32)
        mean = 0.1 * jax.random.normal(k3, (n,), jnp.float32)
        var = jax.random.uniform(k4, (n,), jnp.float32, 0.5, 1.5)
        scale = gamma / jnp.sqrt(var + eps)        # eval-mode BN fold
        shift = beta - mean * scale
        return scale, shift

    w0, b0 = lin(nxt(), in_features, res_hidden)

    rw1, rb1, rw2, rb2 = [], [], [], []
    for _ in range(num_res_blocks):
        w1, bb1 = lin(nxt(), res_hidden, res_hidden)
        s1, t1 = bn_affine(nxt(), res_hidden)
        w2_, bb2 = lin(nxt(), res_hidden, res_hidden)
        s2, t2 = bn_affine(nxt(), res_hidden)
        # fold BN:  (x@W + b)*s + t  ==  x@(W*s) + (b*s + t)   -- exact
        rw1.append(w1 * s1[None, :]); rb1.append(bb1 * s1 + t1)
        rw2.append(w2_ * s2[None, :]); rb2.append(bb2 * s2 + t2)

    hw1_l, hb1_l, w2s_l, hb2_l = [], [], [], []
    for _ in range(num_tasks):
        w1, bb1 = lin(nxt(), res_hidden, head_hidden)
        w2_, bb2 = lin(nxt(), head_hidden, 1)
        hw1_l.append(w1); hb1_l.append(bb1)
        w2s_l.append(w2_[:, 0]); hb2_l.append(bb2[0])

    r = num_res_blocks
    # fuse per-task first linears -> (rh, T*HH), task-major column order
    hw1 = jnp.transpose(jnp.stack(hw1_l, 0), (1, 0, 2)).reshape(
        res_hidden, num_tasks * head_hidden)
    hb1 = jnp.stack(hb1_l, 0).reshape(1, num_tasks * head_hidden)
    w2s = jnp.stack(w2s_l, 0)                       # (T, HH) second-layer rows
    hb2 = jnp.stack(hb2_l).reshape(1, num_tasks)

    return dict(
        w0=w0, b0=b0.reshape(1, res_hidden),
        rw1=jnp.stack(rw1), rb1=jnp.stack(rb1).reshape(r, 1, res_hidden),
        rw2=jnp.stack(rw2), rb2=jnp.stack(rb2).reshape(r, 1, res_hidden),
        hw1=hw1, hb1=hb1, w2=w2s, hb2=hb2,
    )


def ramt_head_reference(x, p):
    """Pure-JAX f32 reference mirroring the PyTorch eval-mode forward."""
    h = jnp.maximum(x @ p["w0"] + p["b0"], 0.0)
    for r in range(p["rw1"].shape[0]):
        res = h
        o = jnp.maximum(h @ p["rw1"][r] + p["rb1"][r], 0.0)
        o = jnp.maximum(o @ p["rw2"][r] + p["rb2"][r], 0.0)
        h = o + res
    hh = jnp.maximum(h @ p["hw1"] + p["hb1"], 0.0)
    t_tasks, hh_dim = p["w2"].shape
    hh3 = hh.reshape(x.shape[0], t_tasks, hh_dim)
    logits = jnp.einsum("bth,th->bt", hh3, p["w2"]) + p["hb2"]
    return jax.nn.sigmoid(logits)


if __name__ == "__main__":
    B, IN_FEATURES, RES_HIDDEN = 200, 32, 64     # B=200 exercises tile padding
    NUM_TASKS, HEAD_HIDDEN = 23, 64

    key = jax.random.PRNGKey(0)
    kx, kp = jax.random.split(key)
    x = jax.random.normal(kx, (B, IN_FEATURES), jnp.float32)
    params = init_params(kp, IN_FEATURES, RES_HIDDEN, NUM_TASKS, HEAD_HIDDEN)

    out = jax.block_until_ready(ramt_head_forward(x, params))
    ref = jax.block_until_ready(ramt_head_reference(x, params))

    assert out.shape == (B, NUM_TASKS), out.shape
    err = float(jnp.max(jnp.abs(out - ref)))
    # bf16 MXU inputs vs. a pure-f32 reference -> loosened tolerance (per review)
    assert err < 3e-2, err
    print("KERNEL_OK")
</pallas_src>

<mosaic_0001>
module attributes {stable_mosaic.version = 11 : i64} {
  func.func @ramt_head_kernel(%arg0: i32, %arg1: memref<128x32xbf16, #tpu.memory_space<vmem>>, %arg2: memref<32x64xbf16, #tpu.memory_space<vmem>>, %arg3: memref<1x64xf32, #tpu.memory_space<vmem>>, %arg4: memref<2x64x64xbf16, #tpu.memory_space<vmem>>, %arg5: memref<2x1x64xf32, #tpu.memory_space<vmem>>, %arg6: memref<2x64x64xbf16, #tpu.memory_space<vmem>>, %arg7: memref<2x1x64xf32, #tpu.memory_space<vmem>>, %arg8: memref<64x1472xbf16, #tpu.memory_space<vmem>>, %arg9: memref<1x1472xf32, #tpu.memory_space<vmem>>, %arg10: memref<23x64xf32, #tpu.memory_space<vmem>>, %arg11: memref<1x23xf32, #tpu.memory_space<vmem>>, %arg12: memref<128x23xf32, #tpu.memory_space<vmem>>) attributes {dimension_semantics = [#tpu.dimension_semantics<parallel>], iteration_bounds = array<i64: 2>, scalar_prefetch = 0 : i64, scratch_operands = 0 : i64, tpu.core_type = #tpu.core_type<tc>, window_params = [{transform_indices = @transform_0, window_bounds = array<i64: 128, 32>}, {pipeline_mode = #tpu.pipeline_mode<synchronous>, transform_indices = @transform_1, window_bounds = array<i64: 32, 64>}, {pipeline_mode = #tpu.pipeline_mode<synchronous>, transform_indices = @transform_2, window_bounds = array<i64: 1, 64>}, {pipeline_mode = #tpu.pipeline_mode<synchronous>, transform_indices = @transform_3, window_bounds = array<i64: 2, 64, 64>}, {pipeline_mode = #tpu.pipeline_mode<synchronous>, transform_indices = @transform_4, window_bounds = array<i64: 2, 1, 64>}, {pipeline_mode = #tpu.pipeline_mode<synchronous>, transform_indices = @transform_5, window_bounds = array<i64: 2, 64, 64>}, {pipeline_mode = #tpu.pipeline_mode<synchronous>, transform_indices = @transform_6, window_bounds = array<i64: 2, 1, 64>}, {pipeline_mode = #tpu.pipeline_mode<synchronous>, transform_indices = @transform_7, window_bounds = array<i64: 64, 1472>}, {pipeline_mode = #tpu.pipeline_mode<synchronous>, transform_indices = @transform_8, window_bounds = array<i64: 1, 1472>}, {pipeline_mode = #tpu.pipeline_mode<synchronous>, transform_indices = @transform_9, window_bounds = array<i64: 23, 64>}, {pipeline_mode = #tpu.pipeline_mode<synchronous>, transform_indices = @transform_10, window_bounds = array<i64: 1, 23>}, {transform_indices = @transform_11, window_bounds = array<i64: 128, 23>}]} {
    %c0 = arith.constant 0 : index
    %c0_0 = arith.constant 0 : index
    %0 = vector.load %arg1[%c0, %c0_0] : memref<128x32xbf16, #tpu.memory_space<vmem>>, vector<128x32xbf16>
    %c0_1 = arith.constant 0 : index
    %c0_2 = arith.constant 0 : index
    %1 = vector.load %arg2[%c0_1, %c0_2] : memref<32x64xbf16, #tpu.memory_space<vmem>>, vector<32x64xbf16>
    %cst = arith.constant dense<0.000000e+00> : vector<128x64xf32>
    %2 = tpu.matmul %0, %1, %cst {dimension_numbers = #tpu.dot_dimension_numbers<[1], [0], [0], [1], [0, 0, 1, 1], [], []>} : vector<128x32xbf16>, vector<32x64xbf16>, vector<128x64xf32> -> vector<128x64xf32>
    %c0_3 = arith.constant 0 : index
    %c0_4 = arith.constant 0 : index
    %3 = vector.load %arg3[%c0_3, %c0_4] : memref<1x64xf32, #tpu.memory_space<vmem>>, vector<1x64xf32>
    %4 = vector.broadcast %3 : vector<1x64xf32> to vector<128x64xf32>
    %5 = arith.addf %2, %4 : vector<128x64xf32>
    %cst_5 = arith.constant 0.000000e+00 : f32
    %6 = vector.broadcast %cst_5 : f32 to vector<128x64xf32>
    %7 = arith.maximumf %5, %6 : vector<128x64xf32>
    %8 = arith.truncf %7 : vector<128x64xf32> to vector<128x64xbf16>
    %c0_6 = arith.constant 0 : index
    %c0_7 = arith.constant 0 : index
    %c0_8 = arith.constant 0 : index
    %9 = vector.load %arg4[%c0_6, %c0_7, %c0_8] : memref<2x64x64xbf16, #tpu.memory_space<vmem>>, vector<1x64x64xbf16>
    %10 = vector.shape_cast %9 : vector<1x64x64xbf16> to vector<64x64xbf16>
    %cst_9 = arith.constant dense<0.000000e+00> : vector<128x64xf32>
    %11 = tpu.matmul %8, %10, %cst_9 {dimension_numbers = #tpu.dot_dimension_numbers<[1], [0], [0], [1], [0, 0, 1, 1], [], []>} : vector<128x64xbf16>, vector<64x64xbf16>, vector<128x64xf32> -> vector<128x64xf32>
    %c0_10 = arith.constant 0 : index
    %c0_11 = arith.constant 0 : index
    %c0_12 = arith.constant 0 : index
    %12 = vector.load %arg5[%c0_10, %c0_11, %c0_12] : memref<2x1x64xf32, #tpu.memory_space<vmem>>, vector<1x1x64xf32>
    %13 = vector.shape_cast %12 : vector<1x1x64xf32> to vector<1x64xf32>
    %14 = vector.broadcast %13 : vector<1x64xf32> to vector<128x64xf32>
    %15 = arith.addf %11, %14 : vector<128x64xf32>
    %cst_13 = arith.constant 0.000000e+00 : f32
    %16 = vector.broadcast %cst_13 : f32 to vector<128x64xf32>
    %17 = arith.maximumf %15, %16 : vector<128x64xf32>
    %18 = arith.truncf %17 : vector<128x64xf32> to vector<128x64xbf16>
    %c0_14 = arith.constant 0 : index
    %c0_15 = arith.constant 0 : index
    %c0_16 = arith.constant 0 : index
    %19 = vector.load %arg6[%c0_14, %c0_15, %c0_16] : memref<2x64x64xbf16, #tpu.memory_space<vmem>>, vector<1x64x64xbf16>
    %20 = vector.shape_cast %19 : vector<1x64x64xbf16> to vector<64x64xbf16>
    %cst_17 = arith.constant dense<0.000000e+00> : vector<128x64xf32>
    %21 = tpu.matmul %18, %20, %cst_17 {dimension_numbers = #tpu.dot_dimension_numbers<[1], [0], [0], [1], [0, 0, 1, 1], [], []>} : vector<128x64xbf16>, vector<64x64xbf16>, vector<128x64xf32> -> vector<128x64xf32>
    %c0_18 = arith.constant 0 : index
    %c0_19 = arith.constant 0 : index
    %c0_20 = arith.constant 0 : index
    %22 = vector.load %arg7[%c0_18, %c0_19, %c0_20] : memref<2x1x64xf32, #tpu.memory_space<vmem>>, vector<1x1x64xf32>
    %23 = vector.shape_cast %22 : vector<1x1x64xf32> to vector<1x64xf32>
    %24 = vector.broadcast %23 : vector<1x64xf32> to vector<128x64xf32>
    %25 = arith.addf %21, %24 : vector<128x64xf32>
    %cst_21 = arith.constant 0.000000e+00 : f32
    %26 = vector.broadcast %cst_21 : f32 to vector<128x64xf32>
    %27 = arith.maximumf %25, %26 : vector<128x64xf32>
    %28 = arith.addf %27, %7 : vector<128x64xf32>
    %29 = arith.truncf %28 : vector<128x64xf32> to vector<128x64xbf16>
    %c1 = arith.constant 1 : index
    %c0_22 = arith.constant 0 : index
    %c0_23 = arith.constant 0 : index
    %30 = vector.load %arg4[%c1, %c0_22, %c0_23] : memref<2x64x64xbf16, #tpu.memory_space<vmem>>, vector<1x64x64xbf16>
    %31 = vector.shape_cast %30 : vector<1x64x64xbf16> to vector<64x64xbf16>
    %cst_24 = arith.constant dense<0.000000e+00> : vector<128x64xf32>
    %32 = tpu.matmul %29, %31, %cst_24 {dimension_numbers = #tpu.dot_dimension_numbers<[1], [0], [0], [1], [0, 0, 1, 1], [], []>} : vector<128x64xbf16>, vector<64x64xbf16>, vector<128x64xf32> -> vector<128x64xf32>
    %c1_25 = arith.constant 1 : index
    %c0_26 = arith.constant 0 : index
    %c0_27 = arith.constant 0 : index
    %33 = vector.load %arg5[%c1_25, %c0_26, %c0_27] : memref<2x1x64xf32, #tpu.memory_space<vmem>>, vector<1x1x64xf32>
    %34 = vector.shape_cast %33 : vector<1x1x64xf32> to vector<1x64xf32>
    %35 = vector.broadcast %34 : vector<1x64xf32> to vector<128x64xf32>
    %36 = arith.addf %32, %35 : vector<128x64xf32>
    %cst_28 = arith.constant 0.000000e+00 : f32
    %37 = vector.broadcast %cst_28 : f32 to vector<128x64xf32>
    %38 = arith.maximumf %36, %37 : vector<128x64xf32>
    %39 = arith.truncf %38 : vector<128x64xf32> to vector<128x64xbf16>
    %c1_29 = arith.constant 1 : index
    %c0_30 = arith.constant 0 : index
    %c0_31 = arith.constant 0 : index
    %40 = vector.load %arg6[%c1_29, %c0_30, %c0_31] : memref<2x64x64xbf16, #tpu.memory_space<vmem>>, vector<1x64x64xbf16>
    %41 = vector.shape_cast %40 : vector<1x64x64xbf16> to vector<64x64xbf16>
    %cst_32 = arith.constant dense<0.000000e+00> : vector<128x64xf32>
    %42 = tpu.matmul %39, %41, %cst_32 {dimension_numbers = #tpu.dot_dimension_numbers<[1], [0], [0], [1], [0, 0, 1, 1], [], []>} : vector<128x64xbf16>, vector<64x64xbf16>, vector<128x64xf32> -> vector<128x64xf32>
    %c1_33 = arith.constant 1 : index
    %c0_34 = arith.constant 0 : index
    %c0_35 = arith.constant 0 : index
    %43 = vector.load %arg7[%c1_33, %c0_34, %c0_35] : memref<2x1x64xf32, #tpu.memory_space<vmem>>, vector<1x1x64xf32>
    %44 = vector.shape_cast %43 : vector<1x1x64xf32> to vector<1x64xf32>
    %45 = vector.broadcast %44 : vector<1x64xf32> to vector<128x64xf32>
    %46 = arith.addf %42, %45 : vector<128x64xf32>
    %cst_36 = arith.constant 0.000000e+00 : f32
    %47 = vector.broadcast %cst_36 : f32 to vector<128x64xf32>
    %48 = arith.maximumf %46, %47 : vector<128x64xf32>
    %49 = arith.addf %48, %28 : vector<128x64xf32>
    %50 = arith.truncf %49 : vector<128x64xf32> to vector<128x64xbf16>
    %c0_37 = arith.constant 0 : index
    %c0_38 = arith.constant 0 : index
    %51 = vector.load %arg8[%c0_37, %c0_38] : memref<64x1472xbf16, #tpu.memory_space<vmem>>, vector<64x1472xbf16>
    %cst_39 = arith.constant dense<0.000000e+00> : vector<128x1472xf32>
    %52 = tpu.matmul %50, %51, %cst_39 {dimension_numbers = #tpu.dot_dimension_numbers<[1], [0], [0], [1], [0, 0, 1, 1], [], []>} : vector<128x64xbf16>, vector<64x1472xbf16>, vector<128x1472xf32> -> vector<128x1472xf32>
    %c0_40 = arith.constant 0 : index
    %c0_41 = arith.constant 0 : index
    %53 = vector.load %arg9[%c0_40, %c0_41] : memref<1x1472xf32, #tpu.memory_space<vmem>>, vector<1x1472xf32>
    %54 = vector.broadcast %53 : vector<1x1472xf32> to vector<128x1472xf32>
    %55 = arith.addf %52, %54 : vector<128x1472xf32>
    %cst_42 = arith.constant 0.000000e+00 : f32
    %56 = vector.broadcast %cst_42 : f32 to vector<128x1472xf32>
    %57 = arith.maximumf %55, %56 : vector<128x1472xf32>
    %c0_43 = arith.constant 0 : index
    %c0_44 = arith.constant 0 : index
    %58 = vector.load %arg10[%c0_43, %c0_44] : memref<23x64xf32, #tpu.memory_space<vmem>>, vector<23x64xf32>
    %59 = tpu.iota {dimensions = array<i32: 1>} : vector<128x23xi32>
    %cst_45 = arith.constant 0.000000e+00 : f32
    %60 = vector.broadcast %cst_45 : f32 to vector<128x23xf32>
    %61 = vector.extract_strided_slice %57 {offsets = [0, 0], sizes = [128, 64], strides = [1, 1]} : vector<128x1472xf32> to vector<128x64xf32>
    %62 = vector.extract_strided_slice %58 {offsets = [0, 0], sizes = [1, 64], strides = [1, 1]} : vector<23x64xf32> to vector<1x64xf32>
    %63 = vector.broadcast %62 : vector<1x64xf32> to vector<128x64xf32>
    %64 = arith.mulf %61, %63 : vector<128x64xf32>
    %cst_46 = arith.constant dense<0.000000e+00> : vector<128xf32>
    %65 = vector.multi_reduction <add>, %64, %cst_46 [1] : vector<128x64xf32> to vector<128xf32>
    %66 = vector.shape_cast %65 : vector<128xf32> to vector<128x1xf32>
    %c0_i32 = arith.constant 0 : i32
    %67 = vector.broadcast %c0_i32 : i32 to vector<128x23xi32>
    %68 = arith.cmpi eq, %59, %67 : vector<128x23xi32>
    %cst_47 = arith.constant 0.000000e+00 : f32
    %69 = vector.shape_cast %66 : vector<128x1xf32> to vector<128x1xf32>
    %70 = vector.broadcast %69 : vector<128x1xf32> to vector<128x23xf32>
    %71 = vector.broadcast %cst_47 : f32 to vector<128x23xf32>
    %72 = arith.select %68, %70, %71 : vector<128x23xi1>, vector<128x23xf32>
    %73 = arith.addf %60, %72 : vector<128x23xf32>
    %74 = vector.extract_strided_slice %57 {offsets = [0, 64], sizes = [128, 64], strides = [1, 1]} : vector<128x1472xf32> to vector<128x64xf32>
    %75 = vector.extract_strided_slice %58 {offsets = [1, 0], sizes = [1, 64], strides = [1, 1]} : vector<23x64xf32> to vector<1x64xf32>
    %76 = vector.broadcast %75 : vector<1x64xf32> to vector<128x64xf32>
    %77 = arith.mulf %74, %76 : vector<128x64xf32>
    %cst_48 = arith.constant dense<0.000000e+00> : vector<128xf32>
    %78 = vector.multi_reduction <add>, %77, %cst_48 [1] : vector<128x64xf32> to vector<128xf32>
    %79 = vector.shape_cast %78 : vector<128xf32> to vector<128x1xf32>
    %c1_i32 = arith.constant 1 : i32
    %80 = vector.broadcast %c1_i32 : i32 to vector<128x23xi32>
    %81 = arith.cmpi eq, %59, %80 : vector<128x23xi32>
    %cst_49 = arith.constant 0.000000e+00 : f32
    %82 = vector.shape_cast %79 : vector<128x1xf32> to vector<128x1xf32>
    %83 = vector.broadcast %82 : vector<128x1xf32> to vector<128x23xf32>
    %84 = vector.broadcast %cst_49 : f32 to vector<128x23xf32>
    %85 = arith.select %81, %83, %84 : vector<128x23xi1>, vector<128x23xf32>
    %86 = arith.addf %73, %85 : vector<128x23xf32>
    %87 = vector.extract_strided_slice %57 {offsets = [0, 128], sizes = [128, 64], strides = [1, 1]} : vector<128x1472xf32> to vector<128x64xf32>
    %88 = vector.extract_strided_slice %58 {offsets = [2, 0], sizes = [1, 64], strides = [1, 1]} : vector<23x64xf32> to vector<1x64xf32>
    %89 = vector.broadcast %88 : vector<1x64xf32> to vector<128x64xf32>
    %90 = arith.mulf %87, %89 : vector<128x64xf32>
    %cst_50 = arith.constant dense<0.000000e+00> : vector<128xf32>
    %91 = vector.multi_reduction <add>, %90, %cst_50 [1] : vector<128x64xf32> to vector<128xf32>
    %92 = vector.shape_cast %91 : vector<128xf32> to vector<128x1xf32>
    %c2_i32 = arith.constant 2 : i32
    %93 = vector.broadcast %c2_i32 : i32 to vector<128x23xi32>
    %94 = arith.cmpi eq, %59, %93 : vector<128x23xi32>
    %cst_51 = arith.constant 0.000000e+00 : f32
    %95 = vector.shape_cast %92 : vector<128x1xf32> to vector<128x1xf32>
    %96 = vector.broadcast %95 : vector<128x1xf32> to vector<128x23xf32>
    %97 = vector.broadcast %cst_51 : f32 to vector<128x23xf32>
    %98 = arith.select %94, %96, %97 : vector<128x23xi1>, vector<128x23xf32>
    %99 = arith.addf %86, %98 : vector<128x23xf32>
    %100 = vector.extract_strided_slice %57 {offsets = [0, 192], sizes = [128, 64], strides = [1, 1]} : vector<128x1472xf32> to vector<128x64xf32>
    %101 = vector.extract_strided_slice %58 {offsets = [3, 0], sizes = [1, 64], strides = [1, 1]} : vector<23x64xf32> to vector<1x64xf32>
    %102 = vector.broadcast %101 : vector<1x64xf32> to vector<128x64xf32>
    %103 = arith.mulf %100, %102 : vector<128x64xf32>
    %cst_52 = arith.constant dense<0.000000e+00> : vector<128xf32>
    %104 = vector.multi_reduction <add>, %103, %cst_52 [1] : vector<128x64xf32> to vector<128xf32>
    %105 = vector.shape_cast %104 : vector<128xf32> to vector<128x1xf32>
    %c3_i32 = arith.constant 3 : i32
    %106 = vector.broadcast %c3_i32 : i32 to vector<128x23xi32>
    %107 = arith.cmpi eq, %59, %106 : vector<128x23xi32>
    %cst_53 = arith.constant 0.000000e+00 : f32
    %108 = vector.shape_cast %105 : vector<128x1xf32> to vector<128x1xf32>
    %109 = vector.broadcast %108 : vector<128x1xf32> to vector<128x23xf32>
    %110 = vector.broadcast %cst_53 : f32 to vector<128x23xf32>
    %111 = arith.select %107, %109, %110 : vector<128x23xi1>, vector<128x23xf32>
    %112 = arith.addf %99, %111 : vector<128x23xf32>
    %113 = vector.extract_strided_slice %57 {offsets = [0, 256], sizes = [128, 64], strides = [1, 1]} : vector<128x1472xf32> to vector<128x64xf32>
    %114 = vector.extract_strided_slice %58 {offsets = [4, 0], sizes = [1, 64], strides = [1, 1]} : vector<23x64xf32> to vector<1x64xf32>
    %115 = vector.broadcast %114 : vector<1x64xf32> to vector<128x64xf32>
    %116 = arith.mulf %113, %115 : vector<128x64xf32>
    %cst_54 = arith.constant dense<0.000000e+00> : vector<128xf32>
    %117 = vector.multi_reduction <add>, %116, %cst_54 [1] : vector<128x64xf32> to vector<128xf32>
    %118 = vector.shape_cast %117 : vector<128xf32> to vector<128x1xf32>
    %c4_i32 = arith.constant 4 : i32
    %119 = vector.broadcast %c4_i32 : i32 to vector<128x23xi32>
    %120 = arith.cmpi eq, %59, %119 : vector<128x23xi32>
    %cst_55 = arith.constant 0.000000e+00 : f32
    %121 = vector.shape_cast %118 : vector<128x1xf32> to vector<128x1xf32>
    %122 = vector.broadcast %121 : vector<128x1xf32> to vector<128x23xf32>
    %123 = vector.broadcast %cst_55 : f32 to vector<128x23xf32>
    %124 = arith.select %120, %122, %123 : vector<128x23xi1>, vector<128x23xf32>
    %125 = arith.addf %112, %124 : vector<128x23xf32>
    %126 = vector.extract_strided_slice %57 {offsets = [0, 320], sizes = [128, 64], strides = [1, 1]} : vector<128x1472xf32> to vector<128x64xf32>
    %127 = vector.extract_strided_slice %58 {offsets = [5, 0], sizes = [1, 64], strides = [1, 1]} : vector<23x64xf32> to vector<1x64xf32>
    %128 = vector.broadcast %127 : vector<1x64xf32> to vector<128x64xf32>
    %129 = arith.mulf %126, %128 : vector<128x64xf32>
    %cst_56 = arith.constant dense<0.000000e+00> : vector<128xf32>
    %130 = vector.multi_reduction <add>, %129, %cst_56 [1] : vector<128x64xf32> to vector<128xf32>
    %131 = vector.shape_cast %130 : vector<128xf32> to vector<128x1xf32>
    %c5_i32 = arith.constant 5 : i32
    %132 = vector.broadcast %c5_i32 : i32 to vector<128x23xi32>
    %133 = arith.cmpi eq, %59, %132 : vector<128x23xi32>
    %cst_57 = arith.constant 0.000000e+00 : f32
    %134 = vector.shape_cast %131 : vector<128x1xf32> to vector<128x1xf32>
    %135 = vector.broadcast %134 : vector<128x1xf32> to vector<128x23xf32>
    %136 = vector.broadcast %cst_57 : f32 to vector<128x23xf32>
    %137 = arith.select %133, %135, %136 : vector<128x23xi1>, vector<128x23xf32>
    %138 = arith.addf %125, %137 : vector<128x23xf32>
    %139 = vector.extract_strided_slice %57 {offsets = [0, 384], sizes = [128, 64], strides = [1, 1]} : vector<128x1472xf32> to vector<128x64xf32>
    %140 = vector.extract_strided_slice %58 {offsets = [6, 0], sizes = [1, 64], strides = [1, 1]} : vector<23x64xf32> to vector<1x64xf32>
    %141 = vector.broadcast %140 : vector<1x64xf32> to vector<128x64xf32>
    %142 = arith.mulf %139, %141 : vector<128x64xf32>
    %cst_58 = arith.constant dense<0.000000e+00> : vector<128xf32>
    %143 = vector.multi_reduction <add>, %142, %cst_58 [1] : vector<128x64xf32> to vector<128xf32>
    %144 = vector.shape_cast %143 : vector<128xf32> to vector<128x1xf32>
    %c6_i32 = arith.constant 6 : i32
    %145 = vector.broadcast %c6_i32 : i32 to vector<128x23xi32>
    %146 = arith.cmpi eq, %59, %145 : vector<128x23xi32>
    %cst_59 = arith.constant 0.000000e+00 : f32
    %147 = vector.shape_cast %144 : vector<128x1xf32> to vector<128x1xf32>
    %148 = vector.broadcast %147 : vector<128x1xf32> to vector<128x23xf32>
    %149 = vector.broadcast %cst_59 : f32 to vector<128x23xf32>
    %150 = arith.select %146, %148, %149 : vector<128x23xi1>, vector<128x23xf32>
    %151 = arith.addf %138, %150 : vector<128x23xf32>
    %152 = vector.extract_strided_slice %57 {offsets = [0, 448], sizes = [128, 64], strides = [1, 1]} : vector<128x1472xf32> to vector<128x64xf32>
    %153 = vector.extract_strided_slice %58 {offsets = [7, 0], sizes = [1, 64], strides = [1, 1]} : vector<23x64xf32> to vector<1x64xf32>
    %154 = vector.broadcast %153 : vector<1x64xf32> to vector<128x64xf32>
    %155 = arith.mulf %152, %154 : vector<128x64xf32>
    %cst_60 = arith.constant dense<0.000000e+00> : vector<128xf32>
    %156 = vector.multi_reduction <add>, %155, %cst_60 [1] : vector<128x64xf32> to vector<128xf32>
    %157 = vector.shape_cast %156 : vector<128xf32> to vector<128x1xf32>
    %c7_i32 = arith.constant 7 : i32
    %158 = vector.broadcast %c7_i32 : i32 to vector<128x23xi32>
    %159 = arith.cmpi eq, %59, %158 : vector<128x23xi32>
    %cst_61 = arith.constant 0.000000e+00 : f32
    %160 = vector.shape_cast %157 : vector<128x1xf32> to vector<128x1xf32>
    %161 = vector.broadcast %160 : vector<128x1xf32> to vector<128x23xf32>
    %162 = vector.broadcast %cst_61 : f32 to vector<128x23xf32>
    %163 = arith.select %159, %161, %162 : vector<128x23xi1>, vector<128x23xf32>
    %164 = arith.addf %151, %163 : vector<128x23xf32>
    %165 = vector.extract_strided_slice %57 {offsets = [0, 512], sizes = [128, 64], strides = [1, 1]} : vector<128x1472xf32> to vector<128x64xf32>
    %166 = vector.extract_strided_slice %58 {offsets = [8, 0], sizes = [1, 64], strides = [1, 1]} : vector<23x64xf32> to vector<1x64xf32>
    %167 = vector.broadcast %166 : vector<1x64xf32> to vector<128x64xf32>
    %168 = arith.mulf %165, %167 : vector<128x64xf32>
    %cst_62 = arith.constant dense<0.000000e+00> : vector<128xf32>
    %169 = vector.multi_reduction <add>, %168, %cst_62 [1] : vector<128x64xf32> to vector<128xf32>
    %170 = vector.shape_cast %169 : vector<128xf32> to vector<128x1xf32>
    %c8_i32 = arith.constant 8 : i32
    %171 = vector.broadcast %c8_i32 : i32 to vector<128x23xi32>
    %172 = arith.cmpi eq, %59, %171 : vector<128x23xi32>
    %cst_63 = arith.constant 0.000000e+00 : f32
    %173 = vector.shape_cast %170 : vector<128x1xf32> to vector<128x1xf32>
    %174 = vector.broadcast %173 : vector<128x1xf32> to vector<128x23xf32>
    %175 = vector.broadcast %cst_63 : f32 to vector<128x23xf32>
    %176 = arith.select %172, %174, %175 : vector<128x23xi1>, vector<128x23xf32>
    %177 = arith.addf %164, %176 : vector<128x23xf32>
    %178 = vector.extract_strided_slice %57 {offsets = [0, 576], sizes = [128, 64], strides = [1, 1]} : vector<128x1472xf32> to vector<128x64xf32>
    %179 = vector.extract_strided_slice %58 {offsets = [9, 0], sizes = [1, 64], strides = [1, 1]} : vector<23x64xf32> to vector<1x64xf32>
    %180 = vector.broadcast %179 : vector<1x64xf32> to vector<128x64xf32>
    %181 = arith.mulf %178, %180 : vector<128x64xf32>
    %cst_64 = arith.constant dense<0.000000e+00> : vector<128xf32>
    %182 = vector.multi_reduction <add>, %181, %cst_64 [1] : vector<128x64xf32> to vector<128xf32>
    %183 = vector.shape_cast %182 : vector<128xf32> to vector<128x1xf32>
    %c9_i32 = arith.constant 9 : i32
    %184 = vector.broadcast %c9_i32 : i32 to vector<128x23xi32>
    %185 = arith.cmpi eq, %59, %184 : vector<128x23xi32>
    %cst_65 = arith.constant 0.000000e+00 : f32
    %186 = vector.shape_cast %183 : vector<128x1xf32> to vector<128x1xf32>
    %187 = vector.broadcast %186 : vector<128x1xf32> to vector<128x23xf32>
    %188 = vector.broadcast %cst_65 : f32 to vector<128x23xf32>
    %189 = arith.select %185, %187, %188 : vector<128x23xi1>, vector<128x23xf32>
    %190 = arith.addf %177, %189 : vector<128x23xf32>
    %191 = vector.extract_strided_slice %57 {offsets = [0, 640], sizes = [128, 64], strides = [1, 1]} : vector<128x1472xf32> to vector<128x64xf32>
    %192 = vector.extract_strided_slice %58 {offsets = [10, 0], sizes = [1, 64], strides = [1, 1]} : vector<23x64xf32> to vector<1x64xf32>
    %193 = vector.broadcast %192 : vector<1x64xf32> to vector<128x64xf32>
    %194 = arith.mulf %191, %193 : vector<128x64xf32>
    %cst_66 = arith.constant dense<0.000000e+00> : vector<128xf32>
    %195 = vector.multi_reduction <add>, %194, %cst_66 [1] : vector<128x64xf32> to vector<128xf32>
    %196 = vector.shape_cast %195 : vector<128xf32> to vector<128x1xf32>
    %c10_i32 = arith.constant 10 : i32
    %197 = vector.broadcast %c10_i32 : i32 to vector<128x23xi32>
    %198 = arith.cmpi eq, %59, %197 : vector<128x23xi32>
    %cst_67 = arith.constant 0.000000e+00 : f32
    %199 = vector.shape_cast %196 : vector<128x1xf32> to vector<128x1xf32>
    %200 = vector.broadcast %199 : vector<128x1xf32> to vector<128x23xf32>
    %201 = vector.broadcast %cst_67 : f32 to vector<128x23xf32>
    %202 = arith.select %198, %200, %201 : vector<128x23xi1>, vector<128x23xf32>
    %203 = arith.addf %190, %202 : vector<128x23xf32>
    %204 = vector.extract_strided_slice %57 {offsets = [0, 704], sizes = [128, 64], strides = [1, 1]} : vector<128x1472xf32> to vector<128x64xf32>
    %205 = vector.extract_strided_slice %58 {offsets = [11, 0], sizes = [1, 64], strides = [1, 1]} : vector<23x64xf32> to vector<1x64xf32>
    %206 = vector.broadcast %205 : vector<1x64xf32> to vector<128x64xf32>
    %207 = arith.mulf %204, %206 : vector<128x64xf32>
    %cst_68 = arith.constant dense<0.000000e+00> : vector<128xf32>
    %208 = vector.multi_reduction <add>, %207, %cst_68 [1] : vector<128x64xf32> to vector<128xf32>
    %209 = vector.shape_cast %208 : vector<128xf32> to vector<128x1xf32>
    %c11_i32 = arith.constant 11 : i32
    %210 = vector.broadcast %c11_i32 : i32 to vector<128x23xi32>
    %211 = arith.cmpi eq, %59, %210 : vector<128x23xi32>
    %cst_69 = arith.constant 0.000000e+00 : f32
    %212 = vector.shape_cast %209 : vector<128x1xf32> to vector<128x1xf32>
    %213 = vector.broadcast %212 : vector<128x1xf32> to vector<128x23xf32>
    %214 = vector.broadcast %cst_69 : f32 to vector<128x23xf32>
    %215 = arith.select %211, %213, %214 : vector<128x23xi1>, vector<128x23xf32>
    %216 = arith.addf %203, %215 : vector<128x23xf32>
    %217 = vector.extract_strided_slice %57 {offsets = [0, 768], sizes = [128, 64], strides = [1, 1]} : vector<128x1472xf32> to vector<128x64xf32>
    %218 = vector.extract_strided_slice %58 {offsets = [12, 0], sizes = [1, 64], strides = [1, 1]} : vector<23x64xf32> to vector<1x64xf32>
    %219 = vector.broadcast %218 : vector<1x64xf32> to vector<128x64xf32>
    %220 = arith.mulf %217, %219 : vector<128x64xf32>
    %cst_70 = arith.constant dense<0.000000e+00> : vector<128xf32>
    %221 = vector.multi_reduction <add>, %220, %cst_70 [1] : vector<128x64xf32> to vector<128xf32>
    %222 = vector.shape_cast %221 : vector<128xf32> to vector<128x1xf32>
    %c12_i32 = arith.constant 12 : i32
    %223 = vector.broadcast %c12_i32 : i32 to vector<128x23xi32>
    %224 = arith.cmpi eq, %59, %223 : vector<128x23xi32>
    %cst_71 = arith.constant 0.000000e+00 : f32
    %225 = vector.shape_cast %222 : vector<128x1xf32> to vector<128x1xf32>
    %226 = vector.broadcast %225 : vector<128x1xf32> to vector<128x23xf32>
    %227 = vector.broadcast %cst_71 : f32 to vector<128x23xf32>
    %228 = arith.select %224, %226, %227 : vector<128x23xi1>, vector<128x23xf32>
    %229 = arith.addf %216, %228 : vector<128x23xf32>
    %230 = vector.extract_strided_slice %57 {offsets = [0, 832], sizes = [128, 64], strides = [1, 1]} : vector<128x1472xf32> to vector<128x64xf32>
    %231 = vector.extract_strided_slice %58 {offsets = [13, 0], sizes = [1, 64], strides = [1, 1]} : vector<23x64xf32> to vector<1x64xf32>
    %232 = vector.broadcast %231 : vector<1x64xf32> to vector<128x64xf32>
    %233 = arith.mulf %230, %232 : vector<128x64xf32>
    %cst_72 = arith.constant dense<0.000000e+00> : vector<128xf32>
    %234 = vector.multi_reduction <add>, %233, %cst_72 [1] : vector<128x64xf32> to vector<128xf32>
    %235 = vector.shape_cast %234 : vector<128xf32> to vector<128x1xf32>
    %c13_i32 = arith.constant 13 : i32
    %236 = vector.broadcast %c13_i32 : i32 to vector<128x23xi32>
    %237 = arith.cmpi eq, %59, %236 : vector<128x23xi32>
    %cst_73 = arith.constant 0.000000e+00 : f32
    %238 = vector.shape_cast %235 : vector<128x1xf32> to vector<128x1xf32>
    %239 = vector.broadcast %238 : vector<128x1xf32> to vector<128x23xf32>
    %240 = vector.broadcast %cst_73 : f32 to vector<128x23xf32>
    %241 = arith.select %237, %239, %240 : vector<128x23xi1>, vector<128x23xf32>
    %242 = arith.addf %229, %241 : vector<128x23xf32>
    %243 = vector.extract_strided_slice %57 {offsets = [0, 896], sizes = [128, 64], strides = [1, 1]} : vector<128x1472xf32> to vector<128x64xf32>
    %244 = vector.extract_strided_slice %58 {offsets = [14, 0], sizes = [1, 64], strides = [1, 1]} : vector<23x64xf32> to vector<1x64xf32>
    %245 = vector.broadcast %244 : vector<1x64xf32> to vector<128x64xf32>
    %246 = arith.mulf %243, %245 : vector<128x64xf32>
    %cst_74 = arith.constant dense<0.000000e+00> : vector<128xf32>
    %247 = vector.multi_reduction <add>, %246, %cst_74 [1] : vector<128x64xf32> to vector<128xf32>
    %248 = vector.shape_cast %247 : vector<128xf32> to vector<128x1xf32>
    %c14_i32 = arith.constant 14 : i32
    %249 = vector.broadcast %c14_i32 : i32 to vector<128x23xi32>
    %250 = arith.cmpi eq, %59, %249 : vector<128x23xi32>
    %cst_75 = arith.constant 0.000000e+00 : f32
    %251 = vector.shape_cast %248 : vector<128x1xf32> to vector<128x1xf32>
    %252 = vector.broadcast %251 : vector<128x1xf32> to vector<128x23xf32>
    %253 = vector.broadcast %cst_75 : f32 to vector<128x23xf32>
    %254 = arith.select %250, %252, %253 : vector<128x23xi1>, vector<128x23xf32>
    %255 = arith.addf %242, %254 : vector<128x23xf32>
    %256 = vector.extract_strided_slice %57 {offsets = [0, 960], sizes = [128, 64], strides = [1, 1]} : vector<128x1472xf32> to vector<128x64xf32>
    %257 = vector.extract_strided_slice %58 {offsets = [15, 0], sizes = [1, 64], strides = [1, 1]} : vector<23x64xf32> to vector<1x64xf32>
    %258 = vector.broadcast %257 : vector<1x64xf32> to vector<128x64xf32>
    %259 = arith.mulf %256, %258 : vector<128x64xf32>
    %cst_76 = arith.constant dense<0.000000e+00> : vector<128xf32>
    %260 = vector.multi_reduction <add>, %259, %cst_76 [1] : vector<128x64xf32> to vector<128xf32>
    %261 = vector.shape_cast %260 : vector<128xf32> to vector<128x1xf32>
    %c15_i32 = arith.constant 15 : i32
    %262 = vector.broadcast %c15_i32 : i32 to vector<128x23xi32>
    %263 = arith.cmpi eq, %59, %262 : vector<128x23xi32>
    %cst_77 = arith.constant 0.000000e+00 : f32
    %264 = vector.shape_cast %261 : vector<128x1xf32> to vector<128x1xf32>
    %265 = vector.broadcast %264 : vector<128x1xf32> to vector<128x23xf32>
    %266 = vector.broadcast %cst_77 : f32 to vector<128x23xf32>
    %267 = arith.select %263, %265, %266 : vector<128x23xi1>, vector<128x23xf32>
    %268 = arith.addf %255, %267 : vector<128x23xf32>
    %269 = vector.extract_strided_slice %57 {offsets = [0, 1024], sizes = [128, 64], strides = [1, 1]} : vector<128x1472xf32> to vector<128x64xf32>
    %270 = vector.extract_strided_slice %58 {offsets = [16, 0], sizes = [1, 64], strides = [1, 1]} : vector<23x64xf32> to vector<1x64xf32>
    %271 = vector.broadcast %270 : vector<1x64xf32> to vector<128x64xf32>
    %272 = arith.mulf %269, %271 : vector<128x64xf32>
    %cst_78 = arith.constant dense<0.000000e+00> : vector<128xf32>
    %273 = vector.multi_reduction <add>, %272, %cst_78 [1] : vector<128x64xf32> to vector<128xf32>
    %274 = vector.shape_cast %273 : vector<128xf32> to vector<128x1xf32>
    %c16_i32 = arith.constant 16 : i32
    %275 = vector.broadcast %c16_i32 : i32 to vector<128x23xi32>
    %276 = arith.cmpi eq, %59, %275 : vector<128x23xi32>
    %cst_79 = arith.constant 0.000000e+00 : f32
    %277 = vector.shape_cast %274 : vector<128x1xf32> to vector<128x1xf32>
    %278 = vector.broadcast %277 : vector<128x1xf32> to vector<128x23xf32>
    %279 = vector.broadcast %cst_79 : f32 to vector<128x23xf32>
    %280 = arith.select %276, %278, %279 : vector<128x23xi1>, vector<128x23xf32>
    %281 = arith.addf %268, %280 : vector<128x23xf32>
    %282 = vector.extract_strided_slice %57 {offsets = [0, 1088], sizes = [128, 64], strides = [1, 1]} : vector<128x1472xf32> to vector<128x64xf32>
    %283 = vector.extract_strided_slice %58 {offsets = [17, 0], sizes = [1, 64], strides = [1, 1]} : vector<23x64xf32> to vector<1x64xf32>
    %284 = vector.broadcast %283 : vector<1x64xf32> to vector<128x64xf32>
    %285 = arith.mulf %282, %284 : vector<128x64xf32>
    %cst_80 = arith.constant dense<0.000000e+00> : vector<128xf32>
    %286 = vector.multi_reduction <add>, %285, %cst_80 [1] : vector<128x64xf32> to vector<128xf32>
    %287 = vector.shape_cast %286 : vector<128xf32> to vector<128x1xf32>
    %c17_i32 = arith.constant 17 : i32
    %288 = vector.broadcast %c17_i32 : i32 to vector<128x23xi32>
    %289 = arith.cmpi eq, %59, %288 : vector<128x23xi32>
    %cst_81 = arith.constant 0.000000e+00 : f32
    %290 = vector.shape_cast %287 : vector<128x1xf32> to vector<128x1xf32>
    %291 = vector.broadcast %290 : vector<128x1xf32> to vector<128x23xf32>
    %292 = vector.broadcast %cst_81 : f32 to vector<128x23xf32>
    %293 = arith.select %289, %291, %292 : vector<128x23xi1>, vector<128x23xf32>
    %294 = arith.addf %281, %293 : vector<128x23xf32>
    %295 = vector.extract_strided_slice %57 {offsets = [0, 1152], sizes = [128, 64], strides = [1, 1]} : vector<128x1472xf32> to vector<128x64xf32>
    %296 = vector.extract_strided_slice %58 {offsets = [18, 0], sizes = [1, 64], strides = [1, 1]} : vector<23x64xf32> to vector<1x64xf32>
    %297 = vector.broadcast %296 : vector<1x64xf32> to vector<128x64xf32>
    %298 = arith.mulf %295, %297 : vector<128x64xf32>
    %cst_82 = arith.constant dense<0.000000e+00> : vector<128xf32>
    %299 = vector.multi_reduction <add>, %298, %cst_82 [1] : vector<128x64xf32> to vector<128xf32>
    %300 = vector.shape_cast %299 : vector<128xf32> to vector<128x1xf32>
    %c18_i32 = arith.constant 18 : i32
    %301 = vector.broadcast %c18_i32 : i32 to vector<128x23xi32>
    %302 = arith.cmpi eq, %59, %301 : vector<128x23xi32>
    %cst_83 = arith.constant 0.000000e+00 : f32
    %303 = vector.shape_cast %300 : vector<128x1xf32> to vector<128x1xf32>
    %304 = vector.broadcast %303 : vector<128x1xf32> to vector<128x23xf32>
    %305 = vector.broadcast %cst_83 : f32 to vector<128x23xf32>
    %306 = arith.select %302, %304, %305 : vector<128x23xi1>, vector<128x23xf32>
    %307 = arith.addf %294, %306 : vector<128x23xf32>
    %308 = vector.extract_strided_slice %57 {offsets = [0, 1216], sizes = [128, 64], strides = [1, 1]} : vector<128x1472xf32> to vector<128x64xf32>
    %309 = vector.extract_strided_slice %58 {offsets = [19, 0], sizes = [1, 64], strides = [1, 1]} : vector<23x64xf32> to vector<1x64xf32>
    %310 = vector.broadcast %309 : vector<1x64xf32> to vector<128x64xf32>
    %311 = arith.mulf %308, %310 : vector<128x64xf32>
    %cst_84 = arith.constant dense<0.000000e+00> : vector<128xf32>
    %312 = vector.multi_reduction <add>, %311, %cst_84 [1] : vector<128x64xf32> to vector<128xf32>
    %313 = vector.shape_cast %312 : vector<128xf32> to vector<128x1xf32>
    %c19_i32 = arith.constant 19 : i32
    %314 = vector.broadcast %c19_i32 : i32 to vector<128x23xi32>
    %315 = arith.cmpi eq, %59, %314 : vector<128x23xi32>
    %cst_85 = arith.constant 0.000000e+00 : f32
    %316 = vector.shape_cast %313 : vector<128x1xf32> to vector<128x1xf32>
    %317 = vector.broadcast %316 : vector<128x1xf32> to vector<128x23xf32>
    %318 = vector.broadcast %cst_85 : f32 to vector<128x23xf32>
    %319 = arith.select %315, %317, %318 : vector<128x23xi1>, vector<128x23xf32>
    %320 = arith.addf %307, %319 : vector<128x23xf32>
    %321 = vector.extract_strided_slice %57 {offsets = [0, 1280], sizes = [128, 64], strides = [1, 1]} : vector<128x1472xf32> to vector<128x64xf32>
    %322 = vector.extract_strided_slice %58 {offsets = [20, 0], sizes = [1, 64], strides = [1, 1]} : vector<23x64xf32> to vector<1x64xf32>
    %323 = vector.broadcast %322 : vector<1x64xf32> to vector<128x64xf32>
    %324 = arith.mulf %321, %323 : vector<128x64xf32>
    %cst_86 = arith.constant dense<0.000000e+00> : vector<128xf32>
    %325 = vector.multi_reduction <add>, %324, %cst_86 [1] : vector<128x64xf32> to vector<128xf32>
    %326 = vector.shape_cast %325 : vector<128xf32> to vector<128x1xf32>
    %c20_i32 = arith.constant 20 : i32
    %327 = vector.broadcast %c20_i32 : i32 to vector<128x23xi32>
    %328 = arith.cmpi eq, %59, %327 : vector<128x23xi32>
    %cst_87 = arith.constant 0.000000e+00 : f32
    %329 = vector.shape_cast %326 : vector<128x1xf32> to vector<128x1xf32>
    %330 = vector.broadcast %329 : vector<128x1xf32> to vector<128x23xf32>
    %331 = vector.broadcast %cst_87 : f32 to vector<128x23xf32>
    %332 = arith.select %328, %330, %331 : vector<128x23xi1>, vector<128x23xf32>
    %333 = arith.addf %320, %332 : vector<128x23xf32>
    %334 = vector.extract_strided_slice %57 {offsets = [0, 1344], sizes = [128, 64], strides = [1, 1]} : vector<128x1472xf32> to vector<128x64xf32>
    %335 = vector.extract_strided_slice %58 {offsets = [21, 0], sizes = [1, 64], strides = [1, 1]} : vector<23x64xf32> to vector<1x64xf32>
    %336 = vector.broadcast %335 : vector<1x64xf32> to vector<128x64xf32>
    %337 = arith.mulf %334, %336 : vector<128x64xf32>
    %cst_88 = arith.constant dense<0.000000e+00> : vector<128xf32>
    %338 = vector.multi_reduction <add>, %337, %cst_88 [1] : vector<128x64xf32> to vector<128xf32>
    %339 = vector.shape_cast %338 : vector<128xf32> to vector<128x1xf32>
    %c21_i32 = arith.constant 21 : i32
    %340 = vector.broadcast %c21_i32 : i32 to vector<128x23xi32>
    %341 = arith.cmpi eq, %59, %340 : vector<128x23xi32>
    %cst_89 = arith.constant 0.000000e+00 : f32
    %342 = vector.shape_cast %339 : vector<128x1xf32> to vector<128x1xf32>
    %343 = vector.broadcast %342 : vector<128x1xf32> to vector<128x23xf32>
    %344 = vector.broadcast %cst_89 : f32 to vector<128x23xf32>
    %345 = arith.select %341, %343, %344 : vector<128x23xi1>, vector<128x23xf32>
    %346 = arith.addf %333, %345 : vector<128x23xf32>
    %347 = vector.extract_strided_slice %57 {offsets = [0, 1408], sizes = [128, 64], strides = [1, 1]} : vector<128x1472xf32> to vector<128x64xf32>
    %348 = vector.extract_strided_slice %58 {offsets = [22, 0], sizes = [1, 64], strides = [1, 1]} : vector<23x64xf32> to vector<1x64xf32>
    %349 = vector.broadcast %348 : vector<1x64xf32> to vector<128x64xf32>
    %350 = arith.mulf %347, %349 : vector<128x64xf32>
    %cst_90 = arith.constant dense<0.000000e+00> : vector<128xf32>
    %351 = vector.multi_reduction <add>, %350, %cst_90 [1] : vector<128x64xf32> to vector<128xf32>
    %352 = vector.shape_cast %351 : vector<128xf32> to vector<128x1xf32>
    %c22_i32 = arith.constant 22 : i32
    %353 = vector.broadcast %c22_i32 : i32 to vector<128x23xi32>
    %354 = arith.cmpi eq, %59, %353 : vector<128x23xi32>
    %cst_91 = arith.constant 0.000000e+00 : f32
    %355 = vector.shape_cast %352 : vector<128x1xf32> to vector<128x1xf32>
    %356 = vector.broadcast %355 : vector<128x1xf32> to vector<128x23xf32>
    %357 = vector.broadcast %cst_91 : f32 to vector<128x23xf32>
    %358 = arith.select %354, %356, %357 : vector<128x23xi1>, vector<128x23xf32>
    %359 = arith.addf %346, %358 : vector<128x23xf32>
    %c0_92 = arith.constant 0 : index
    %c0_93 = arith.constant 0 : index
    %360 = vector.load %arg11[%c0_92, %c0_93] : memref<1x23xf32, #tpu.memory_space<vmem>>, vector<1x23xf32>
    %361 = vector.broadcast %360 : vector<1x23xf32> to vector<128x23xf32>
    %362 = arith.addf %359, %361 : vector<128x23xf32>
    %363 = arith.negf %362 : vector<128x23xf32>
    %364 = math.exp %363 : vector<128x23xf32>
    %cst_94 = arith.constant 1.000000e+00 : f32
    %365 = vector.broadcast %cst_94 : f32 to vector<128x23xf32>
    %366 = arith.addf %365, %364 : vector<128x23xf32>
    %367 = arith.divf %365, %366 : vector<128x23xf32>
    %c0_95 = arith.constant 0 : index
    %c0_96 = arith.constant 0 : index
    %368 = vector.load %arg12[%c0_95, %c0_96] : memref<128x23xf32, #tpu.memory_space<vmem>>, vector<128x23xf32>
    tpu.vector_store %arg12[%c0_95, %c0_96], %367 {strides = array<i32>} : memref<128x23xf32, #tpu.memory_space<vmem>>, vector<128x23xf32>,
    return
  }
  func.func @transform_0(%arg0: i32) -> (i32, i32) {
    %c0_i32 = arith.constant 0 : i32
    %c0_i32_0 = arith.constant 0 : i32
    return %arg0, %c0_i32 : i32, i32
  }
  func.func @transform_1(%arg0: i32) -> (i32, i32) {
    %c0_i32 = arith.constant 0 : i32
    %c0_i32_0 = arith.constant 0 : i32
    %c0_i32_1 = arith.constant 0 : i32
    return %c0_i32, %c0_i32_0 : i32, i32
  }
  func.func @transform_2(%arg0: i32) -> (i32, i32) {
    %c0_i32 = arith.constant 0 : i32
    %c0_i32_0 = arith.constant 0 : i32
    %c0_i32_1 = arith.constant 0 : i32
    return %c0_i32, %c0_i32_0 : i32, i32
  }
  func.func @transform_3(%arg0: i32) -> (i32, i32, i32) {
    %c0_i32 = arith.constant 0 : i32
    %c0_i32_0 = arith.constant 0 : i32
    %c0_i32_1 = arith.constant 0 : i32
    %c0_i32_2 = arith.constant 0 : i32
    return %c0_i32, %c0_i32_0, %c0_i32_1 : i32, i32, i32
  }
  func.func @transform_4(%arg0: i32) -> (i32, i32, i32) {
    %c0_i32 = arith.constant 0 : i32
    %c0_i32_0 = arith.constant 0 : i32
    %c0_i32_1 = arith.constant 0 : i32
    %c0_i32_2 = arith.constant 0 : i32
    return %c0_i32, %c0_i32_0, %c0_i32_1 : i32, i32, i32
  }
  func.func @transform_5(%arg0: i32) -> (i32, i32, i32) {
    %c0_i32 = arith.constant 0 : i32
    %c0_i32_0 = arith.constant 0 : i32
    %c0_i32_1 = arith.constant 0 : i32
    %c0_i32_2 = arith.constant 0 : i32
    return %c0_i32, %c0_i32_0, %c0_i32_1 : i32, i32, i32
  }
  func.func @transform_6(%arg0: i32) -> (i32, i32, i32) {
    %c0_i32 = arith.constant 0 : i32
    %c0_i32_0 = arith.constant 0 : i32
    %c0_i32_1 = arith.constant 0 : i32
    %c0_i32_2 = arith.constant 0 : i32
    return %c0_i32, %c0_i32_0, %c0_i32_1 : i32, i32, i32
  }
  func.func @transform_7(%arg0: i32) -> (i32, i32) {
    %c0_i32 = arith.constant 0 : i32
    %c0_i32_0 = arith.constant 0 : i32
    %c0_i32_1 = arith.constant 0 : i32
    return %c0_i32, %c0_i32_0 : i32, i32
  }
  func.func @transform_8(%arg0: i32) -> (i32, i32) {
    %c0_i32 = arith.constant 0 : i32
    %c0_i32_0 = arith.constant 0 : i32
    %c0_i32_1 = arith.constant 0 : i32
    return %c0_i32, %c0_i32_0 : i32, i32
  }
  func.func @transform_9(%arg0: i32) -> (i32, i32) {
    %c0_i32 = arith.constant 0 : i32
    %c0_i32_0 = arith.constant 0 : i32
    %c0_i32_1 = arith.constant 0 : i32
    return %c0_i32, %c0_i32_0 : i32, i32
  }
  func.func @transform_10(%arg0: i32) -> (i32, i32) {
    %c0_i32 = arith.constant 0 : i32
    %c0_i32_0 = arith.constant 0 : i32
    %c0_i32_1 = arith.constant 0 : i32
    return %c0_i32, %c0_i32_0 : i32, i32
  }
  func.func @transform_11(%arg0: i32) -> (i32, i32) {
    %c0_i32 = arith.constant 0 : i32
    %c0_i32_0 = arith.constant 0 : i32
    return %arg0, %c0_i32 : i32, i32
  }
}

</mosaic_0001>

<llo_original>
// kernel: tpu_custom_call.1
$region0: #{tpu_custom_call.1}
  #allocation0 [shape = 'u32[]', space=smem, size = 0x4, offset = 0x4, fixed_abs, tag = 'smem constant byte address 0x4 - core index']
  #allocation1 [shape = 'u32[72,128]{1,0:T(1,128)}', space=vmem, size = 0x9000, scoped, tag = 'internal scratch']
  %s0 = inlined_call_operand.vmem [shape: bf16[256,32], index: 0, kind: input, shape index: {}]
  %s1 = inlined_call_operand.hbm [shape: bf16[32,64], index: 1, kind: input, shape index: {}]
  %s2 = inlined_call_operand.vmem [shape: f32[1,64], index: 2, kind: input, shape index: {}]
  %s3 = inlined_call_operand.vmem [shape: bf16[2,64,64], index: 3, kind: input, shape index: {}]
  %s4 = inlined_call_operand.hbm [shape: f32[2,1,64], index: 4, kind: input, shape index: {}]
  %s5 = inlined_call_operand.vmem [shape: bf16[2,64,64], index: 5, kind: input, shape index: {}]
  %s6 = inlined_call_operand.hbm [shape: f32[2,1,64], index: 6, kind: input, shape index: {}]
  %s7 = inlined_call_operand.hbm [shape: bf16[64,1472], index: 7, kind: input, shape index: {}]
  %s8 = inlined_call_operand.vmem [shape: f32[1,1472], index: 8, kind: input, shape index: {}]
  %s9 = inlined_call_operand.vmem [shape: f32[23,64], index: 9, kind: input, shape index: {}]
  %s10 = inlined_call_operand.vmem [shape: f32[1,23], index: 10, kind: input, shape index: {}]
  %s11 = inlined_call_operand.vmem [shape: f32[256,23], index: 11, kind: output, shape index: {}]
  %s12 = sld [smem:[#allocation0]]
  $region93: #{tpu_custom_call.1} parent=0
    _
  %s14 = ssub.s32 1, %s12
  %s15 = scalar_select 0, %s14, %s12
  $region1: #{tpu_custom_call.1} parent=0
    #allocation2 [shape = 'u8[8192]{0}', space=vmem, size = 0x2000, scoped, tag = 'input window, operand 1, single buffered']
    #allocation3 [shape = 's32[2]{0}', space=sflag, size = 0x8, scoped, tag = 'scoped memory for tpu_custom_call.1']
    #allocation4 [shape = 'u8[1024]{0}', space=vmem, size = 0x400, scoped, tag = 'input window, operand 4, single buffered']
    #allocation5 [shape = 's32[1]{0}', space=sflag, size = 0x4, scoped, tag = 'scoped memory for tpu_custom_call.1']
    #allocation6 [shape = 'u8[1024]{0}', space=vmem, size = 0x400, scoped, tag = 'input window, operand 6, single buffered']
    #allocation7 [shape = 'u8[196608]{0}', space=vmem, size = 0x30000, scoped, tag = 'input window, operand 7, single buffered']
    #allocation8 [shape = 's32[1]{0}', space=sflag, size = 0x4, scoped, tag = 'scoped memory for tpu_custom_call.1']
    %16 = vsyncpa [#allocation3], 0
    %17 = vsyncpa [#allocation5], 0
    %18 = vsyncpa [#allocation8], 0
    loop: start=0, step=1, limit=4
    $region2: #{tpu_custom_call.1} parent=1 // loop_pre_header
      _
    $region3: #{tpu_custom_call.1} parent=1 // loop_header
      %s20 = sphi 0, %s24
      %p21 = scmp.ge.s32.totalorder %s20, 4
      %s30 = sphi 0, %s32
      %s33 = sphi 0, %s30
      %s34 = sphi 0, %s33
      %s50 = sphi 0, %s34
      %s54 = sphi 0, %s54
      %s56 = sphi 0, %s54
      %s57 = sphi 0, %s56
      %s71 = sphi 0, %s57
      %s75 = sphi 0, %s75
      %s77 = sphi 0, %s75
      %s78 = sphi 0, %s77
      %s92 = sphi 0, %s78
      %s96 = sphi 0, %s96
      %s98 = sphi 0, %s96
      %s99 = sphi 0, %s98
      %s113 = sphi 0, %s99
      %s117 = sphi 0, %s117
      %s119 = sphi 0, %s117
      %s120 = sphi 0, %s119
      %s134 = sphi 0, %s120
      %s138 = sphi 0, %s138
      %s140 = sphi 0, %s138
      %s141 = sphi 0, %s140
      %s155 = sphi 0, %s141
      %s159 = sphi 0, %s159
      %s161 = sphi 0, %s159
      %s162 = sphi 0, %s161
      %s176 = sphi 0, %s162
      %s180 = sphi 0, %s180
      %s182 = sphi 0, %s180
      %s183 = sphi 0, %s182
      %s197 = sphi 0, %s183
      %s201 = sphi 0, %s201
      %s203 = sphi 0, %s201
      %s204 = sphi 0, %s203
      %s218 = sphi 0, %s204
      %s222 = sphi 0, %s222
      %s224 = sphi 0, %s222
      %s225 = sphi 0, %s224
      %s239 = sphi 0, %s225
      %s243 = sphi 0, %s243
      %s245 = sphi 0, %s243
      %s246 = sphi 0, %s245
      %s260 = sphi 0, %s246
      %s266 = sphi 0, %s268
      %s269 = sphi 0, %s266
      %s270 = sphi 0, %s269
      %s286 = sphi 0, %s270
    $region4: #{tpu_custom_call.1} parent=1 // loop_header_branch
      %23 = sbr.rel (%p21) target = $region8
    $region5: #{tpu_custom_call.1} parent=1 // loop_body
      %s25 = ssub.s32 %s20, 1
      %s26 = ssub.s32 %s20, 2
      %s27 = sadd.s32 %s20, 1
      %s28 = ssub.s32 %s20, %s27
      %p29 = scmp.eq.s32.totalorder %s28, 0
      %s31 = sadd.s32 %s30, 1
      %s32 = scalar_select %p29, %s30, %s31
      %p35 = pneg %p29
      %p36 = scmp.eq.s32.totalorder %s20, 1
      %p37 = por %p35, %p36
      %p38 = scmp.ne.s32.totalorder %s30, %s33
      %p39 = scmp.eq.s32.totalorder %s20, 0
      %p40 = por %p38, %p39
      %p41 = scmp.ne.s32.totalorder %s30, %s33
      %p42 = scmp.eq.s32.totalorder %s25, 1
      %p43 = por %p41, %p42
      %p44 = scmp.ne.s32.totalorder %s33, %s34
      %p45 = scmp.eq.s32.totalorder %s25, 0
      %p46 = por %p44, %p45
      %p47 = scmp.ne.s32.totalorder %s33, %s34
      %p48 = scmp.eq.s32.totalorder %s26, 1
      %p49 = por %p47, %p48
      %p51 = scmp.ne.s32.totalorder %s34, %s50
      %p52 = scmp.eq.s32.totalorder %s26, 0
      %p53 = por %p51, %p52
      %s55 = sadd.s32 %s54, 1
      %p58 = scmp.eq.s32.totalorder %s20, 1
      %p59 = scmp.ne.s32.totalorder %s54, %s56
      %p60 = scmp.eq.s32.totalorder %s20, 0
      %p61 = por %p59, %p60
      %p62 = scmp.ne.s32.totalorder %s54, %s56
      %p63 = scmp.eq.s32.totalorder %s25, 1
      %p64 = por %p62, %p63
      %p65 = scmp.ne.s32.totalorder %s56, %s57
      %p66 = scmp.eq.s32.totalorder %s25, 0
      %p67 = por %p65, %p66
      %p68 = scmp.ne.s32.totalorder %s56, %s57
      %p69 = scmp.eq.s32.totalorder %s26, 1
      %p70 = por %p68, %p69
      %p72 = scmp.ne.s32.totalorder %s57, %s71
      %p73 = scmp.eq.s32.totalorder %s26, 0
      %p74 = por %p72, %p73
      %s76 = sadd.s32 %s75, 1
      %p79 = scmp.eq.s32.totalorder %s20, 1
      %p80 = scmp.ne.s32.totalorder %s75, %s77
      %p81 = scmp.eq.s32.totalorder %s20, 0
      %p82 = por %p80, %p81
      %p83 = scmp.ne.s32.totalorder %s75, %s77
      %p84 = scmp.eq.s32.totalorder %s25, 1
      %p85 = por %p83, %p84
      %p86 = scmp.ne.s32.totalorder %s77, %s78
      %p87 = scmp.eq.s32.totalorder %s25, 0
      %p88 = por %p86, %p87
      %p89 = scmp.ne.s32.totalorder %s77, %s78
      %p90 = scmp.eq.s32.totalorder %s26, 1
      %p91 = por %p89, %p90
      %p93 = scmp.ne.s32.totalorder %s78, %s92
      %p94 = scmp.eq.s32.totalorder %s26, 0
      %p95 = por %p93, %p94
      %s97 = sadd.s32 %s96, 1
      %p100 = scmp.eq.s32.totalorder %s20, 1
      %p101 = scmp.ne.s32.totalorder %s96, %s98
      %p102 = scmp.eq.s32.totalorder %s20, 0
      %p103 = por %p101, %p102
      %p104 = scmp.ne.s32.totalorder %s96, %s98
      %p105 = scmp.eq.s32.totalorder %s25, 1
      %p106 = por %p104, %p105
      %p107 = scmp.ne.s32.totalorder %s98, %s99
      %p108 = scmp.eq.s32.totalorder %s25, 0
      %p109 = por %p107, %p108
      %p110 = scmp.ne.s32.totalorder %s98, %s99
      %p111 = scmp.eq.s32.totalorder %s26, 1
      %p112 = por %p110, %p111
      %p114 = scmp.ne.s32.totalorder %s99, %s113
      %p115 = scmp.eq.s32.totalorder %s26, 0
      %p116 = por %p114, %p115
      %s118 = sadd.s32 %s117, 1
      %p121 = scmp.eq.s32.totalorder %s20, 1
      %p122 = scmp.ne.s32.totalorder %s117, %s119
      %p123 = scmp.eq.s32.totalorder %s20, 0
      %p124 = por %p122, %p123
      %p125 = scmp.ne.s32.totalorder %s117, %s119
      %p126 = scmp.eq.s32.totalorder %s25, 1
      %p127 = por %p125, %p126
      %p128 = scmp.ne.s32.totalorder %s119, %s120
      %p129 = scmp.eq.s32.totalorder %s25, 0
      %p130 = por %p128, %p129
      %p131 = scmp.ne.s32.totalorder %s119, %s120
      %p132 = scmp.eq.s32.totalorder %s26, 1
      %p133 = por %p131, %p132
      %p135 = scmp.ne.s32.totalorder %s120, %s134
      %p136 = scmp.eq.s32.totalorder %s26, 0
      %p137 = por %p135, %p136
      %s139 = sadd.s32 %s138, 1
      %p142 = scmp.eq.s32.totalorder %s20, 1
      %p143 = scmp.ne.s32.totalorder %s138, %s140
      %p144 = scmp.eq.s32.totalorder %s20, 0
      %p145 = por %p143, %p144
      %p146 = scmp.ne.s32.totalorder %s138, %s140
      %p147 = scmp.eq.s32.totalorder %s25, 1
      %p148 = por %p146, %p147
      %p149 = scmp.ne.s32.totalorder %s140, %s141
      %p150 = scmp.eq.s32.totalorder %s25, 0
      %p151 = por %p149, %p150
      %p152 = scmp.ne.s32.totalorder %s140, %s141
      %p153 = scmp.eq.s32.totalorder %s26, 1
      %p154 = por %p152, %p153
      %p156 = scmp.ne.s32.totalorder %s141, %s155
      %p157 = scmp.eq.s32.totalorder %s26, 0
      %p158 = por %p156, %p157
      %s160 = sadd.s32 %s159, 1
      %p163 = scmp.eq.s32.totalorder %s20, 1
      %p164 = scmp.ne.s32.totalorder %s159, %s161
      %p165 = scmp.eq.s32.totalorder %s20, 0
      %p166 = por %p164, %p165
      %p167 = scmp.ne.s32.totalorder %s159, %s161
      %p168 = scmp.eq.s32.totalorder %s25, 1
      %p169 = por %p167, %p168
      %p170 = scmp.ne.s32.totalorder %s161, %s162
      %p171 = scmp.eq.s32.totalorder %s25, 0
      %p172 = por %p170, %p171
      %p173 = scmp.ne.s32.totalorder %s161, %s162
      %p174 = scmp.eq.s32.totalorder %s26, 1
      %p175 = por %p173, %p174
      %p177 = scmp.ne.s32.totalorder %s162, %s176
      %p178 = scmp.eq.s32.totalorder %s26, 0
      %p179 = por %p177, %p178
      %s181 = sadd.s32 %s180, 1
      %p184 = scmp.eq.s32.totalorder %s20, 1
      %p185 = scmp.ne.s32.totalorder %s180, %s182
      %p186 = scmp.eq.s32.totalorder %s20, 0
      %p187 = por %p185, %p186
      %p188 = scmp.ne.s32.totalorder %s180, %s182
      %p189 = scmp.eq.s32.totalorder %s25, 1
      %p190 = por %p188, %p189
      %p191 = scmp.ne.s32.totalorder %s182, %s183
      %p192 = scmp.eq.s32.totalorder %s25, 0
      %p193 = por %p191, %p192
      %p194 = scmp.ne.s32.totalorder %s182, %s183
      %p195 = scmp.eq.s32.totalorder %s26, 1
      %p196 = por %p194, %p195
      %p198 = scmp.ne.s32.totalorder %s183, %s197
      %p199 = scmp.eq.s32.totalorder %s26, 0
      %p200 = por %p198, %p199
      %s202 = sadd.s32 %s201, 1
      %p205 = scmp.eq.s32.totalorder %s20, 1
      %p206 = scmp.ne.s32.totalorder %s201, %s203
      %p207 = scmp.eq.s32.totalorder %s20, 0
      %p208 = por %p206, %p207
      %p209 = scmp.ne.s32.totalorder %s201, %s203
      %p210 = scmp.eq.s32.totalorder %s25, 1
      %p211 = por %p209, %p210
      %p212 = scmp.ne.s32.totalorder %s203, %s204
      %p213 = scmp.eq.s32.totalorder %s25, 0
      %p214 = por %p212, %p213
      %p215 = scmp.ne.s32.totalorder %s203, %s204
      %p216 = scmp.eq.s32.totalorder %s26, 1
      %p217 = por %p215, %p216
      %p219 = scmp.ne.s32.totalorder %s204, %s218
      %p220 = scmp.eq.s32.totalorder %s26, 0
      %p221 = por %p219, %p220
      %s223 = sadd.s32 %s222, 1
      %p226 = scmp.eq.s32.totalorder %s20, 1
      %p227 = scmp.ne.s32.totalorder %s222, %s224
      %p228 = scmp.eq.s32.totalorder %s20, 0
      %p229 = por %p227, %p228
      %p230 = scmp.ne.s32.totalorder %s222, %s224
      %p231 = scmp.eq.s32.totalorder %s25, 1
      %p232 = por %p230, %p231
      %p233 = scmp.ne.s32.totalorder %s224, %s225
      %p234 = scmp.eq.s32.totalorder %s25, 0
      %p235 = por %p233, %p234
      %p236 = scmp.ne.s32.totalorder %s224, %s225
      %p237 = scmp.eq.s32.totalorder %s26, 1
      %p238 = por %p236, %p237
      %p240 = scmp.ne.s32.totalorder %s225, %s239
      %p241 = scmp.eq.s32.totalorder %s26, 0
      %p242 = por %p240, %p241
      %s244 = sadd.s32 %s243, 1
      %p247 = scmp.eq.s32.totalorder %s20, 1
      %p248 = scmp.ne.s32.totalorder %s243, %s245
      %p249 = scmp.eq.s32.totalorder %s20, 0
      %p250 = por %p248, %p249
      %p251 = scmp.ne.s32.totalorder %s243, %s245
      %p252 = scmp.eq.s32.totalorder %s25, 1
      %p253 = por %p251, %p252
      %p254 = scmp.ne.s32.totalorder %s245, %s246
      %p255 = scmp.eq.s32.totalorder %s25, 0
      %p256 = por %p254, %p255
      %p257 = scmp.ne.s32.totalorder %s245, %s246
      %p258 = scmp.eq.s32.totalorder %s26, 1
      %p259 = por %p257, %p258
      %p261 = scmp.ne.s32.totalorder %s246, %s260
      %p262 = scmp.eq.s32.totalorder %s26, 0
      %p263 = por %p261, %p262
      %s264 = ssub.s32 %s20, %s27
      %p265 = scmp.eq.s32.totalorder %s264, 0
      %s267 = sadd.s32 %s266, 1
      %s268 = scalar_select %p265, %s266, %s267
      %p271 = pneg %p265
      %p272 = scmp.eq.s32.totalorder %s20, 1
      %p273 = por %p271, %p272
      %p274 = scmp.ne.s32.totalorder %s266, %s269
      %p275 = scmp.eq.s32.totalorder %s20, 0
      %p276 = por %p274, %p275
      %p277 = scmp.ne.s32.totalorder %s266, %s269
      %p278 = scmp.eq.s32.totalorder %s25, 1
      %p279 = por %p277, %p278
      %p280 = scmp.ne.s32.totalorder %s269, %s270
      %p281 = scmp.eq.s32.totalorder %s25, 0
      %p282 = por %p280, %p281
      %p283 = scmp.ne.s32.totalorder %s269, %s270
      %p284 = scmp.eq.s32.totalorder %s26, 1
      %p285 = por %p283, %p284
      %p287 = scmp.ne.s32.totalorder %s270, %s286
      %p288 = scmp.eq.s32.totalorder %s26, 0
      %p289 = por %p287, %p288
      %p290 = scmp.le.s32.totalorder 1, %s20
      %p291 = scmp.lt.s32.totalorder %s20, 3
      %p292 = pnand %p290, %p291
      %p293 = pneg %p292
      // Predicated region
      $region9: #{tpu_custom_call.1} parent=5 // pred_check
        _
      $region10: #{tpu_custom_call.1} parent=5 // pred_check_branch
        %295 = sbr.rel (%p292) target = $region12
      $region11: #{tpu_custom_call.1} parent=5 // pred_region
        %s296 = ssub.s32 %s20, 1
        // Predicated region
        $region13: #{tpu_custom_call.1} parent=11 // pred_check
          %p297 = pneg %p67
        $region14: #{tpu_custom_call.1} parent=11 // pred_check_branch
          %299 = sbr.rel (%p297) target = $region16
        $region15: #{tpu_custom_call.1} parent=11 // pred_region
          %301 = vsyncadd [#allocation3], 0
          %s302 = sshll.u32 %s1, 4
          %s303 = int_to_ptr.hbm [resolvable:$true] %s302
          %s304 = sshll.u32 [#allocation2], 4
          %s305 = int_to_ptr.vmem [resolvable:$true] %s304
          %310 = dma.hbm_to_vmem [thread:$0]  %s303, 256, %s305, [#allocation3], 64, 64, 4
        $region16: #{tpu_custom_call.1} parent=11 // pred_fallthru
          _
        // Predicated region
        $region17: #{tpu_custom_call.1} parent=11 // pred_check
          %p311 = pneg %p88
        $region18: #{tpu_custom_call.1} parent=11 // pred_check_branch
          %313 = sbr.rel (%p311) target = $region20
        $region19: #{tpu_custom_call.1} parent=11 // pred_region
          _
        $region20: #{tpu_custom_call.1} parent=11 // pred_fallthru
          _
        // Predicated region
        $region21: #{tpu_custom_call.1} parent=11 // pred_check
          %p314 = pneg %p109
        $region22: #{tpu_custom_call.1} parent=11 // pred_check_branch
          %316 = sbr.rel (%p314) target = $region24
        $region23: #{tpu_custom_call.1} parent=11 // pred_region
          _
        $region24: #{tpu_custom_call.1} parent=11 // pred_fallthru
          _
        // Predicated region
        $region25: #{tpu_custom_call.1} parent=11 // pred_check
          %p317 = pneg %p130
        $region26: #{tpu_custom_call.1} parent=11 // pred_check_branch
          %319 = sbr.rel (%p317) target = $region28
        $region27: #{tpu_custom_call.1} parent=11 // pred_region
          %321 = vsyncadd [#allocation5], 0
          %s322 = sshll.u32 %s4, 4
          %s323 = int_to_ptr.hbm [resolvable:$true] %s322
          %s324 = sshll.u32 [#allocation4], 4
          %s325 = int_to_ptr.vmem [resolvable:$true] %s324
          %330 = dma.hbm_to_vmem [thread:$0]  %s323, 32, %s325, [#allocation5], 16, 16, 1
        $region28: #{tpu_custom_call.1} parent=11 // pred_fallthru
          _
        // Predicated region
        $region29: #{tpu_custom_call.1} parent=11 // pred_check
          %p331 = pneg %p151
        $region30: #{tpu_custom_call.1} parent=11 // pred_check_branch
          %333 = sbr.rel (%p331) target = $region32
        $region31: #{tpu_custom_call.1} parent=11 // pred_region
          _
        $region32: #{tpu_custom_call.1} parent=11 // pred_fallthru
          _
        // Predicated region
        $region33: #{tpu_custom_call.1} parent=11 // pred_check
          %p334 = pneg %p172
        $region34: #{tpu_custom_call.1} parent=11 // pred_check_branch
          %336 = sbr.rel (%p334) target = $region36
        $region35: #{tpu_custom_call.1} parent=11 // pred_region
          %338 = vsyncadd [#allocation5], 0
          %s339 = sshll.u32 %s6, 4
          %s340 = int_to_ptr.hbm [resolvable:$true] %s339
          %s341 = sshll.u32 [#allocation6], 4
          %s342 = int_to_ptr.vmem [resolvable:$true] %s341
          %347 = dma.hbm_to_vmem [thread:$0]  %s340, 32, %s342, [#allocation5], 16, 16, 1
        $region36: #{tpu_custom_call.1} parent=11 // pred_fallthru
          _
        // Predicated region
        $region37: #{tpu_custom_call.1} parent=11 // pred_check
          %p348 = pneg %p193
        $region38: #{tpu_custom_call.1} parent=11 // pred_check_branch
          %350 = sbr.rel (%p348) target = $region40
        $region39: #{tpu_custom_call.1} parent=11 // pred_region
          %352 = vsyncadd [#allocation8], 0
          %s353 = sshll.u32 %s7, 4
          %s354 = int_to_ptr.hbm [resolvable:$true] %s353
          %s355 = sshll.u32 [#allocation7], 4
          %s356 = int_to_ptr.vmem [resolvable:$true] %s355
          %361 = dma.hbm_to_vmem [thread:$0]  %s354, 6144, %s356, [#allocation8], 768, 768, 48
        $region40: #{tpu_custom_call.1} parent=11 // pred_fallthru
          _
        // Predicated region
        $region41: #{tpu_custom_call.1} parent=11 // pred_check
          %p362 = pneg %p214
        $region42: #{tpu_custom_call.1} parent=11 // pred_check_branch
          %364 = sbr.rel (%p362) target = $region44
        $region43: #{tpu_custom_call.1} parent=11 // pred_region
          _
        $region44: #{tpu_custom_call.1} parent=11 // pred_fallthru
          _
        // Predicated region
        $region45: #{tpu_custom_call.1} parent=11 // pred_check
          %p365 = pneg %p235
        $region46: #{tpu_custom_call.1} parent=11 // pred_check_branch
          %367 = sbr.rel (%p365) target = $region48
        $region47: #{tpu_custom_call.1} parent=11 // pred_region
          _
        $region48: #{tpu_custom_call.1} parent=11 // pred_fallthru
          _
        // Predicated region
        $region49: #{tpu_custom_call.1} parent=11 // pred_check
          %p368 = pneg %p256
        $region50: #{tpu_custom_call.1} parent=11 // pred_check_branch
          %370 = sbr.rel (%p368) target = $region52
        $region51: #{tpu_custom_call.1} parent=11 // pred_region
          _
        $region52: #{tpu_custom_call.1} parent=11 // pred_fallthru
          _
      $region12: #{tpu_custom_call.1} parent=5 // pred_fallthru
        _
      %p371 = scmp.lt.s32.totalorder %s20, 2
      // Predicated region
      $region53: #{tpu_custom_call.1} parent=5 // pred_check
        %p372 = pneg %p371
      $region54: #{tpu_custom_call.1} parent=5 // pred_check_branch
        %374 = sbr.rel (%p372) target = $region56
      $region55: #{tpu_custom_call.1} parent=5 // pred_region
        // Predicated region
        $region57: #{tpu_custom_call.1} parent=55 // pred_check
          %p375 = pneg %p40
        $region58: #{tpu_custom_call.1} parent=55 // pred_check_branch
          %377 = sbr.rel (%p375) target = $region60
        $region59: #{tpu_custom_call.1} parent=55 // pred_region
          %s378 = smul.u32 16, %s20
          %p379 = scmp.lt.s32.totalorder %s378, 31
          %s380 = scalar_select %p379, %s378, 31
          %s381 = smul.addr %s380, 4
          %s382 = scalar_lea.vmem %s0, %s381
          %s383 = smul.u32 16, %s20
        $region60: #{tpu_custom_call.1} parent=55 // pred_fallthru
          _
      $region56: #{tpu_custom_call.1} parent=5 // pred_fallthru
        _
      %p384 = scmp.le.s32.totalorder 1, %s20
      %p385 = scmp.lt.s32.totalorder %s20, 3
      %p386 = pnand %p384, %p385
      %p387 = pneg %p386
      // Predicated region
      $region61: #{tpu_custom_call.1} parent=5 // pred_check
        _
      $region62: #{tpu_custom_call.1} parent=5 // pred_check_branch
        %389 = sbr.rel (%p386) target = $region64
      $region63: #{tpu_custom_call.1} parent=5 // pred_region
        %s390 = ssub.s32 %s20, 1
        // Predicated region
        $region65: #{tpu_custom_call.1} parent=63 // pred_check
          %p391 = pneg %p67
        $region66: #{tpu_custom_call.1} parent=63 // pred_check_branch
          %393 = sbr.rel (%p391) target = $region68
        $region67: #{tpu_custom_call.1} parent=63 // pred_region
          %395 = dma.done [#allocation3], 256
        $region68: #{tpu_custom_call.1} parent=63 // pred_fallthru
          _
        // Predicated region
        $region69: #{tpu_custom_call.1} parent=63 // pred_check
          %p396 = pneg %p130
        $region70: #{tpu_custom_call.1} parent=63 // pred_check_branch
          %398 = sbr.rel (%p396) target = $region72
        $region71: #{tpu_custom_call.1} parent=63 // pred_region
          %400 = dma.done [#allocation5], 32
        $region72: #{tpu_custom_call.1} parent=63 // pred_fallthru
          _
        // Predicated region
        $region73: #{tpu_custom_call.1} parent=63 // pred_check
          %p401 = pneg %p172
        $region74: #{tpu_custom_call.1} parent=63 // pred_check_branch
          %403 = sbr.rel (%p401) target = $region76
        $region75: #{tpu_custom_call.1} parent=63 // pred_region
          %405 = dma.done [#allocation5], 32
        $region76: #{tpu_custom_call.1} parent=63 // pred_fallthru
          _
        // Predicated region
        $region77: #{tpu_custom_call.1} parent=63 // pred_check
          %p406 = pneg %p193
        $region78: #{tpu_custom_call.1} parent=63 // pred_check_branch
          %408 = sbr.rel (%p406) target = $region80
        $region79: #{tpu_custom_call.1} parent=63 // pred_region
          %410 = dma.done [#allocation8], 6144
        $region80: #{tpu_custom_call.1} parent=63 // pred_fallthru
          _
        %s411 = smul.u32 16, %s25
        %p412 = scmp.lt.s32.totalorder %s411, 31
        %s413 = scalar_select %p412, %s411, 31
        %s414 = smul.addr %s413, 4
        %s415 = scalar_lea.vmem %s0, %s414
        %p416 = pneg %p46
        %p417 = pneg %p43
        %p418 = pneg %p67
        %p419 = pneg %p64
        %p420 = pneg %p88
        %p421 = pneg %p85
        %p422 = pneg %p109
        %p423 = pneg %p106
        %p424 = pneg %p130
        %p425 = pneg %p127
        %p426 = pneg %p151
        %p427 = pneg %p148
        %p428 = pneg %p172
        %p429 = pneg %p169
        %p430 = pneg %p193
        %p431 = pneg %p190
        %p432 = pneg %p214
        %p433 = pneg %p211
        %p434 = pneg %p235
        %p435 = pneg %p232
        %p436 = pneg %p256
        %p437 = pneg %p253
        %p438 = pneg %p282
        %p439 = pneg %p279
        %s440 = smul.u32 16, %s25
        %p441 = scmp.lt.s32.totalorder %s440, 31
        %s442 = scalar_select %p441, %s440, 31
        %s443 = smul.addr %s442, 8
        %s444 = scalar_lea.vmem %s11, %s443
        %s445 = smul.u32 16, %s25
        %p446 = scmp.lt.s32.totalorder %s445, 31
        %s447 = scalar_select %p446, %s445, 31
        %s448 = smul.addr %s447, 4
        %s449 = scalar_lea.vmem %s0, %s448
        %s450 = smul.u32 16, %s25
        %s451 = smul.u32 16, %s25
        %p452 = scmp.lt.s32.totalorder %s451, 31
        %s453 = scalar_select %p452, %s451, 31
        %s454 = smul.addr %s453, 8
        %s455 = scalar_lea.vmem %s11, %s454
        %s456 = smul.u32 16, %s25
        %v458 = vld [vmem:[%s449] sm:$0xf]
        %v459 = vld [vmem:[%s449 + $0x4] sm:$0xf]
        %v460 = vld [vmem:[%s449 + $0x8] sm:$0xf]
        %v461 = vld [vmem:[%s449 + $0xc] sm:$0xf]
        %v462 = vld [vmem:[%s449 + $0x10] sm:$0xf]
        %v463 = vld [vmem:[%s449 + $0x14] sm:$0xf]
        %v464 = vld [vmem:[%s449 + $0x18] sm:$0xf]
        %v465 = vld [vmem:[%s449 + $0x1c] sm:$0xf]
        %v466 = vld [vmem:[%s449 + $0x20] sm:$0xf]
        %v467 = vld [vmem:[%s449 + $0x24] sm:$0xf]
        %v468 = vld [vmem:[%s449 + $0x28] sm:$0xf]
        %v469 = vld [vmem:[%s449 + $0x2c] sm:$0xf]
        %v470 = vld [vmem:[%s449 + $0x30] sm:$0xf]
        %v471 = vld [vmem:[%s449 + $0x34] sm:$0xf]
        %v472 = vld [vmem:[%s449 + $0x38] sm:$0xf]
        %v473 = vld [vmem:[%s449 + $0x3c] sm:$0xf]
        %v474 = vld [vmem:[#allocation2] sm:$0xf]
        %v475 = vld [vmem:[#allocation2 + $0x4] sm:$0xf]
        %v476 = vld [vmem:[#allocation2 + $0x8] sm:$0xf]
        %v477 = vld [vmem:[#allocation2 + $0xc] sm:$0xf]
        %v478 = vld [vmem:[%s2] sm:$0x1]
        %v480 = vperm.slane %v478, 0
        %v498 = vunpack.c.l.b16 %v458
        %v499 = vunpack.c.l.b16 %v459
        %v500 = vunpack.c.l.b16 %v460
        %v501 = vunpack.c.l.b16 %v461
        %v502 = vunpack.c.l.b16 %v462
        %v503 = vunpack.c.l.b16 %v463
        %v504 = vunpack.c.l.b16 %v464
        %v505 = vunpack.c.l.b16 %v465
        %v506 = vunpack.c.l.b16 %v466
        %v507 = vunpack.c.l.b16 %v467
        %v508 = vunpack.c.l.b16 %v468
        %v509 = vunpack.c.l.b16 %v469
        %v510 = vunpack.c.l.b16 %v470
        %v511 = vunpack.c.l.b16 %v471
        %v512 = vunpack.c.l.b16 %v472
        %v513 = vunpack.c.l.b16 %v473
        %v514 = vpack.c.b16 %v499, %v498
        %v515 = vpack.c.b16 %v501, %v500
        %v516 = vpack.c.b16 %v503, %v502
        %v517 = vpack.c.b16 %v505, %v504
        %v518 = vpack.c.b16 %v507, %v506
        %v519 = vpack.c.b16 %v509, %v508
        %v520 = vpack.c.b16 %v511, %v510
        %v521 = vpack.c.b16 %v513, %v512
        %v526 = vunpack.c.l.b16 %v474
        %v527 = vunpack.c.l.b16 %v475
        %v528 = vunpack.c.l.b16 %v476
        %v529 = vunpack.c.l.b16 %v477
        %v530 = vpack.c.b16 %v527, %v526
        %v531 = vpack.c.b16 %v529, %v528
        %vm534 = vcmask 261120
        %v536 = vsel %vm534, %v514, 0
        %v539 = vsel %vm534, %v515, 0
        %v542 = vsel %vm534, %v516, 0
        %v545 = vsel %vm534, %v517, 0
        %v548 = vsel %vm534, %v518, 0
        %v551 = vsel %vm534, %v519, 0
        %v554 = vsel %vm534, %v520, 0
        %v557 = vsel %vm534, %v521, 0
        %559 = vmatpush.bf16.msra.mxu0 0
        %560 = vmatpush.bf16.msra.mxu0 0
        %561 = vmatpush.bf16.msra.mxu0 0
        %562 = vmatpush.bf16.msra.mxu0 0
        %563 = vmatpush.bf16.msra.mxu0 0
        %564 = vmatpush.bf16.msra.mxu0 0
        %565 = vmatpush.bf16.msra.mxu0 %v531
        %566 = vmatpush.bf16.msra.mxu0 %v530
        %567 = vmatmul.bf16.gmra.mxu0 %v536
        %v568 = vpop.f32.mrf.mxu0
        %v569 = vadd.f32 %v480, %v568
        %v570 = vpop.f32.mrf.mxu0
        %v571 = vadd.f32 %v480, %v570
        %572 = vmatmul.bf16.gmra.mxu0 %v539
        %v573 = vpop.f32.mrf.mxu0
        %v574 = vadd.f32 %v480, %v573
        %v575 = vpop.f32.mrf.mxu0
        %v576 = vadd.f32 %v480, %v575
        %577 = vmatmul.bf16.gmra.mxu0 %v542
        %v578 = vpop.f32.mrf.mxu0
        %v579 = vadd.f32 %v480, %v578
        %v580 = vpop.f32.mrf.mxu0
        %v581 = vadd.f32 %v480, %v580
        %582 = vmatmul.bf16.gmra.mxu0 %v545
        %v583 = vpop.f32.mrf.mxu0
        %v584 = vadd.f32 %v480, %v583
        %v585 = vpop.f32.mrf.mxu0
        %v586 = vadd.f32 %v480, %v585
        %587 = vmatmul.bf16.gmra.mxu0 %v548
        %v588 = vpop.f32.mrf.mxu0
        %v589 = vadd.f32 %v480, %v588
        %v590 = vpop.f32.mrf.mxu0
        %v591 = vadd.f32 %v480, %v590
        %592 = vmatmul.bf16.gmra.mxu0 %v551
        %v593 = vpop.f32.mrf.mxu0
        %v594 = vadd.f32 %v480, %v593
        %v595 = vpop.f32.mrf.mxu0
        %v596 = vadd.f32 %v480, %v595
        %597 = vmatmul.bf16.gmra.mxu0 %v554
        %v598 = vpop.f32.mrf.mxu0
        %v599 = vadd.f32 %v480, %v598
        %v600 = vpop.f32.mrf.mxu0
        %v601 = vadd.f32 %v480, %v600
        %602 = vmatmul.bf16.gmra.mxu0 %v557
        %v603 = vpop.f32.mrf.mxu0
        %v604 = vadd.f32 %v480, %v603
        %v605 = vpop.f32.mrf.mxu0
        %v606 = vadd.f32 %v480, %v605
        %607 = vdwg.mxu0
        %v608 = vmax.f32 %v569, 0.0
        %v609 = vmax.f32 %v571, 0.0
        %v610 = vmax.f32 %v574, 0.0
        %v611 = vmax.f32 %v576, 0.0
        %v612 = vmax.f32 %v579, 0.0
        %v613 = vmax.f32 %v581, 0.0
        %v614 = vmax.f32 %v584, 0.0
        %v615 = vmax.f32 %v586, 0.0
        %v616 = vmax.f32 %v589, 0.0
        %v617 = vmax.f32 %v591, 0.0
        %v618 = vmax.f32 %v594, 0.0
        %v619 = vmax.f32 %v596, 0.0
        %v620 = vmax.f32 %v599, 0.0
        %v621 = vmax.f32 %v601, 0.0
        %v622 = vmax.f32 %v604, 0.0
        %v623 = vmax.f32 %v606, 0.0
        %v624 = vpack.c.bf16 %v609, %v608
        %v625 = vpack.c.bf16 %v611, %v610
        %v626 = vpack.c.bf16 %v613, %v612
        %v627 = vpack.c.bf16 %v615, %v614
        %v628 = vpack.c.bf16 %v617, %v616
        %v629 = vpack.c.bf16 %v619, %v618
        %v630 = vpack.c.bf16 %v621, %v620
        %v631 = vpack.c.bf16 %v623, %v622
        %v632 = vld [vmem:[%s3] sm:$0xf]
        %v633 = vld [vmem:[%s3 + $0x4] sm:$0xf]
        %v634 = vld [vmem:[%s3 + $0x8] sm:$0xf]
        %v635 = vld [vmem:[%s3 + $0xc] sm:$0xf]
        %v636 = vld [vmem:[%s3 + $0x10] sm:$0xf]
        %v637 = vld [vmem:[%s3 + $0x14] sm:$0xf]
        %v638 = vld [vmem:[%s3 + $0x18] sm:$0xf]
        %v639 = vld [vmem:[%s3 + $0x1c] sm:$0xf]
        %v640 = vld [vmem:[#allocation4] sm:$0x1]
        %v642 = vperm.slane %v640, 0
        %v652 = vunpack.c.l.b16 %v632
        %v653 = vunpack.c.l.b16 %v633
        %v654 = vunpack.c.l.b16 %v634
        %v655 = vunpack.c.l.b16 %v635
        %v656 = vunpack.c.l.b16 %v636
        %v657 = vunpack.c.l.b16 %v637
        %v658 = vunpack.c.l.b16 %v638
        %v659 = vunpack.c.l.b16 %v639
        %v660 = vpack.c.b16 %v653, %v652
        %v661 = vpack.c.b16 %v655, %v654
        %v662 = vpack.c.b16 %v657, %v656
        %v663 = vpack.c.b16 %v659, %v658
        %vm668 = vcmask 523264
        %v670 = vsel %vm668, %v624, 0
        %v673 = vsel %vm668, %v625, 0
        %v676 = vsel %vm668, %v626, 0
        %v679 = vsel %vm668, %v627, 0
        %v682 = vsel %vm668, %v628, 0
        %v685 = vsel %vm668, %v629, 0
        %v688 = vsel %vm668, %v630, 0
        %v691 = vsel %vm668, %v631, 0
        %693 = vmatpush.bf16.msra.mxu0 0
        %694 = vmatpush.bf16.msra.mxu0 0
        %695 = vmatpush.bf16.msra.mxu0 0
        %696 = vmatpush.bf16.msra.mxu0 0
        %697 = vmatpush.bf16.msra.mxu0 %v663
        %698 = vmatpush.bf16.msra.mxu0 %v662
        %699 = vmatpush.bf16.msra.mxu0 %v661
        %700 = vmatpush.bf16.msra.mxu0 %v660
        %701 = vmatmul.bf16.gmra.mxu0 %v670
        %v702 = vpop.f32.mrf.mxu0
        %v703 = vadd.f32 %v642, %v702
        %v704 = vpop.f32.mrf.mxu0
        %v705 = vadd.f32 %v642, %v704
        %706 = vmatmul.bf16.gmra.mxu0 %v673
        %v707 = vpop.f32.mrf.mxu0
        %v708 = vadd.f32 %v642, %v707
        %v709 = vpop.f32.mrf.mxu0
        %v710 = vadd.f32 %v642, %v709
        %711 = vmatmul.bf16.gmra.mxu0 %v676
        %v712 = vpop.f32.mrf.mxu0
        %v713 = vadd.f32 %v642, %v712
        %v714 = vpop.f32.mrf.mxu0
        %v715 = vadd.f32 %v642, %v714
        %716 = vmatmul.bf16.gmra.mxu0 %v679
        %v717 = vpop.f32.mrf.mxu0
        %v718 = vadd.f32 %v642, %v717
        %v719 = vpop.f32.mrf.mxu0
        %v720 = vadd.f32 %v642, %v719
        %721 = vmatmul.bf16.gmra.mxu0 %v682
        %v722 = vpop.f32.mrf.mxu0
        %v723 = vadd.f32 %v642, %v722
        %v724 = vpop.f32.mrf.mxu0
        %v725 = vadd.f32 %v642, %v724
        %726 = vmatmul.bf16.gmra.mxu0 %v685
        %v727 = vpop.f32.mrf.mxu0
        %v728 = vadd.f32 %v642, %v727
        %v729 = vpop.f32.mrf.mxu0
        %v730 = vadd.f32 %v642, %v729
        %731 = vmatmul.bf16.gmra.mxu0 %v688
        %v732 = vpop.f32.mrf.mxu0
        %v733 = vadd.f32 %v642, %v732
        %v734 = vpop.f32.mrf.mxu0
        %v735 = vadd.f32 %v642, %v734
        %736 = vmatmul.bf16.gmra.mxu0 %v691
        %v737 = vpop.f32.mrf.mxu0
        %v738 = vadd.f32 %v642, %v737
        %v739 = vpop.f32.mrf.mxu0
        %v740 = vadd.f32 %v642, %v739
        %741 = vdwg.mxu0
        %v742 = vmax.f32 %v703, 0.0
        %v743 = vmax.f32 %v705, 0.0
        %v744 = vmax.f32 %v708, 0.0
        %v745 = vmax.f32 %v710, 0.0
        %v746 = vmax.f32 %v713, 0.0
        %v747 = vmax.f32 %v715, 0.0
        %v748 = vmax.f32 %v718, 0.0
        %v749 = vmax.f32 %v720, 0.0
        %v750 = vmax.f32 %v723, 0.0
        %v751 = vmax.f32 %v725, 0.0
        %v752 = vmax.f32 %v728, 0.0
        %v753 = vmax.f32 %v730, 0.0
        %v754 = vmax.f32 %v733, 0.0
        %v755 = vmax.f32 %v735, 0.0
        %v756 = vmax.f32 %v738, 0.0
        %v757 = vmax.f32 %v740, 0.0
        %v758 = vpack.c.bf16 %v743, %v742
        %v759 = vpack.c.bf16 %v745, %v744
        %v760 = vpack.c.bf16 %v747, %v746
        %v761 = vpack.c.bf16 %v749, %v748
        %v762 = vpack.c.bf16 %v751, %v750
        %v763 = vpack.c.bf16 %v753, %v752
        %v764 = vpack.c.bf16 %v755, %v754
        %v765 = vpack.c.bf16 %v757, %v756
        %v766 = vld [vmem:[%s5] sm:$0xf]
        %v767 = vld [vmem:[%s5 + $0x4] sm:$0xf]
        %v768 = vld [vmem:[%s5 + $0x8] sm:$0xf]
        %v769 = vld [vmem:[%s5 + $0xc] sm:$0xf]
        %v770 = vld [vmem:[%s5 + $0x10] sm:$0xf]
        %v771 = vld [vmem:[%s5 + $0x14] sm:$0xf]
        %v772 = vld [vmem:[%s5 + $0x18] sm:$0xf]
        %v773 = vld [vmem:[%s5 + $0x1c] sm:$0xf]
        %v774 = vld [vmem:[#allocation6] sm:$0x1]
        %v776 = vperm.slane %v774, 0
        %v786 = vunpack.c.l.b16 %v766
        %v787 = vunpack.c.l.b16 %v767
        %v788 = vunpack.c.l.b16 %v768
        %v789 = vunpack.c.l.b16 %v769
        %v790 = vunpack.c.l.b16 %v770
        %v791 = vunpack.c.l.b16 %v771
        %v792 = vunpack.c.l.b16 %v772
        %v793 = vunpack.c.l.b16 %v773
        %v794 = vpack.c.b16 %v787, %v786
        %v795 = vpack.c.b16 %v789, %v788
        %v796 = vpack.c.b16 %v791, %v790
        %v797 = vpack.c.b16 %v793, %v792
        %v803 = vsel %vm668, %v758, 0
        %v806 = vsel %vm668, %v759, 0
        %v809 = vsel %vm668, %v760, 0
        %v812 = vsel %vm668, %v761, 0
        %v815 = vsel %vm668, %v762, 0
        %v818 = vsel %vm668, %v763, 0
        %v821 = vsel %vm668, %v764, 0
        %v824 = vsel %vm668, %v765, 0
        %826 = vmatpush.bf16.msra.mxu0 0
        %827 = vmatpush.bf16.msra.mxu0 0
        %828 = vmatpush.bf16.msra.mxu0 0
        %829 = vmatpush.bf16.msra.mxu0 0
        %830 = vmatpush.bf16.msra.mxu0 %v797
        %831 = vmatpush.bf16.msra.mxu0 %v796
        %832 = vmatpush.bf16.msra.mxu0 %v795
        %833 = vmatpush.bf16.msra.mxu0 %v794
        %834 = vmatmul.bf16.gmra.mxu0 %v803
        %v835 = vpop.f32.mrf.mxu0
        %v836 = vadd.f32 %v776, %v835
        %v837 = vpop.f32.mrf.mxu0
        %v838 = vadd.f32 %v776, %v837
        %839 = vmatmul.bf16.gmra.mxu0 %v806
        %v840 = vpop.f32.mrf.mxu0
        %v841 = vadd.f32 %v776, %v840
        %v842 = vpop.f32.mrf.mxu0
        %v843 = vadd.f32 %v776, %v842
        %844 = vmatmul.bf16.gmra.mxu0 %v809
        %v845 = vpop.f32.mrf.mxu0
        %v846 = vadd.f32 %v776, %v845
        %v847 = vpop.f32.mrf.mxu0
        %v848 = vadd.f32 %v776, %v847
        %849 = vmatmul.bf16.gmra.mxu0 %v812
        %v850 = vpop.f32.mrf.mxu0
        %v851 = vadd.f32 %v776, %v850
        %v852 = vpop.f32.mrf.mxu0
        %v853 = vadd.f32 %v776, %v852
        %854 = vmatmul.bf16.gmra.mxu0 %v815
        %v855 = vpop.f32.mrf.mxu0
        %v856 = vadd.f32 %v776, %v855
        %v857 = vpop.f32.mrf.mxu0
        %v858 = vadd.f32 %v776, %v857
        %859 = vmatmul.bf16.gmra.mxu0 %v818
        %v860 = vpop.f32.mrf.mxu0
        %v861 = vadd.f32 %v776, %v860
        %v862 = vpop.f32.mrf.mxu0
        %v863 = vadd.f32 %v776, %v862
        %864 = vmatmul.bf16.gmra.mxu0 %v821
        %v865 = vpop.f32.mrf.mxu0
        %v866 = vadd.f32 %v776, %v865
        %v867 = vpop.f32.mrf.mxu0
        %v868 = vadd.f32 %v776, %v867
        %869 = vmatmul.bf16.gmra.mxu0 %v824
        %v870 = vpop.f32.mrf.mxu0
        %v871 = vadd.f32 %v776, %v870
        %v872 = vpop.f32.mrf.mxu0
        %v873 = vadd.f32 %v776, %v872
        %874 = vdwg.mxu0
        %v875 = vmax.f32 %v836, 0.0
        %v876 = vmax.f32 %v838, 0.0
        %v877 = vmax.f32 %v841, 0.0
        %v878 = vmax.f32 %v843, 0.0
        %v879 = vmax.f32 %v846, 0.0
        %v880 = vmax.f32 %v848, 0.0
        %v881 = vmax.f32 %v851, 0.0
        %v882 = vmax.f32 %v853, 0.0
        %v883 = vmax.f32 %v856, 0.0
        %v884 = vmax.f32 %v858, 0.0
        %v885 = vmax.f32 %v861, 0.0
        %v886 = vmax.f32 %v863, 0.0
        %v887 = vmax.f32 %v866, 0.0
        %v888 = vmax.f32 %v868, 0.0
        %v889 = vmax.f32 %v871, 0.0
        %v890 = vmax.f32 %v873, 0.0
        %v891 = vadd.f32 %v875, %v608
        %v892 = vadd.f32 %v876, %v609
        %v893 = vadd.f32 %v877, %v610
        %v894 = vadd.f32 %v878, %v611
        %v895 = vadd.f32 %v879, %v612
        %v896 = vadd.f32 %v880, %v613
        %v897 = vadd.f32 %v881, %v614
        %v898 = vadd.f32 %v882, %v615
        %v899 = vadd.f32 %v883, %v616
        %v900 = vadd.f32 %v884, %v617
        %v901 = vadd.f32 %v885, %v618
        %v902 = vadd.f32 %v886, %v619
        %v903 = vadd.f32 %v887, %v620
        %v904 = vadd.f32 %v888, %v621
        %v905 = vadd.f32 %v889, %v622
        %v906 = vadd.f32 %v890, %v623
        %v907 = vpack.c.bf16 %v892, %v891
        %v908 = vpack.c.bf16 %v894, %v893
        %v909 = vpack.c.bf16 %v896, %v895
        %v910 = vpack.c.bf16 %v898, %v897
        %v911 = vpack.c.bf16 %v900, %v899
        %v912 = vpack.c.bf16 %v902, %v901
        %v913 = vpack.c.bf16 %v904, %v903
        %v914 = vpack.c.bf16 %v906, %v905
        %s915 = scalar_lea.vmem %s3, 32
        %v916 = vld [vmem:[%s915] sm:$0xf]
        %v917 = vld [vmem:[%s915 + $0x4] sm:$0xf]
        %v918 = vld [vmem:[%s915 + $0x8] sm:$0xf]
        %v919 = vld [vmem:[%s915 + $0xc] sm:$0xf]
        %v920 = vld [vmem:[%s915 + $0x10] sm:$0xf]
        %v921 = vld [vmem:[%s915 + $0x14] sm:$0xf]
        %v922 = vld [vmem:[%s915 + $0x18] sm:$0xf]
        %v923 = vld [vmem:[%s915 + $0x1c] sm:$0xf]
        %s924 = scalar_lea.vmem [#allocation4], 1
        %v925 = vld [vmem:[%s924] sm:$0x1]
        %v927 = vperm.slane %v925, 0
        %v937 = vunpack.c.l.b16 %v916
        %v938 = vunpack.c.l.b16 %v917
        %v939 = vunpack.c.l.b16 %v918
        %v940 = vunpack.c.l.b16 %v919
        %v941 = vunpack.c.l.b16 %v920
        %v942 = vunpack.c.l.b16 %v921
        %v943 = vunpack.c.l.b16 %v922
        %v944 = vunpack.c.l.b16 %v923
        %v945 = vpack.c.b16 %v938, %v937
        %v946 = vpack.c.b16 %v940, %v939
        %v947 = vpack.c.b16 %v942, %v941
        %v948 = vpack.c.b16 %v944, %v943
        %v954 = vsel %vm668, %v907, 0
        %v957 = vsel %vm668, %v908, 0
        %v960 = vsel %vm668, %v909, 0
        %v963 = vsel %vm668, %v910, 0
        %v966 = vsel %vm668, %v911, 0
        %v969 = vsel %vm668, %v912, 0
        %v972 = vsel %vm668, %v913, 0
        %v975 = vsel %vm668, %v914, 0
        %977 = vmatpush.bf16.msra.mxu0 0
        %978 = vmatpush.bf16.msra.mxu0 0
        %979 = vmatpush.bf16.msra.mxu0 0
        %980 = vmatpush.bf16.msra.mxu0 0
        %981 = vmatpush.bf16.msra.mxu0 %v948
        %982 = vmatpush.bf16.msra.mxu0 %v947
        %983 = vmatpush.bf16.msra.mxu0 %v946
        %984 = vmatpush.bf16.msra.mxu0 %v945
        %985 = vmatmul.bf16.gmra.mxu0 %v954
        %v986 = vpop.f32.mrf.mxu0
        %v987 = vadd.f32 %v927, %v986
        %v988 = vpop.f32.mrf.mxu0
        %v989 = vadd.f32 %v927, %v988
        %990 = vmatmul.bf16.gmra.mxu0 %v957
        %v991 = vpop.f32.mrf.mxu0
        %v992 = vadd.f32 %v927, %v991
        %v993 = vpop.f32.mrf.mxu0
        %v994 = vadd.f32 %v927, %v993
        %995 = vmatmul.bf16.gmra.mxu0 %v960
        %v996 = vpop.f32.mrf.mxu0
        %v997 = vadd.f32 %v927, %v996
        %v998 = vpop.f32.mrf.mxu0
        %v999 = vadd.f32 %v927, %v998
        %1000 = vmatmul.bf16.gmra.mxu0 %v963
        %v1001 = vpop.f32.mrf.mxu0
        %v1002 = vadd.f32 %v927, %v1001
        %v1003 = vpop.f32.mrf.mxu0
        %v1004 = vadd.f32 %v927, %v1003
        %1005 = vmatmul.bf16.gmra.mxu0 %v966
        %v1006 = vpop.f32.mrf.mxu0
        %v1007 = vadd.f32 %v927, %v1006
        %v1008 = vpop.f32.mrf.mxu0
        %v1009 = vadd.f32 %v927, %v1008
        %1010 = vmatmul.bf16.gmra.mxu0 %v969
        %v1011 = vpop.f32.mrf.mxu0
        %v1012 = vadd.f32 %v927, %v1011
        %v1013 = vpop.f32.mrf.mxu0
        %v1014 = vadd.f32 %v927, %v1013
        %1015 = vmatmul.bf16.gmra.mxu0 %v972
        %v1016 = vpop.f32.mrf.mxu0
        %v1017 = vadd.f32 %v927, %v1016
        %v1018 = vpop.f32.mrf.mxu0
        %v1019 = vadd.f32 %v927, %v1018
        %1020 = vmatmul.bf16.gmra.mxu0 %v975
        %v1021 = vpop.f32.mrf.mxu0
        %v1022 = vadd.f32 %v927, %v1021
        %v1023 = vpop.f32.mrf.mxu0
        %v1024 = vadd.f32 %v927, %v1023
        %1025 = vdwg.mxu0
        %v1026 = vmax.f32 %v987, 0.0
        %v1027 = vmax.f32 %v989, 0.0
        %v1028 = vmax.f32 %v992, 0.0
        %v1029 = vmax.f32 %v994, 0.0
        %v1030 = vmax.f32 %v997, 0.0
        %v1031 = vmax.f32 %v999, 0.0
        %v1032 = vmax.f32 %v1002, 0.0
        %v1033 = vmax.f32 %v1004, 0.0
        %v1034 = vmax.f32 %v1007, 0.0
        %v1035 = vmax.f32 %v1009, 0.0
        %v1036 = vmax.f32 %v1012, 0.0
        %v1037 = vmax.f32 %v1014, 0.0
        %v1038 = vmax.f32 %v1017, 0.0
        %v1039 = vmax.f32 %v1019, 0.0
        %v1040 = vmax.f32 %v1022, 0.0
        %v1041 = vmax.f32 %v1024, 0.0
        %v1042 = vpack.c.bf16 %v1027, %v1026
        %v1043 = vpack.c.bf16 %v1029, %v1028
        %v1044 = vpack.c.bf16 %v1031, %v1030
        %v1045 = vpack.c.bf16 %v1033, %v1032
        %v1046 = vpack.c.bf16 %v1035, %v1034
        %v1047 = vpack.c.bf16 %v1037, %v1036
        %v1048 = vpack.c.bf16 %v1039, %v1038
        %v1049 = vpack.c.bf16 %v1041, %v1040
        %s1050 = scalar_lea.vmem %s5, 32
        %v1051 = vld [vmem:[%s1050] sm:$0xf]
        %v1052 = vld [vmem:[%s1050 + $0x4] sm:$0xf]
        %v1053 = vld [vmem:[%s1050 + $0x8] sm:$0xf]
        %v1054 = vld [vmem:[%s1050 + $0xc] sm:$0xf]
        %v1055 = vld [vmem:[%s1050 + $0x10] sm:$0xf]
        %v1056 = vld [vmem:[%s1050 + $0x14] sm:$0xf]
        %v1057 = vld [vmem:[%s1050 + $0x18] sm:$0xf]
        %v1058 = vld [vmem:[%s1050 + $0x1c] sm:$0xf]
        %s1059 = scalar_lea.vmem [#allocation6], 1
        %v1060 = vld [vmem:[%s1059] sm:$0x1]
        %v1062 = vperm.slane %v1060, 0
        %v1072 = vunpack.c.l.b16 %v1051
        %v1073 = vunpack.c.l.b16 %v1052
        %v1074 = vunpack.c.l.b16 %v1053
        %v1075 = vunpack.c.l.b16 %v1054
        %v1076 = vunpack.c.l.b16 %v1055
        %v1077 = vunpack.c.l.b16 %v1056
        %v1078 = vunpack.c.l.b16 %v1057
        %v1079 = vunpack.c.l.b16 %v1058
        %v1080 = vpack.c.b16 %v1073, %v1072
        %v1081 = vpack.c.b16 %v1075, %v1074
        %v1082 = vpack.c.b16 %v1077, %v1076
        %v1083 = vpack.c.b16 %v1079, %v1078
        %v1089 = vsel %vm668, %v1042, 0
        %v1092 = vsel %vm668, %v1043, 0
        %v1095 = vsel %vm668, %v1044, 0
        %v1098 = vsel %vm668, %v1045, 0
        %v1101 = vsel %vm668, %v1046, 0
        %v1104 = vsel %vm668, %v1047, 0
        %v1107 = vsel %vm668, %v1048, 0
        %v1110 = vsel %vm668, %v1049, 0
        %1112 = vmatpush.bf16.msra.mxu0 0
        %1113 = vmatpush.bf16.msra.mxu0 0
        %1114 = vmatpush.bf16.msra.mxu0 0
        %1115 = vmatpush.bf16.msra.mxu0 0
        %1116 = vmatpush.bf16.msra.mxu0 %v1083
        %1117 = vmatpush.bf16.msra.mxu0 %v1082
        %1118 = vmatpush.bf16.msra.mxu0 %v1081
        %1119 = vmatpush.bf16.msra.mxu0 %v1080
        %1120 = vmatmul.bf16.gmra.mxu0 %v1089
        %v1121 = vpop.f32.mrf.mxu0
        %v1122 = vadd.f32 %v1062, %v1121
        %v1123 = vpop.f32.mrf.mxu0
        %v1124 = vadd.f32 %v1062, %v1123
        %1125 = vmatmul.bf16.gmra.mxu0 %v1092
        %v1126 = vpop.f32.mrf.mxu0
        %v1127 = vadd.f32 %v1062, %v1126
        %v1128 = vpop.f32.mrf.mxu0
        %v1129 = vadd.f32 %v1062, %v1128
        %1130 = vmatmul.bf16.gmra.mxu0 %v1095
        %v1131 = vpop.f32.mrf.mxu0
        %v1132 = vadd.f32 %v1062, %v1131
        %v1133 = vpop.f32.mrf.mxu0
        %v1134 = vadd.f32 %v1062, %v1133
        %1135 = vmatmul.bf16.gmra.mxu0 %v1098
        %v1136 = vpop.f32.mrf.mxu0
        %v1137 = vadd.f32 %v1062, %v1136
        %v1138 = vpop.f32.mrf.mxu0
        %v1139 = vadd.f32 %v1062, %v1138
        %1140 = vmatmul.bf16.gmra.mxu0 %v1101
        %v1141 = vpop.f32.mrf.mxu0
        %v1142 = vadd.f32 %v1062, %v1141
        %v1143 = vpop.f32.mrf.mxu0
        %v1144 = vadd.f32 %v1062, %v1143
        %1145 = vmatmul.bf16.gmra.mxu0 %v1104
        %v1146 = vpop.f32.mrf.mxu0
        %v1147 = vadd.f32 %v1062, %v1146
        %v1148 = vpop.f32.mrf.mxu0
        %v1149 = vadd.f32 %v1062, %v1148
        %1150 = vmatmul.bf16.gmra.mxu0 %v1107
        %v1151 = vpop.f32.mrf.mxu0
        %v1152 = vadd.f32 %v1062, %v1151
        %v1153 = vpop.f32.mrf.mxu0
        %v1154 = vadd.f32 %v1062, %v1153
        %1155 = vmatmul.bf16.gmra.mxu0 %v1110
        %v1156 = vpop.f32.mrf.mxu0
        %v1157 = vadd.f32 %v1062, %v1156
        %v1158 = vpop.f32.mrf.mxu0
        %v1159 = vadd.f32 %v1062, %v1158
        %1160 = vdwg.mxu0
        %v1161 = vmax.f32 %v1122, 0.0
        %v1162 = vmax.f32 %v1124, 0.0
        %v1163 = vmax.f32 %v1127, 0.0
        %v1164 = vmax.f32 %v1129, 0.0
        %v1165 = vmax.f32 %v1132, 0.0
        %v1166 = vmax.f32 %v1134, 0.0
        %v1167 = vmax.f32 %v1137, 0.0
        %v1168 = vmax.f32 %v1139, 0.0
        %v1169 = vmax.f32 %v1142, 0.0
        %v1170 = vmax.f32 %v1144, 0.0
        %v1171 = vmax.f32 %v1147, 0.0
        %v1172 = vmax.f32 %v1149, 0.0
        %v1173 = vmax.f32 %v1152, 0.0
        %v1174 = vmax.f32 %v1154, 0.0
        %v1175 = vmax.f32 %v1157, 0.0
        %v1176 = vmax.f32 %v1159, 0.0
        %v1177 = vadd.f32 %v1161, %v891
        %v1178 = vadd.f32 %v1162, %v892
        %v1179 = vadd.f32 %v1163, %v893
        %v1180 = vadd.f32 %v1164, %v894
        %v1181 = vadd.f32 %v1165, %v895
        %v1182 = vadd.f32 %v1166, %v896
        %v1183 = vadd.f32 %v1167, %v897
        %v1184 = vadd.f32 %v1168, %v898
        %v1185 = vadd.f32 %v1169, %v899
        %v1186 = vadd.f32 %v1170, %v900
        %v1187 = vadd.f32 %v1171, %v901
        %v1188 = vadd.f32 %v1172, %v902
        %v1189 = vadd.f32 %v1173, %v903
        %v1190 = vadd.f32 %v1174, %v904
        %v1191 = vadd.f32 %v1175, %v905
        %v1192 = vadd.f32 %v1176, %v906
        %v1193 = vpack.c.bf16 %v1178, %v1177
        %v1194 = vpack.c.bf16 %v1180, %v1179
        %v1195 = vpack.c.bf16 %v1182, %v1181
        %v1196 = vpack.c.bf16 %v1184, %v1183
        %v1197 = vpack.c.bf16 %v1186, %v1185
        %v1198 = vpack.c.bf16 %v1188, %v1187
        %v1199 = vpack.c.bf16 %v1190, %v1189
        %v1200 = vpack.c.bf16 %v1192, %v1191
        %v1201 = vld [vmem:[#allocation7] sm:$0xff]
        %v1202 = vld [vmem:[#allocation7 + $0x8] sm:$0xff]
        %v1203 = vld [vmem:[#allocation7 + $0x10] sm:$0xff]
        %v1204 = vld [vmem:[#allocation7 + $0x18] sm:$0xff]
        %v1205 = vld [vmem:[#allocation7 + $0x20] sm:$0xff]
        %v1206 = vld [vmem:[#allocation7 + $0x28] sm:$0xff]
        %v1207 = vld [vmem:[#allocation7 + $0x30] sm:$0xff]
        %v1208 = vld [vmem:[#allocation7 + $0x38] sm:$0xff]
        %v1209 = vld [vmem:[#allocation7 + $0x40] sm:$0xff]
        %v1210 = vld [vmem:[#allocation7 + $0x48] sm:$0xff]
        %v1211 = vld [vmem:[#allocation7 + $0x50] sm:$0xff]
        %v1212 = vld [vmem:[#allocation7 + $0x58] sm:$0xff]
        %v1213 = vld [vmem:[#allocation7 + $0x60] sm:$0xff]
        %v1214 = vld [vmem:[#allocation7 + $0x68] sm:$0xff]
        %v1215 = vld [vmem:[#allocation7 + $0x70] sm:$0xff]
        %v1216 = vld [vmem:[#allocation7 + $0x78] sm:$0xff]
        %v1217 = vld [vmem:[#allocation7 + $0x80] sm:$0xff]
        %v1218 = vld [vmem:[#allocation7 + $0x88] sm:$0xff]
        %v1219 = vld [vmem:[#allocation7 + $0x90] sm:$0xff]
        %v1220 = vld [vmem:[#allocation7 + $0x98] sm:$0xff]
        %v1221 = vld [vmem:[#allocation7 + $0xa0] sm:$0xff]
        %v1222 = vld [vmem:[#allocation7 + $0xa8] sm:$0xff]
        %v1223 = vld [vmem:[#allocation7 + $0xb0] sm:$0xff]
        %v1224 = vld [vmem:[#allocation7 + $0xb8] sm:$0xff]
        %v1225 = vld [vmem:[#allocation7 + $0xc0] sm:$0xff]
        %v1226 = vld [vmem:[#allocation7 + $0xc8] sm:$0xff]
        %v1227 = vld [vmem:[#allocation7 + $0xd0] sm:$0xff]
        %v1228 = vld [vmem:[#allocation7 + $0xd8] sm:$0xff]
        %v1229 = vld [vmem:[#allocation7 + $0xe0] sm:$0xff]
        %v1230 = vld [vmem:[#allocation7 + $0xe8] sm:$0xff]
        %v1231 = vld [vmem:[#allocation7 + $0xf0] sm:$0xff]
        %v1232 = vld [vmem:[#allocation7 + $0xf8] sm:$0xff]
        %v1233 = vld [vmem:[#allocation7 + $0x100] sm:$0xff]
        %v1234 = vld [vmem:[#allocation7 + $0x108] sm:$0xff]
        %v1235 = vld [vmem:[#allocation7 + $0x110] sm:$0xff]
        %v1236 = vld [vmem:[#allocation7 + $0x118] sm:$0xff]
        %v1237 = vld [vmem:[#allocation7 + $0x120] sm:$0xff]
        %v1238 = vld [vmem:[#allocation7 + $0x128] sm:$0xff]
        %v1239 = vld [vmem:[#allocation7 + $0x130] sm:$0xff]
        %v1240 = vld [vmem:[#allocation7 + $0x138] sm:$0xff]
        %v1241 = vld [vmem:[#allocation7 + $0x140] sm:$0xff]
        %v1242 = vld [vmem:[#allocation7 + $0x148] sm:$0xff]
        %v1243 = vld [vmem:[#allocation7 + $0x150] sm:$0xff]
        %v1244 = vld [vmem:[#allocation7 + $0x158] sm:$0xff]
        %v1245 = vld [vmem:[#allocation7 + $0x160] sm:$0xff]
        %v1246 = vld [vmem:[#allocation7 + $0x168] sm:$0xff]
        %v1247 = vld [vmem:[#allocation7 + $0x170] sm:$0xff]
        %v1248 = vld [vmem:[#allocation7 + $0x178] sm:$0xff]
        %v1249 = vld [vmem:[%s8] sm:$0xff]
        %v1250 = vld [vmem:[%s8 + $0x8] sm:$0xf]
        %v1253 = vperm.slane %v1249, 0
        %v1254 = vperm.slane %v1249, 1
        %v1255 = vperm.slane %v1249, 2
        %v1256 = vperm.slane %v1249, 3
        %v1257 = vperm.slane %v1249, 4
        %v1258 = vperm.slane %v1249, 5
        %v1259 = vperm.slane %v1249, 6
        %v1260 = vperm.slane %v1249, 7
        %v1261 = vperm.slane %v1250, 0
        %v1262 = vperm.slane %v1250, 1
        %v1263 = vperm.slane %v1250, 2
        %v1264 = vperm.slane %v1250, 3
        %v1325 = vunpack.c.l.b16 %v1201
        %v1326 = vunpack.c.h.b16 %v1201
        %v1327 = vunpack.c.l.b16 %v1202
        %v1328 = vunpack.c.h.b16 %v1202
        %v1329 = vunpack.c.l.b16 %v1203
        %v1330 = vunpack.c.h.b16 %v1203
        %v1331 = vunpack.c.l.b16 %v1204
        %v1332 = vunpack.c.h.b16 %v1204
        %v1333 = vunpack.c.l.b16 %v1205
        %v1334 = vunpack.c.h.b16 %v1205
        %v1335 = vunpack.c.l.b16 %v1206
        %v1336 = vunpack.c.h.b16 %v1206
        %v1337 = vunpack.c.l.b16 %v1207
        %v1338 = vunpack.c.h.b16 %v1207
        %v1339 = vunpack.c.l.b16 %v1208
        %v1340 = vunpack.c.h.b16 %v1208
        %v1341 = vunpack.c.l.b16 %v1209
        %v1342 = vunpack.c.h.b16 %v1209
        %v1343 = vunpack.c.l.b16 %v1210
        %v1344 = vunpack.c.h.b16 %v1210
        %v1345 = vunpack.c.l.b16 %v1211
        %v1346 = vunpack.c.h.b16 %v1211
        %v1347 = vunpack.c.l.b16 %v1212
        %v1348 = vunpack.c.h.b16 %v1212
        %v1349 = vunpack.c.l.b16 %v1213
        %v1350 = vunpack.c.h.b16 %v1213
        %v1351 = vunpack.c.l.b16 %v1214
        %v1352 = vunpack.c.h.b16 %v1214
        %v1353 = vunpack.c.l.b16 %v1215
        %v1354 = vunpack.c.h.b16 %v1215
        %v1355 = vunpack.c.l.b16 %v1216
        %v1356 = vunpack.c.h.b16 %v1216
        %v1357 = vunpack.c.l.b16 %v1217
        %v1358 = vunpack.c.h.b16 %v1217
        %v1359 = vunpack.c.l.b16 %v1218
        %v1360 = vunpack.c.h.b16 %v1218
        %v1361 = vunpack.c.l.b16 %v1219
        %v1362 = vunpack.c.h.b16 %v1219
        %v1363 = vunpack.c.l.b16 %v1220
        %v1364 = vunpack.c.h.b16 %v1220
        %v1365 = vunpack.c.l.b16 %v1221
        %v1366 = vunpack.c.h.b16 %v1221
        %v1367 = vunpack.c.l.b16 %v1222
        %v1368 = vunpack.c.h.b16 %v1222
        %v1369 = vunpack.c.l.b16 %v1223
        %v1370 = vunpack.c.h.b16 %v1223
        %v1371 = vunpack.c.l.b16 %v1224
        %v1372 = vunpack.c.h.b16 %v1224
        %v1373 = vunpack.c.l.b16 %v1225
        %v1374 = vunpack.c.h.b16 %v1225
        %v1375 = vunpack.c.l.b16 %v1226
        %v1376 = vunpack.c.h.b16 %v1226
        %v1377 = vunpack.c.l.b16 %v1227
        %v1378 = vunpack.c.h.b16 %v1227
        %v1379 = vunpack.c.l.b16 %v1228
        %v1380 = vunpack.c.h.b16 %v1228
        %v1381 = vunpack.c.l.b16 %v1229
        %v1382 = vunpack.c.h.b16 %v1229
        %v1383 = vunpack.c.l.b16 %v1230
        %v1384 = vunpack.c.h.b16 %v1230
        %v1385 = vunpack.c.l.b16 %v1231
        %v1386 = vunpack.c.h.b16 %v1231
        %v1387 = vunpack.c.l.b16 %v1232
        %v1388 = vunpack.c.h.b16 %v1232
        %v1389 = vunpack.c.l.b16 %v1233
        %v1390 = vunpack.c.h.b16 %v1233
        %v1391 = vunpack.c.l.b16 %v1234
        %v1392 = vunpack.c.h.b16 %v1234
        %v1393 = vunpack.c.l.b16 %v1235
        %v1394 = vunpack.c.h.b16 %v1235
        %v1395 = vunpack.c.l.b16 %v1236
        %v1396 = vunpack.c.h.b16 %v1236
        %v1397 = vunpack.c.l.b16 %v1237
        %v1398 = vunpack.c.h.b16 %v1237
        %v1399 = vunpack.c.l.b16 %v1238
        %v1400 = vunpack.c.h.b16 %v1238
        %v1401 = vunpack.c.l.b16 %v1239
        %v1402 = vunpack.c.h.b16 %v1239
        %v1403 = vunpack.c.l.b16 %v1240
        %v1404 = vunpack.c.h.b16 %v1240
        %v1405 = vunpack.c.l.b16 %v1241
        %v1406 = vunpack.c.h.b16 %v1241
        %v1407 = vunpack.c.l.b16 %v1242
        %v1408 = vunpack.c.h.b16 %v1242
        %v1409 = vunpack.c.l.b16 %v1243
        %v1410 = vunpack.c.h.b16 %v1243
        %v1411 = vunpack.c.l.b16 %v1244
        %v1412 = vunpack.c.h.b16 %v1244
        %v1413 = vunpack.c.l.b16 %v1245
        %v1414 = vunpack.c.h.b16 %v1245
        %v1415 = vunpack.c.l.b16 %v1246
        %v1416 = vunpack.c.h.b16 %v1246
        %v1417 = vunpack.c.l.b16 %v1247
        %v1418 = vunpack.c.h.b16 %v1247
        %v1419 = vunpack.c.l.b16 %v1248
        %v1420 = vunpack.c.h.b16 %v1248
        %v1421 = vpack.c.b16 %v1337, %v1325
        %v1422 = vpack.c.b16 %v1338, %v1326
        %v1423 = vpack.c.b16 %v1339, %v1327
        %v1424 = vpack.c.b16 %v1340, %v1328
        %v1425 = vpack.c.b16 %v1341, %v1329
        %v1426 = vpack.c.b16 %v1342, %v1330
        %v1427 = vpack.c.b16 %v1343, %v1331
        %v1428 = vpack.c.b16 %v1344, %v1332
        %v1429 = vpack.c.b16 %v1345, %v1333
        %v1430 = vpack.c.b16 %v1346, %v1334
        %v1431 = vpack.c.b16 %v1347, %v1335
        %v1432 = vpack.c.b16 %v1348, %v1336
        %v1433 = vpack.c.b16 %v1361, %v1349
        %v1434 = vpack.c.b16 %v1362, %v1350
        %v1435 = vpack.c.b16 %v1363, %v1351
        %v1436 = vpack.c.b16 %v1364, %v1352
        %v1437 = vpack.c.b16 %v1365, %v1353
        %v1438 = vpack.c.b16 %v1366, %v1354
        %v1439 = vpack.c.b16 %v1367, %v1355
        %v1440 = vpack.c.b16 %v1368, %v1356
        %v1441 = vpack.c.b16 %v1369, %v1357
        %v1442 = vpack.c.b16 %v1370, %v1358
        %v1443 = vpack.c.b16 %v1371, %v1359
        %v1444 = vpack.c.b16 %v1372, %v1360
        %v1445 = vpack.c.b16 %v1385, %v1373
        %v1446 = vpack.c.b16 %v1386, %v1374
        %v1447 = vpack.c.b16 %v1387, %v1375
        %v1448 = vpack.c.b16 %v1388, %v1376
        %v1449 = vpack.c.b16 %v1389, %v1377
        %v1450 = vpack.c.b16 %v1390, %v1378
        %v1451 = vpack.c.b16 %v1391, %v1379
        %v1452 = vpack.c.b16 %v1392, %v1380
        %v1453 = vpack.c.b16 %v1393, %v1381
        %v1454 = vpack.c.b16 %v1394, %v1382
        %v1455 = vpack.c.b16 %v1395, %v1383
        %v1456 = vpack.c.b16 %v1396, %v1384
        %v1457 = vpack.c.b16 %v1409, %v1397
        %v1458 = vpack.c.b16 %v1410, %v1398
        %v1459 = vpack.c.b16 %v1411, %v1399
        %v1460 = vpack.c.b16 %v1412, %v1400
        %v1461 = vpack.c.b16 %v1413, %v1401
        %v1462 = vpack.c.b16 %v1414, %v1402
        %v1463 = vpack.c.b16 %v1415, %v1403
        %v1464 = vpack.c.b16 %v1416, %v1404
        %v1465 = vpack.c.b16 %v1417, %v1405
        %v1466 = vpack.c.b16 %v1418, %v1406
        %v1467 = vpack.c.b16 %v1419, %v1407
        %v1468 = vpack.c.b16 %v1420, %v1408
        %v1518 = vsel %vm668, %v1193, 0
        %v1521 = vsel %vm668, %v1194, 0
        %v1524 = vsel %vm668, %v1195, 0
        %v1527 = vsel %vm668, %v1196, 0
        %v1530 = vsel %vm668, %v1197, 0
        %v1533 = vsel %vm668, %v1198, 0
        %v1536 = vsel %vm668, %v1199, 0
        %v1539 = vsel %vm668, %v1200, 0
        %1541 = vmatpush.bf16.msra.mxu0 0
        %1542 = vmatpush.bf16.msra.mxu0 0
        %1543 = vmatpush.bf16.msra.mxu0 0
        %1544 = vmatpush.bf16.msra.mxu0 0
        %1545 = vmatpush.bf16.msra.mxu0 %v1457
        %1546 = vmatpush.bf16.msra.mxu0 %v1445
        %1547 = vmatpush.bf16.msra.mxu0 %v1433
        %1548 = vmatpush.bf16.msra.mxu0 %v1421
        %1549 = vmatmul.bf16.gmra.mxu0 %v1518
        %v1550 = vpop.f32.mrf.mxu0
        %v1551 = vadd.f32 %v1253, %v1550
        %v1552 = vpop.f32.mrf.mxu0
        %v1553 = vadd.f32 %v1253, %v1552
        %1554 = vmatmul.bf16.gmra.mxu0 %v1521
        %v1555 = vpop.f32.mrf.mxu0
        %v1556 = vadd.f32 %v1253, %v1555
        %v1557 = vpop.f32.mrf.mxu0
        %v1558 = vadd.f32 %v1253, %v1557
        %1559 = vmatmul.bf16.gmra.mxu0 %v1524
        %v1560 = vpop.f32.mrf.mxu0
        %v1561 = vadd.f32 %v1253, %v1560
        %v1562 = vpop.f32.mrf.mxu0
        %v1563 = vadd.f32 %v1253, %v1562
        %1564 = vmatmul.bf16.gmra.mxu0 %v1527
        %v1565 = vpop.f32.mrf.mxu0
        %v1566 = vadd.f32 %v1253, %v1565
        %v1567 = vpop.f32.mrf.mxu0
        %v1568 = vadd.f32 %v1253, %v1567
        %1569 = vmatmul.bf16.gmra.mxu0 %v1530
        %v1570 = vpop.f32.mrf.mxu0
        %v1571 = vadd.f32 %v1253, %v1570
        %v1572 = vpop.f32.mrf.mxu0
        %v1573 = vadd.f32 %v1253, %v1572
        %1574 = vmatmul.bf16.gmra.mxu0 %v1533
        %v1575 = vpop.f32.mrf.mxu0
        %v1576 = vadd.f32 %v1253, %v1575
        %v1577 = vpop.f32.mrf.mxu0
        %v1578 = vadd.f32 %v1253, %v1577
        %1579 = vmatmul.bf16.gmra.mxu0 %v1536
        %v1580 = vpop.f32.mrf.mxu0
        %v1581 = vadd.f32 %v1253, %v1580
        %v1582 = vpop.f32.mrf.mxu0
        %v1583 = vadd.f32 %v1253, %v1582
        %1584 = vmatmul.bf16.gmra.mxu0 %v1539
        %v1585 = vpop.f32.mrf.mxu0
        %v1586 = vadd.f32 %v1253, %v1585
        %v1587 = vpop.f32.mrf.mxu0
        %v1588 = vadd.f32 %v1253, %v1587
        %1589 = vdwg.mxu0
        %1590 = vmatpush.bf16.msra.mxu0 0
        %1591 = vmatpush.bf16.msra.mxu0 0
        %1592 = vmatpush.bf16.msra.mxu0 0
        %1593 = vmatpush.bf16.msra.mxu0 0
        %1594 = vmatpush.bf16.msra.mxu0 %v1458
        %1595 = vmatpush.bf16.msra.mxu0 %v1446
        %1596 = vmatpush.bf16.msra.mxu0 %v1434
        %1597 = vmatpush.bf16.msra.mxu0 %v1422
        %1598 = vmatmul.bf16.gmra.mxu0 %v1518
        %v1599 = vpop.f32.mrf.mxu0
        %v1600 = vadd.f32 %v1254, %v1599
        %v1601 = vpop.f32.mrf.mxu0
        %v1602 = vadd.f32 %v1254, %v1601
        %1603 = vmatmul.bf16.gmra.mxu0 %v1521
        %v1604 = vpop.f32.mrf.mxu0
        %v1605 = vadd.f32 %v1254, %v1604
        %v1606 = vpop.f32.mrf.mxu0
        %v1607 = vadd.f32 %v1254, %v1606
        %1608 = vmatmul.bf16.gmra.mxu0 %v1524
        %v1609 = vpop.f32.mrf.mxu0
        %v1610 = vadd.f32 %v1254, %v1609
        %v1611 = vpop.f32.mrf.mxu0
        %v1612 = vadd.f32 %v1254, %v1611
        %1613 = vmatmul.bf16.gmra.mxu0 %v1527
        %v1614 = vpop.f32.mrf.mxu0
        %v1615 = vadd.f32 %v1254, %v1614
        %v1616 = vpop.f32.mrf.mxu0
        %v1617 = vadd.f32 %v1254, %v1616
        %1618 = vmatmul.bf16.gmra.mxu0 %v1530
        %v1619 = vpop.f32.mrf.mxu0
        %v1620 = vadd.f32 %v1254, %v1619
        %v1621 = vpop.f32.mrf.mxu0
        %v1622 = vadd.f32 %v1254, %v1621
        %1623 = vmatmul.bf16.gmra.mxu0 %v1533
        %v1624 = vpop.f32.mrf.mxu0
        %v1625 = vadd.f32 %v1254, %v1624
        %v1626 = vpop.f32.mrf.mxu0
        %v1627 = vadd.f32 %v1254, %v1626
        %1628 = vmatmul.bf16.gmra.mxu0 %v1536
        %v1629 = vpop.f32.mrf.mxu0
        %v1630 = vadd.f32 %v1254, %v1629
        %v1631 = vpop.f32.mrf.mxu0
        %v1632 = vadd.f32 %v1254, %v1631
        %1633 = vmatmul.bf16.gmra.mxu0 %v1539
        %v1634 = vpop.f32.mrf.mxu0
        %v1635 = vadd.f32 %v1254, %v1634
        %v1636 = vpop.f32.mrf.mxu0
        %v1637 = vadd.f32 %v1254, %v1636
        %1638 = vdwg.mxu0
        %1639 = vmatpush.bf16.msra.mxu0 0
        %1640 = vmatpush.bf16.msra.mxu0 0
        %1641 = vmatpush.bf16.msra.mxu0 0
        %1642 = vmatpush.bf16.msra.mxu0 0
        %1643 = vmatpush.bf16.msra.mxu0 %v1459
        %1644 = vmatpush.bf16.msra.mxu0 %v1447
        %1645 = vmatpush.bf16.msra.mxu0 %v1435
        %1646 = vmatpush.bf16.msra.mxu0 %v1423
        %1647 = vmatmul.bf16.gmra.mxu0 %v1518
        %v1648 = vpop.f32.mrf.mxu0
        %v1649 = vadd.f32 %v1255, %v1648
        %v1650 = vpop.f32.mrf.mxu0
        %v1651 = vadd.f32 %v1255, %v1650
        %1652 = vmatmul.bf16.gmra.mxu0 %v1521
        %v1653 = vpop.f32.mrf.mxu0
        %v1654 = vadd.f32 %v1255, %v1653
        %v1655 = vpop.f32.mrf.mxu0
        %v1656 = vadd.f32 %v1255, %v1655
        %1657 = vmatmul.bf16.gmra.mxu0 %v1524
        %v1658 = vpop.f32.mrf.mxu0
        %v1659 = vadd.f32 %v1255, %v1658
        %v1660 = vpop.f32.mrf.mxu0
        %v1661 = vadd.f32 %v1255, %v1660
        %1662 = vmatmul.bf16.gmra.mxu0 %v1527
        %v1663 = vpop.f32.mrf.mxu0
        %v1664 = vadd.f32 %v1255, %v1663
        %v1665 = vpop.f32.mrf.mxu0
        %v1666 = vadd.f32 %v1255, %v1665
        %1667 = vmatmul.bf16.gmra.mxu0 %v1530
        %v1668 = vpop.f32.mrf.mxu0
        %v1669 = vadd.f32 %v1255, %v1668
        %v1670 = vpop.f32.mrf.mxu0
        %v1671 = vadd.f32 %v1255, %v1670
        %1672 = vmatmul.bf16.gmra.mxu0 %v1533
        %v1673 = vpop.f32.mrf.mxu0
        %v1674 = vadd.f32 %v1255, %v1673
        %v1675 = vpop.f32.mrf.mxu0
        %v1676 = vadd.f32 %v1255, %v1675
        %1677 = vmatmul.bf16.gmra.mxu0 %v1536
        %v1678 = vpop.f32.mrf.mxu0
        %v1679 = vadd.f32 %v1255, %v1678
        %v1680 = vpop.f32.mrf.mxu0
        %v1681 = vadd.f32 %v1255, %v1680
        %1682 = vmatmul.bf16.gmra.mxu0 %v1539
        %v1683 = vpop.f32.mrf.mxu0
        %v1684 = vadd.f32 %v1255, %v1683
        %v1685 = vpop.f32.mrf.mxu0
        %v1686 = vadd.f32 %v1255, %v1685
        %1687 = vdwg.mxu0
        %1688 = vmatpush.bf16.msra.mxu0 0
        %1689 = vmatpush.bf16.msra.mxu0 0
        %1690 = vmatpush.bf16.msra.mxu0 0
        %1691 = vmatpush.bf16.msra.mxu0 0
        %1692 = vmatpush.bf16.msra.mxu0 %v1460
        %1693 = vmatpush.bf16.msra.mxu0 %v1448
        %1694 = vmatpush.bf16.msra.mxu0 %v1436
        %1695 = vmatpush.bf16.msra.mxu0 %v1424
        %1696 = vmatmul.bf16.gmra.mxu0 %v1518
        %v1697 = vpop.f32.mrf.mxu0
        %v1698 = vadd.f32 %v1256, %v1697
        %v1699 = vpop.f32.mrf.mxu0
        %v1700 = vadd.f32 %v1256, %v1699
        %1701 = vmatmul.bf16.gmra.mxu0 %v1521
        %v1702 = vpop.f32.mrf.mxu0
        %v1703 = vadd.f32 %v1256, %v1702
        %v1704 = vpop.f32.mrf.mxu0
        %v1705 = vadd.f32 %v1256, %v1704
        %1706 = vmatmul.bf16.gmra.mxu0 %v1524
        %v1707 = vpop.f32.mrf.mxu0
        %v1708 = vadd.f32 %v1256, %v1707
        %v1709 = vpop.f32.mrf.mxu0
        %v1710 = vadd.f32 %v1256, %v1709
        %1711 = vmatmul.bf16.gmra.mxu0 %v1527
        %v1712 = vpop.f32.mrf.mxu0
        %v1713 = vadd.f32 %v1256, %v1712
        %v1714 = vpop.f32.mrf.mxu0
        %v1715 = vadd.f32 %v1256, %v1714
        %1716 = vmatmul.bf16.gmra.mxu0 %v1530
        %v1717 = vpop.f32.mrf.mxu0
        %v1718 = vadd.f32 %v1256, %v1717
        %v1719 = vpop.f32.mrf.mxu0
        %v1720 = vadd.f32 %v1256, %v1719
        %1721 = vmatmul.bf16.gmra.mxu0 %v1533
        %v1722 = vpop.f32.mrf.mxu0
        %v1723 = vadd.f32 %v1256, %v1722
        %v1724 = vpop.f32.mrf.mxu0
        %v1725 = vadd.f32 %v1256, %v1724
        %1726 = vmatmul.bf16.gmra.mxu0 %v1536
        %v1727 = vpop.f32.mrf.mxu0
        %v1728 = vadd.f32 %v1256, %v1727
        %v1729 = vpop.f32.mrf.mxu0
        %v1730 = vadd.f32 %v1256, %v1729
        %1731 = vmatmul.bf16.gmra.mxu0 %v1539
        %v1732 = vpop.f32.mrf.mxu0
        %v1733 = vadd.f32 %v1256, %v1732
        %v1734 = vpop.f32.mrf.mxu0
        %v1735 = vadd.f32 %v1256, %v1734
        %1736 = vdwg.mxu0
        %1737 = vmatpush.bf16.msra.mxu0 0
        %1738 = vmatpush.bf16.msra.mxu0 0
        %1739 = vmatpush.bf16.msra.mxu0 0
        %1740 = vmatpush.bf16.msra.mxu0 0
        %1741 = vmatpush.bf16.msra.mxu0 %v1461
        %1742 = vmatpush.bf16.msra.mxu0 %v1449
        %1743 = vmatpush.bf16.msra.mxu0 %v1437
        %1744 = vmatpush.bf16.msra.mxu0 %v1425
        %1745 = vmatmul.bf16.gmra.mxu0 %v1518
        %v1746 = vpop.f32.mrf.mxu0
        %v1747 = vadd.f32 %v1257, %v1746
        %v1748 = vpop.f32.mrf.mxu0
        %v1749 = vadd.f32 %v1257, %v1748
        %1750 = vmatmul.bf16.gmra.mxu0 %v1521
        %v1751 = vpop.f32.mrf.mxu0
        %v1752 = vadd.f32 %v1257, %v1751
        %v1753 = vpop.f32.mrf.mxu0
        %v1754 = vadd.f32 %v1257, %v1753
        %1755 = vmatmul.bf16.gmra.mxu0 %v1524
        %v1756 = vpop.f32.mrf.mxu0
        %v1757 = vadd.f32 %v1257, %v1756
        %v1758 = vpop.f32.mrf.mxu0
        %v1759 = vadd.f32 %v1257, %v1758
        %1760 = vmatmul.bf16.gmra.mxu0 %v1527
        %v1761 = vpop.f32.mrf.mxu0
        %v1762 = vadd.f32 %v1257, %v1761
        %v1763 = vpop.f32.mrf.mxu0
        %v1764 = vadd.f32 %v1257, %v1763
        %1765 = vmatmul.bf16.gmra.mxu0 %v1530
        %v1766 = vpop.f32.mrf.mxu0
        %v1767 = vadd.f32 %v1257, %v1766
        %v1768 = vpop.f32.mrf.mxu0
        %v1769 = vadd.f32 %v1257, %v1768
        %1770 = vmatmul.bf16.gmra.mxu0 %v1533
        %v1771 = vpop.f32.mrf.mxu0
        %v1772 = vadd.f32 %v1257, %v1771
        %v1773 = vpop.f32.mrf.mxu0
        %v1774 = vadd.f32 %v1257, %v1773
        %1775 = vmatmul.bf16.gmra.mxu0 %v1536
        %v1776 = vpop.f32.mrf.mxu0
        %v1777 = vadd.f32 %v1257, %v1776
        %v1778 = vpop.f32.mrf.mxu0
        %v1779 = vadd.f32 %v1257, %v1778
        %1780 = vmatmul.bf16.gmra.mxu0 %v1539
        %v1781 = vpop.f32.mrf.mxu0
        %v1782 = vadd.f32 %v1257, %v1781
        %v1783 = vpop.f32.mrf.mxu0
        %v1784 = vadd.f32 %v1257, %v1783
        %1785 = vdwg.mxu0
        %1786 = vmatpush.bf16.msra.mxu0 0
        %1787 = vmatpush.bf16.msra.mxu0 0
        %1788 = vmatpush.bf16.msra.mxu0 0
        %1789 = vmatpush.bf16.msra.mxu0 0
        %1790 = vmatpush.bf16.msra.mxu0 %v1462
        %1791 = vmatpush.bf16.msra.mxu0 %v1450
        %1792 = vmatpush.bf16.msra.mxu0 %v1438
        %1793 = vmatpush.bf16.msra.mxu0 %v1426
        %1794 = vmatmul.bf16.gmra.mxu0 %v1518
        %v1795 = vpop.f32.mrf.mxu0
        %v1796 = vadd.f32 %v1258, %v1795
        %v1797 = vpop.f32.mrf.mxu0
        %v1798 = vadd.f32 %v1258, %v1797
        %1799 = vmatmul.bf16.gmra.mxu0 %v1521
        %v1800 = vpop.f32.mrf.mxu0
        %v1801 = vadd.f32 %v1258, %v1800
        %v1802 = vpop.f32.mrf.mxu0
        %v1803 = vadd.f32 %v1258, %v1802
        %1804 = vmatmul.bf16.gmra.mxu0 %v1524
        %v1805 = vpop.f32.mrf.mxu0
        %v1806 = vadd.f32 %v1258, %v1805
        %v1807 = vpop.f32.mrf.mxu0
        %v1808 = vadd.f32 %v1258, %v1807
        %1809 = vmatmul.bf16.gmra.mxu0 %v1527
        %v1810 = vpop.f32.mrf.mxu0
        %v1811 = vadd.f32 %v1258, %v1810
        %v1812 = vpop.f32.mrf.mxu0
        %v1813 = vadd.f32 %v1258, %v1812
        %1814 = vmatmul.bf16.gmra.mxu0 %v1530
        %v1815 = vpop.f32.mrf.mxu0
        %v1816 = vadd.f32 %v1258, %v1815
        %v1817 = vpop.f32.mrf.mxu0
        %v1818 = vadd.f32 %v1258, %v1817
        %1819 = vmatmul.bf16.gmra.mxu0 %v1533
        %v1820 = vpop.f32.mrf.mxu0
        %v1821 = vadd.f32 %v1258, %v1820
        %v1822 = vpop.f32.mrf.mxu0
        %v1823 = vadd.f32 %v1258, %v1822
        %1824 = vmatmul.bf16.gmra.mxu0 %v1536
        %v1825 = vpop.f32.mrf.mxu0
        %v1826 = vadd.f32 %v1258, %v1825
        %v1827 = vpop.f32.mrf.mxu0
        %v1828 = vadd.f32 %v1258, %v1827
        %1829 = vmatmul.bf16.gmra.mxu0 %v1539
        %v1830 = vpop.f32.mrf.mxu0
        %v1831 = vadd.f32 %v1258, %v1830
        %v1832 = vpop.f32.mrf.mxu0
        %v1833 = vadd.f32 %v1258, %v1832
        %1834 = vdwg.mxu0
        %1835 = vmatpush.bf16.msra.mxu0 0
        %1836 = vmatpush.bf16.msra.mxu0 0
        %1837 = vmatpush.bf16.msra.mxu0 0
        %1838 = vmatpush.bf16.msra.mxu0 0
        %1839 = vmatpush.bf16.msra.mxu0 %v1463
        %1840 = vmatpush.bf16.msra.mxu0 %v1451
        %1841 = vmatpush.bf16.msra.mxu0 %v1439
        %1842 = vmatpush.bf16.msra.mxu0 %v1427
        %1843 = vmatmul.bf16.gmra.mxu0 %v1518
        %v1844 = vpop.f32.mrf.mxu0
        %v1845 = vadd.f32 %v1259, %v1844
        %v1846 = vpop.f32.mrf.mxu0
        %v1847 = vadd.f32 %v1259, %v1846
        %1848 = vmatmul.bf16.gmra.mxu0 %v1521
        %v1849 = vpop.f32.mrf.mxu0
        %v1850 = vadd.f32 %v1259, %v1849
        %v1851 = vpop.f32.mrf.mxu0
        %v1852 = vadd.f32 %v1259, %v1851
        %1853 = vmatmul.bf16.gmra.mxu0 %v1524
        %v1854 = vpop.f32.mrf.mxu0
        %v1855 = vadd.f32 %v1259, %v1854
        %v1856 = vpop.f32.mrf.mxu0
        %v1857 = vadd.f32 %v1259, %v1856
        %1858 = vmatmul.bf16.gmra.mxu0 %v1527
        %v1859 = vpop.f32.mrf.mxu0
        %v1860 = vadd.f32 %v1259, %v1859
        %v1861 = vpop.f32.mrf.mxu0
        %v1862 = vadd.f32 %v1259, %v1861
        %1863 = vmatmul.bf16.gmra.mxu0 %v1530
        %v1864 = vpop.f32.mrf.mxu0
        %v1865 = vadd.f32 %v1259, %v1864
        %v1866 = vpop.f32.mrf.mxu0
        %v1867 = vadd.f32 %v1259, %v1866
        %1868 = vmatmul.bf16.gmra.mxu0 %v1533
        %v1869 = vpop.f32.mrf.mxu0
        %v1870 = vadd.f32 %v1259, %v1869
        %v1871 = vpop.f32.mrf.mxu0
        %v1872 = vadd.f32 %v1259, %v1871
        %1873 = vmatmul.bf16.gmra.mxu0 %v1536
        %v1874 = vpop.f32.mrf.mxu0
        %v1875 = vadd.f32 %v1259, %v1874
        %v1876 = vpop.f32.mrf.mxu0
        %v1877 = vadd.f32 %v1259, %v1876
        %1878 = vmatmul.bf16.gmra.mxu0 %v1539
        %v1879 = vpop.f32.mrf.mxu0
        %v1880 = vadd.f32 %v1259, %v1879
        %v1881 = vpop.f32.mrf.mxu0
        %v1882 = vadd.f32 %v1259, %v1881
        %1883 = vdwg.mxu0
        %1884 = vmatpush.bf16.msra.mxu0 0
        %1885 = vmatpush.bf16.msra.mxu0 0
        %1886 = vmatpush.bf16.msra.mxu0 0
        %1887 = vmatpush.bf16.msra.mxu0 0
        %1888 = vmatpush.bf16.msra.mxu0 %v1464
        %1889 = vmatpush.bf16.msra.mxu0 %v1452
        %1890 = vmatpush.bf16.msra.mxu0 %v1440
        %1891 = vmatpush.bf16.msra.mxu0 %v1428
        %1892 = vmatmul.bf16.gmra.mxu0 %v1518
        %v1893 = vpop.f32.mrf.mxu0
        %v1894 = vadd.f32 %v1260, %v1893
        %v1895 = vpop.f32.mrf.mxu0
        %v1896 = vadd.f32 %v1260, %v1895
        %1897 = vmatmul.bf16.gmra.mxu0 %v1521
        %v1898 = vpop.f32.mrf.mxu0
        %v1899 = vadd.f32 %v1260, %v1898
        %v1900 = vpop.f32.mrf.mxu0
        %v1901 = vadd.f32 %v1260, %v1900
        %1902 = vmatmul.bf16.gmra.mxu0 %v1524
        %v1903 = vpop.f32.mrf.mxu0
        %v1904 = vadd.f32 %v1260, %v1903
        %v1905 = vpop.f32.mrf.mxu0
        %v1906 = vadd.f32 %v1260, %v1905
        %1907 = vmatmul.bf16.gmra.mxu0 %v1527
        %v1908 = vpop.f32.mrf.mxu0
        %v1909 = vadd.f32 %v1260, %v1908
        %v1910 = vpop.f32.mrf.mxu0
        %v1911 = vadd.f32 %v1260, %v1910
        %1912 = vmatmul.bf16.gmra.mxu0 %v1530
        %v1913 = vpop.f32.mrf.mxu0
        %v1914 = vadd.f32 %v1260, %v1913
        %v1915 = vpop.f32.mrf.mxu0
        %v1916 = vadd.f32 %v1260, %v1915
        %1917 = vmatmul.bf16.gmra.mxu0 %v1533
        %v1918 = vpop.f32.mrf.mxu0
        %v1919 = vadd.f32 %v1260, %v1918
        %v1920 = vpop.f32.mrf.mxu0
        %v1921 = vadd.f32 %v1260, %v1920
        %1922 = vmatmul.bf16.gmra.mxu0 %v1536
        %v1923 = vpop.f32.mrf.mxu0
        %v1924 = vadd.f32 %v1260, %v1923
        %v1925 = vpop.f32.mrf.mxu0
        %v1926 = vadd.f32 %v1260, %v1925
        %1927 = vmatmul.bf16.gmra.mxu0 %v1539
        %v1928 = vpop.f32.mrf.mxu0
        %v1929 = vadd.f32 %v1260, %v1928
        %v1930 = vpop.f32.mrf.mxu0
        %v1931 = vadd.f32 %v1260, %v1930
        %1932 = vdwg.mxu0
        %1933 = vmatpush.bf16.msra.mxu0 0
        %1934 = vmatpush.bf16.msra.mxu0 0
        %1935 = vmatpush.bf16.msra.mxu0 0
        %1936 = vmatpush.bf16.msra.mxu0 0
        %1937 = vmatpush.bf16.msra.mxu0 %v1465
        %1938 = vmatpush.bf16.msra.mxu0 %v1453
        %1939 = vmatpush.bf16.msra.mxu0 %v1441
        %1940 = vmatpush.bf16.msra.mxu0 %v1429
        %1941 = vmatmul.bf16.gmra.mxu0 %v1518
        %v1942 = vpop.f32.mrf.mxu0
        %v1943 = vadd.f32 %v1261, %v1942
        %v1944 = vpop.f32.mrf.mxu0
        %v1945 = vadd.f32 %v1261, %v1944
        %1946 = vmatmul.bf16.gmra.mxu0 %v1521
        %v1947 = vpop.f32.mrf.mxu0
        %v1948 = vadd.f32 %v1261, %v1947
        %v1949 = vpop.f32.mrf.mxu0
        %v1950 = vadd.f32 %v1261, %v1949
        %1951 = vmatmul.bf16.gmra.mxu0 %v1524
        %v1952 = vpop.f32.mrf.mxu0
        %v1953 = vadd.f32 %v1261, %v1952
        %v1954 = vpop.f32.mrf.mxu0
        %v1955 = vadd.f32 %v1261, %v1954
        %1956 = vmatmul.bf16.gmra.mxu0 %v1527
        %v1957 = vpop.f32.mrf.mxu0
        %v1958 = vadd.f32 %v1261, %v1957
        %v1959 = vpop.f32.mrf.mxu0
        %v1960 = vadd.f32 %v1261, %v1959
        %1961 = vmatmul.bf16.gmra.mxu0 %v1530
        %v1962 = vpop.f32.mrf.mxu0
        %v1963 = vadd.f32 %v1261, %v1962
        %v1964 = vpop.f32.mrf.mxu0
        %v1965 = vadd.f32 %v1261, %v1964
        %1966 = vmatmul.bf16.gmra.mxu0 %v1533
        %v1967 = vpop.f32.mrf.mxu0
        %v1968 = vadd.f32 %v1261, %v1967
        %v1969 = vpop.f32.mrf.mxu0
        %v1970 = vadd.f32 %v1261, %v1969
        %1971 = vmatmul.bf16.gmra.mxu0 %v1536
        %v1972 = vpop.f32.mrf.mxu0
        %v1973 = vadd.f32 %v1261, %v1972
        %v1974 = vpop.f32.mrf.mxu0
        %v1975 = vadd.f32 %v1261, %v1974
        %1976 = vmatmul.bf16.gmra.mxu0 %v1539
        %v1977 = vpop.f32.mrf.mxu0
        %v1978 = vadd.f32 %v1261, %v1977
        %v1979 = vpop.f32.mrf.mxu0
        %v1980 = vadd.f32 %v1261, %v1979
        %1981 = vdwg.mxu0
        %1982 = vmatpush.bf16.msra.mxu0 0
        %1983 = vmatpush.bf16.msra.mxu0 0
        %1984 = vmatpush.bf16.msra.mxu0 0
        %1985 = vmatpush.bf16.msra.mxu0 0
        %1986 = vmatpush.bf16.msra.mxu0 %v1466
        %1987 = vmatpush.bf16.msra.mxu0 %v1454
        %1988 = vmatpush.bf16.msra.mxu0 %v1442
        %1989 = vmatpush.bf16.msra.mxu0 %v1430
        %1990 = vmatmul.bf16.gmra.mxu0 %v1518
        %v1991 = vpop.f32.mrf.mxu0
        %v1992 = vadd.f32 %v1262, %v1991
        %v1993 = vpop.f32.mrf.mxu0
        %v1994 = vadd.f32 %v1262, %v1993
        %1995 = vmatmul.bf16.gmra.mxu0 %v1521
        %v1996 = vpop.f32.mrf.mxu0
        %v1997 = vadd.f32 %v1262, %v1996
        %v1998 = vpop.f32.mrf.mxu0
        %v1999 = vadd.f32 %v1262, %v1998
        %2000 = vmatmul.bf16.gmra.mxu0 %v1524
        %v2001 = vpop.f32.mrf.mxu0
        %v2002 = vadd.f32 %v1262, %v2001
        %v2003 = vpop.f32.mrf.mxu0
        %v2004 = vadd.f32 %v1262, %v2003
        %2005 = vmatmul.bf16.gmra.mxu0 %v1527
        %v2006 = vpop.f32.mrf.mxu0
        %v2007 = vadd.f32 %v1262, %v2006
        %v2008 = vpop.f32.mrf.mxu0
        %v2009 = vadd.f32 %v1262, %v2008
        %2010 = vmatmul.bf16.gmra.mxu0 %v1530
        %v2011 = vpop.f32.mrf.mxu0
        %v2012 = vadd.f32 %v1262, %v2011
        %v2013 = vpop.f32.mrf.mxu0
        %v2014 = vadd.f32 %v1262, %v2013
        %2015 = vmatmul.bf16.gmra.mxu0 %v1533
        %v2016 = vpop.f32.mrf.mxu0
        %v2017 = vadd.f32 %v1262, %v2016
        %v2018 = vpop.f32.mrf.mxu0
        %v2019 = vadd.f32 %v1262, %v2018
        %2020 = vmatmul.bf16.gmra.mxu0 %v1536
        %v2021 = vpop.f32.mrf.mxu0
        %v2022 = vadd.f32 %v1262, %v2021
        %v2023 = vpop.f32.mrf.mxu0
        %v2024 = vadd.f32 %v1262, %v2023
        %2025 = vmatmul.bf16.gmra.mxu0 %v1539
        %v2026 = vpop.f32.mrf.mxu0
        %v2027 = vadd.f32 %v1262, %v2026
        %v2028 = vpop.f32.mrf.mxu0
        %v2029 = vadd.f32 %v1262, %v2028
        %2030 = vdwg.mxu0
        %2031 = vmatpush.bf16.msra.mxu0 0
        %2032 = vmatpush.bf16.msra.mxu0 0
        %2033 = vmatpush.bf16.msra.mxu0 0
        %2034 = vmatpush.bf16.msra.mxu0 0
        %2035 = vmatpush.bf16.msra.mxu0 %v1467
        %2036 = vmatpush.bf16.msra.mxu0 %v1455
        %2037 = vmatpush.bf16.msra.mxu0 %v1443
        %2038 = vmatpush.bf16.msra.mxu0 %v1431
        %2039 = vmatmul.bf16.gmra.mxu0 %v1518
        %v2040 = vpop.f32.mrf.mxu0
        %v2041 = vadd.f32 %v1263, %v2040
        %v2042 = vpop.f32.mrf.mxu0
        %v2043 = vadd.f32 %v1263, %v2042
        %2044 = vmatmul.bf16.gmra.mxu0 %v1521
        %v2045 = vpop.f32.mrf.mxu0
        %v2046 = vadd.f32 %v1263, %v2045
        %v2047 = vpop.f32.mrf.mxu0
        %v2048 = vadd.f32 %v1263, %v2047
        %2049 = vmatmul.bf16.gmra.mxu0 %v1524
        %v2050 = vpop.f32.mrf.mxu0
        %v2051 = vadd.f32 %v1263, %v2050
        %v2052 = vpop.f32.mrf.mxu0
        %v2053 = vadd.f32 %v1263, %v2052
        %2054 = vmatmul.bf16.gmra.mxu0 %v1527
        %v2055 = vpop.f32.mrf.mxu0
        %v2056 = vadd.f32 %v1263, %v2055
        %v2057 = vpop.f32.mrf.mxu0
        %v2058 = vadd.f32 %v1263, %v2057
        %2059 = vmatmul.bf16.gmra.mxu0 %v1530
        %v2060 = vpop.f32.mrf.mxu0
        %v2061 = vadd.f32 %v1263, %v2060
        %v2062 = vpop.f32.mrf.mxu0
        %v2063 = vadd.f32 %v1263, %v2062
        %2064 = vmatmul.bf16.gmra.mxu0 %v1533
        %v2065 = vpop.f32.mrf.mxu0
        %v2066 = vadd.f32 %v1263, %v2065
        %v2067 = vpop.f32.mrf.mxu0
        %v2068 = vadd.f32 %v1263, %v2067
        %2069 = vmatmul.bf16.gmra.mxu0 %v1536
        %v2070 = vpop.f32.mrf.mxu0
        %v2071 = vadd.f32 %v1263, %v2070
        %v2072 = vpop.f32.mrf.mxu0
        %v2073 = vadd.f32 %v1263, %v2072
        %2074 = vmatmul.bf16.gmra.mxu0 %v1539
        %v2075 = vpop.f32.mrf.mxu0
        %v2076 = vadd.f32 %v1263, %v2075
        %v2077 = vpop.f32.mrf.mxu0
        %v2078 = vadd.f32 %v1263, %v2077
        %2079 = vdwg.mxu0
        %2080 = vmatpush.bf16.msra.mxu0 0
        %2081 = vmatpush.bf16.msra.mxu0 0
        %2082 = vmatpush.bf16.msra.mxu0 0
        %2083 = vmatpush.bf16.msra.mxu0 0
        %2084 = vmatpush.bf16.msra.mxu0 %v1468
        %2085 = vmatpush.bf16.msra.mxu0 %v1456
        %2086 = vmatpush.bf16.msra.mxu0 %v1444
        %2087 = vmatpush.bf16.msra.mxu0 %v1432
        %2088 = vmatmul.bf16.gmra.mxu0 %v1518
        %v2089 = vpop.f32.mrf.mxu0
        %v2090 = vadd.f32 %v1264, %v2089
        %v2091 = vpop.f32.mrf.mxu0
        %v2092 = vadd.f32 %v1264, %v2091
        %2093 = vmatmul.bf16.gmra.mxu0 %v1521
        %v2094 = vpop.f32.mrf.mxu0
        %v2095 = vadd.f32 %v1264, %v2094
        %v2096 = vpop.f32.mrf.mxu0
        %v2097 = vadd.f32 %v1264, %v2096
        %2098 = vmatmul.bf16.gmra.mxu0 %v1524
        %v2099 = vpop.f32.mrf.mxu0
        %v2100 = vadd.f32 %v1264, %v2099
        %v2101 = vpop.f32.mrf.mxu0
        %v2102 = vadd.f32 %v1264, %v2101
        %2103 = vmatmul.bf16.gmra.mxu0 %v1527
        %v2104 = vpop.f32.mrf.mxu0
        %v2105 = vadd.f32 %v1264, %v2104
        %v2106 = vpop.f32.mrf.mxu0
        %v2107 = vadd.f32 %v1264, %v2106
        %2108 = vmatmul.bf16.gmra.mxu0 %v1530
        %v2109 = vpop.f32.mrf.mxu0
        %v2110 = vadd.f32 %v1264, %v2109
        %v2111 = vpop.f32.mrf.mxu0
        %v2112 = vadd.f32 %v1264, %v2111
        %2113 = vmatmul.bf16.gmra.mxu0 %v1533
        %v2114 = vpop.f32.mrf.mxu0
        %v2115 = vadd.f32 %v1264, %v2114
        %v2116 = vpop.f32.mrf.mxu0
        %v2117 = vadd.f32 %v1264, %v2116
        %2118 = vmatmul.bf16.gmra.mxu0 %v1536
        %v2119 = vpop.f32.mrf.mxu0
        %v2120 = vadd.f32 %v1264, %v2119
        %v2121 = vpop.f32.mrf.mxu0
        %v2122 = vadd.f32 %v1264, %v2121
        %2123 = vmatmul.bf16.gmra.mxu0 %v1539
        %v2124 = vpop.f32.mrf.mxu0
        %v2125 = vadd.f32 %v1264, %v2124
        %v2126 = vpop.f32.mrf.mxu0
        %v2127 = vadd.f32 %v1264, %v2126
        %2128 = vdwg.mxu0
        %v2129 = vmax.f32 %v1551, 0.0
        %v2130 = vmax.f32 %v1600, 0.0
        %v2131 = vmax.f32 %v1649, 0.0
        %v2132 = vmax.f32 %v1698, 0.0
        %v2133 = vmax.f32 %v1747, 0.0
        %v2134 = vmax.f32 %v1796, 0.0
        %v2135 = vmax.f32 %v1845, 0.0
        %v2136 = vmax.f32 %v1894, 0.0
        %v2137 = vmax.f32 %v1943, 0.0
        %v2138 = vmax.f32 %v1992, 0.0
        %v2139 = vmax.f32 %v2041, 0.0
        %v2140 = vmax.f32 %v2090, 0.0
        %v2141 = vmax.f32 %v1553, 0.0
        %v2142 = vmax.f32 %v1602, 0.0
        %v2143 = vmax.f32 %v1651, 0.0
        %v2144 = vmax.f32 %v1700, 0.0
        %v2145 = vmax.f32 %v1749, 0.0
        %v2146 = vmax.f32 %v1798, 0.0
        %v2147 = vmax.f32 %v1847, 0.0
        %v2148 = vmax.f32 %v1896, 0.0
        %v2149 = vmax.f32 %v1945, 0.0
        %v2150 = vmax.f32 %v1994, 0.0
        %v2151 = vmax.f32 %v2043, 0.0
        %v2152 = vmax.f32 %v2092, 0.0
        %v2153 = vmax.f32 %v1556, 0.0
        %v2154 = vmax.f32 %v1605, 0.0
        %v2155 = vmax.f32 %v1654, 0.0
        %v2156 = vmax.f32 %v1703, 0.0
        %v2157 = vmax.f32 %v1752, 0.0
        %v2158 = vmax.f32 %v1801, 0.0
        %v2159 = vmax.f32 %v1850, 0.0
        %v2160 = vmax.f32 %v1899, 0.0
        %v2161 = vmax.f32 %v1948, 0.0
        %v2162 = vmax.f32 %v1997, 0.0
        %v2163 = vmax.f32 %v2046, 0.0
        %v2164 = vmax.f32 %v2095, 0.0
        %v2165 = vmax.f32 %v1558, 0.0
        %v2166 = vmax.f32 %v1607, 0.0
        %v2167 = vmax.f32 %v1656, 0.0
        %v2168 = vmax.f32 %v1705, 0.0
        %v2169 = vmax.f32 %v1754, 0.0
        %v2170 = vmax.f32 %v1803, 0.0
        %v2171 = vmax.f32 %v1852, 0.0
        %v2172 = vmax.f32 %v1901, 0.0
        %v2173 = vmax.f32 %v1950, 0.0
        %v2174 = vmax.f32 %v1999, 0.0
        %v2175 = vmax.f32 %v2048, 0.0
        %v2176 = vmax.f32 %v2097, 0.0
        %v2177 = vmax.f32 %v1561, 0.0
        %v2178 = vmax.f32 %v1610, 0.0
        %v2179 = vmax.f32 %v1659, 0.0
        %v2180 = vmax.f32 %v1708, 0.0
        %v2181 = vmax.f32 %v1757, 0.0
        %v2182 = vmax.f32 %v1806, 0.0
        %v2183 = vmax.f32 %v1855, 0.0
        %v2184 = vmax.f32 %v1904, 0.0
        %v2185 = vmax.f32 %v1953, 0.0
        %v2186 = vmax.f32 %v2002, 0.0
        %v2187 = vmax.f32 %v2051, 0.0
        %v2188 = vmax.f32 %v2100, 0.0
        %v2189 = vmax.f32 %v1563, 0.0
        %v2190 = vmax.f32 %v1612, 0.0
        %v2191 = vmax.f32 %v1661, 0.0
        %v2192 = vmax.f32 %v1710, 0.0
        %v2193 = vmax.f32 %v1759, 0.0
        %v2194 = vmax.f32 %v1808, 0.0
        %v2195 = vmax.f32 %v1857, 0.0
        %v2196 = vmax.f32 %v1906, 0.0
        %v2197 = vmax.f32 %v1955, 0.0
        %v2198 = vmax.f32 %v2004, 0.0
        %v2199 = vmax.f32 %v2053, 0.0
        %v2200 = vmax.f32 %v2102, 0.0
        %v2201 = vmax.f32 %v1566, 0.0
        %v2202 = vmax.f32 %v1615, 0.0
        %v2203 = vmax.f32 %v1664, 0.0
        %v2204 = vmax.f32 %v1713, 0.0
        %v2205 = vmax.f32 %v1762, 0.0
        %v2206 = vmax.f32 %v1811, 0.0
        %v2207 = vmax.f32 %v1860, 0.0
        %v2208 = vmax.f32 %v1909, 0.0
        %v2209 = vmax.f32 %v1958, 0.0
        %v2210 = vmax.f32 %v2007, 0.0
        %v2211 = vmax.f32 %v2056, 0.0
        %v2212 = vmax.f32 %v2105, 0.0
        %v2213 = vmax.f32 %v1568, 0.0
        %v2214 = vmax.f32 %v1617, 0.0
        %v2215 = vmax.f32 %v1666, 0.0
        %v2216 = vmax.f32 %v1715, 0.0
        %v2217 = vmax.f32 %v1764, 0.0
        %v2218 = vmax.f32 %v1813, 0.0
        %v2219 = vmax.f32 %v1862, 0.0
        %v2220 = vmax.f32 %v1911, 0.0
        %v2221 = vmax.f32 %v1960, 0.0
        %v2222 = vmax.f32 %v2009, 0.0
        %v2223 = vmax.f32 %v2058, 0.0
        %v2224 = vmax.f32 %v2107, 0.0
        %v2225 = vmax.f32 %v1571, 0.0
        %v2226 = vmax.f32 %v1620, 0.0
        %v2227 = vmax.f32 %v1669, 0.0
        %v2228 = vmax.f32 %v1718, 0.0
        %v2229 = vmax.f32 %v1767, 0.0
        %v2230 = vmax.f32 %v1816, 0.0
        %v2231 = vmax.f32 %v1865, 0.0
        %v2232 = vmax.f32 %v1914, 0.0
        %v2233 = vmax.f32 %v1963, 0.0
        %v2234 = vmax.f32 %v2012, 0.0
        %v2235 = vmax.f32 %v2061, 0.0
        %v2236 = vmax.f32 %v2110, 0.0
        %v2237 = vmax.f32 %v1573, 0.0
        %v2238 = vmax.f32 %v1622, 0.0
        %v2239 = vmax.f32 %v1671, 0.0
        %v2240 = vmax.f32 %v1720, 0.0
        %v2241 = vmax.f32 %v1769, 0.0
        %v2242 = vmax.f32 %v1818, 0.0
        %v2243 = vmax.f32 %v1867, 0.0
        %v2244 = vmax.f32 %v1916, 0.0
        %v2245 = vmax.f32 %v1965, 0.0
        %v2246 = vmax.f32 %v2014, 0.0
        %v2247 = vmax.f32 %v2063, 0.0
        %v2248 = vmax.f32 %v2112, 0.0
        %v2249 = vmax.f32 %v1576, 0.0
        %v2250 = vmax.f32 %v1625, 0.0
        %v2251 = vmax.f32 %v1674, 0.0
        %v2252 = vmax.f32 %v1723, 0.0
        %v2253 = vmax.f32 %v1772, 0.0
        %v2254 = vmax.f32 %v1821, 0.0
        %v2255 = vmax.f32 %v1870, 0.0
        %v2256 = vmax.f32 %v1919, 0.0
        %v2257 = vmax.f32 %v1968, 0.0
        %v2258 = vmax.f32 %v2017, 0.0
        %v2259 = vmax.f32 %v2066, 0.0
        %v2260 = vmax.f32 %v2115, 0.0
        %v2261 = vmax.f32 %v1578, 0.0
        %v2262 = vmax.f32 %v1627, 0.0
        %v2263 = vmax.f32 %v1676, 0.0
        %v2264 = vmax.f32 %v1725, 0.0
        %v2265 = vmax.f32 %v1774, 0.0
        %v2266 = vmax.f32 %v1823, 0.0
        %v2267 = vmax.f32 %v1872, 0.0
        %v2268 = vmax.f32 %v1921, 0.0
        %v2269 = vmax.f32 %v1970, 0.0
        %v2270 = vmax.f32 %v2019, 0.0
        %v2271 = vmax.f32 %v2068, 0.0
        %v2272 = vmax.f32 %v2117, 0.0
        %v2273 = vmax.f32 %v1581, 0.0
        %v2274 = vmax.f32 %v1630, 0.0
        %v2275 = vmax.f32 %v1679, 0.0
        %v2276 = vmax.f32 %v1728, 0.0
        %v2277 = vmax.f32 %v1777, 0.0
        %v2278 = vmax.f32 %v1826, 0.0
        %v2279 = vmax.f32 %v1875, 0.0
        %v2280 = vmax.f32 %v1924, 0.0
        %v2281 = vmax.f32 %v1973, 0.0
        %v2282 = vmax.f32 %v2022, 0.0
        %v2283 = vmax.f32 %v2071, 0.0
        %v2284 = vmax.f32 %v2120, 0.0
        %v2285 = vmax.f32 %v1583, 0.0
        %v2286 = vmax.f32 %v1632, 0.0
        %v2287 = vmax.f32 %v1681, 0.0
        %v2288 = vmax.f32 %v1730, 0.0
        %v2289 = vmax.f32 %v1779, 0.0
        %v2290 = vmax.f32 %v1828, 0.0
        %v2291 = vmax.f32 %v1877, 0.0
        %v2292 = vmax.f32 %v1926, 0.0
        %v2293 = vmax.f32 %v1975, 0.0
        %v2294 = vmax.f32 %v2024, 0.0
        %v2295 = vmax.f32 %v2073, 0.0
        %v2296 = vmax.f32 %v2122, 0.0
        %v2297 = vmax.f32 %v1586, 0.0
        %v2298 = vmax.f32 %v1635, 0.0
        %v2299 = vmax.f32 %v1684, 0.0
        %v2300 = vmax.f32 %v1733, 0.0
        %v2301 = vmax.f32 %v1782, 0.0
        %v2302 = vmax.f32 %v1831, 0.0
        %v2303 = vmax.f32 %v1880, 0.0
        %v2304 = vmax.f32 %v1929, 0.0
        %v2305 = vmax.f32 %v1978, 0.0
        %v2306 = vmax.f32 %v2027, 0.0
        %v2307 = vmax.f32 %v2076, 0.0
        %v2308 = vmax.f32 %v2125, 0.0
        %v2309 = vmax.f32 %v1588, 0.0
        %v2310 = vmax.f32 %v1637, 0.0
        %v2311 = vmax.f32 %v1686, 0.0
        %v2312 = vmax.f32 %v1735, 0.0
        %v2313 = vmax.f32 %v1784, 0.0
        %v2314 = vmax.f32 %v1833, 0.0
        %v2315 = vmax.f32 %v1882, 0.0
        %v2316 = vmax.f32 %v1931, 0.0
        %v2317 = vmax.f32 %v1980, 0.0
        %v2318 = vmax.f32 %v2029, 0.0
        %v2319 = vmax.f32 %v2078, 0.0
        %v2320 = vmax.f32 %v2127, 0.0
        %v2321 = vld [vmem:[%s9] sm:$0xff]
        %v2322 = vld [vmem:[%s9 + $0x8] sm:$0xff]
        %v2323 = vld [vmem:[%s9 + $0x10] sm:$0x7f]
        %v2324 = vlaneseq
        %v2325 = vand.u32 %v2324, 127
        %v2326 = vperm.slane %v2321, 0
        %v2327 = vmul.f32 %v2129, %v2326
        %v2328 = vmul.f32 %v2141, %v2326
        %v2329 = vmul.f32 %v2153, %v2326
        %v2330 = vmul.f32 %v2165, %v2326
        %v2331 = vmul.f32 %v2177, %v2326
        %v2332 = vmul.f32 %v2189, %v2326
        %v2333 = vmul.f32 %v2201, %v2326
        %v2334 = vmul.f32 %v2213, %v2326
        %v2335 = vmul.f32 %v2225, %v2326
        %v2336 = vmul.f32 %v2237, %v2326
        %v2337 = vmul.f32 %v2249, %v2326
        %v2338 = vmul.f32 %v2261, %v2326
        %v2339 = vmul.f32 %v2273, %v2326
        %v2340 = vmul.f32 %v2285, %v2326
        %v2341 = vmul.f32 %v2297, %v2326
        %v2342 = vmul.f32 %v2309, %v2326
        %v2343 = vsel %vm668, %v2327, 0.0
        %2344 = vadd.xlane.f32.xlu0 %v2343
        %v2345 = vpop.xlane.xlu0 %2344
        %v2346 = vsel %vm668, %v2328, 0.0
        %2347 = vadd.xlane.f32.xlu0 %v2346
        %v2348 = vpop.xlane.xlu0 %2347
        %v2349 = vsel %vm668, %v2329, 0.0
        %2350 = vadd.xlane.f32.xlu0 %v2349
        %v2351 = vpop.xlane.xlu0 %2350
        %v2352 = vsel %vm668, %v2330, 0.0
        %2353 = vadd.xlane.f32.xlu0 %v2352
        %v2354 = vpop.xlane.xlu0 %2353
        %v2355 = vsel %vm668, %v2331, 0.0
        %2356 = vadd.xlane.f32.xlu0 %v2355
        %v2357 = vpop.xlane.xlu0 %2356
        %v2358 = vsel %vm668, %v2332, 0.0
        %2359 = vadd.xlane.f32.xlu0 %v2358
        %v2360 = vpop.xlane.xlu0 %2359
        %v2361 = vsel %vm668, %v2333, 0.0
        %2362 = vadd.xlane.f32.xlu0 %v2361
        %v2363 = vpop.xlane.xlu0 %2362
        %v2364 = vsel %vm668, %v2334, 0.0
        %2365 = vadd.xlane.f32.xlu0 %v2364
        %v2366 = vpop.xlane.xlu0 %2365
        %v2367 = vsel %vm668, %v2335, 0.0
        %2368 = vadd.xlane.f32.xlu0 %v2367
        %v2369 = vpop.xlane.xlu0 %2368
        %v2370 = vsel %vm668, %v2336, 0.0
        %2371 = vadd.xlane.f32.xlu0 %v2370
        %v2372 = vpop.xlane.xlu0 %2371
        %v2373 = vsel %vm668, %v2337, 0.0
        %2374 = vadd.xlane.f32.xlu0 %v2373
        %v2375 = vpop.xlane.xlu0 %2374
        %v2376 = vsel %vm668, %v2338, 0.0
        %2377 = vadd.xlane.f32.xlu0 %v2376
        %v2378 = vpop.xlane.xlu0 %2377
        %v2379 = vsel %vm668, %v2339, 0.0
        %2380 = vadd.xlane.f32.xlu0 %v2379
        %v2381 = vpop.xlane.xlu0 %2380
        %v2382 = vsel %vm668, %v2340, 0.0
        %2383 = vadd.xlane.f32.xlu0 %v2382
        %v2384 = vpop.xlane.xlu0 %2383
        %v2385 = vsel %vm668, %v2341, 0.0
        %2386 = vadd.xlane.f32.xlu0 %v2385
        %v2387 = vpop.xlane.xlu0 %2386
        %v2388 = vsel %vm668, %v2342, 0.0
        %2389 = vadd.xlane.f32.xlu0 %v2388
        %v2390 = vpop.xlane.xlu0 %2389
        %vm2391 = vcmp.eq.s32.totalorder %v2325, 0
        %v2392 = vsel %vm2391, %v2345, 0.0
        %v2393 = vsel %vm2391, %v2348, 0.0
        %v2394 = vsel %vm2391, %v2351, 0.0
        %v2395 = vsel %vm2391, %v2354, 0.0
        %v2396 = vsel %vm2391, %v2357, 0.0
        %v2397 = vsel %vm2391, %v2360, 0.0
        %v2398 = vsel %vm2391, %v2363, 0.0
        %v2399 = vsel %vm2391, %v2366, 0.0
        %v2400 = vsel %vm2391, %v2369, 0.0
        %v2401 = vsel %vm2391, %v2372, 0.0
        %v2402 = vsel %vm2391, %v2375, 0.0
        %v2403 = vsel %vm2391, %v2378, 0.0
        %v2404 = vsel %vm2391, %v2381, 0.0
        %v2405 = vsel %vm2391, %v2384, 0.0
        %v2406 = vsel %vm2391, %v2387, 0.0
        %v2407 = vsel %vm2391, %v2390, 0.0
        %v2408 = vadd.f32 %v2392, 0.0
        %v2409 = vadd.f32 %v2393, 0.0
        %v2410 = vadd.f32 %v2394, 0.0
        %v2411 = vadd.f32 %v2395, 0.0
        %v2412 = vadd.f32 %v2396, 0.0
        %v2413 = vadd.f32 %v2397, 0.0
        %v2414 = vadd.f32 %v2398, 0.0
        %v2415 = vadd.f32 %v2399, 0.0
        %v2416 = vadd.f32 %v2400, 0.0
        %v2417 = vadd.f32 %v2401, 0.0
        %v2418 = vadd.f32 %v2402, 0.0
        %v2419 = vadd.f32 %v2403, 0.0
        %v2420 = vadd.f32 %v2404, 0.0
        %v2421 = vadd.f32 %v2405, 0.0
        %v2422 = vadd.f32 %v2406, 0.0
        %v2423 = vadd.f32 %v2407, 0.0
        %v2424 = vperm.slane %v2321, 1
        %2426 = vrot.lane.b32.xlu0 %v2424, 64
        %v2427 = vpop.permute.xlu0 %2426
        %v2429 = vmul.f32 %v2129, %v2427
        %v2430 = vmul.f32 %v2141, %v2427
        %v2431 = vmul.f32 %v2153, %v2427
        %v2432 = vmul.f32 %v2165, %v2427
        %v2433 = vmul.f32 %v2177, %v2427
        %v2434 = vmul.f32 %v2189, %v2427
        %v2435 = vmul.f32 %v2201, %v2427
        %v2436 = vmul.f32 %v2213, %v2427
        %v2437 = vmul.f32 %v2225, %v2427
        %v2438 = vmul.f32 %v2237, %v2427
        %v2439 = vmul.f32 %v2249, %v2427
        %v2440 = vmul.f32 %v2261, %v2427
        %v2441 = vmul.f32 %v2273, %v2427
        %v2442 = vmul.f32 %v2285, %v2427
        %v2443 = vmul.f32 %v2297, %v2427
        %v2444 = vmul.f32 %v2309, %v2427
        %2461 = vrot.lane.b32.xlu0 %v2429, 64
        %v2462 = vpop.permute.xlu0 %2461
        %2463 = vrot.lane.b32.xlu0 %v2430, 64
        %v2464 = vpop.permute.xlu0 %2463
        %2465 = vrot.lane.b32.xlu0 %v2431, 64
        %v2466 = vpop.permute.xlu0 %2465
        %2467 = vrot.lane.b32.xlu0 %v2432, 64
        %v2468 = vpop.permute.xlu0 %2467
        %2469 = vrot.lane.b32.xlu0 %v2433, 64
        %v2470 = vpop.permute.xlu0 %2469
        %2471 = vrot.lane.b32.xlu0 %v2434, 64
        %v2472 = vpop.permute.xlu0 %2471
        %2473 = vrot.lane.b32.xlu0 %v2435, 64
        %v2474 = vpop.permute.xlu0 %2473
        %2475 = vrot.lane.b32.xlu0 %v2436, 64
        %v2476 = vpop.permute.xlu0 %2475
        %2477 = vrot.lane.b32.xlu0 %v2437, 64
        %v2478 = vpop.permute.xlu0 %2477
        %2479 = vrot.lane.b32.xlu0 %v2438, 64
        %v2480 = vpop.permute.xlu0 %2479
        %2481 = vrot.lane.b32.xlu0 %v2439, 64
        %v2482 = vpop.permute.xlu0 %2481
        %2483 = vrot.lane.b32.xlu0 %v2440, 64
        %v2484 = vpop.permute.xlu0 %2483
        %2485 = vrot.lane.b32.xlu0 %v2441, 64
        %v2486 = vpop.permute.xlu0 %2485
        %2487 = vrot.lane.b32.xlu0 %v2442, 64
        %v2488 = vpop.permute.xlu0 %2487
        %2489 = vrot.lane.b32.xlu0 %v2443, 64
        %v2490 = vpop.permute.xlu0 %2489
        %2491 = vrot.lane.b32.xlu0 %v2444, 64
        %v2492 = vpop.permute.xlu0 %2491
        %v2509 = vsel %vm668, %v2462, 0.0
        %2510 = vadd.xlane.f32.xlu0 %v2509
        %v2511 = vpop.xlane.xlu0 %2510
        %v2512 = vsel %vm668, %v2464, 0.0
        %2513 = vadd.xlane.f32.xlu0 %v2512
        %v2514 = vpop.xlane.xlu0 %2513
        %v2515 = vsel %vm668, %v2466, 0.0
        %2516 = vadd.xlane.f32.xlu0 %v2515
        %v2517 = vpop.xlane.xlu0 %2516
        %v2518 = vsel %vm668, %v2468, 0.0
        %2519 = vadd.xlane.f32.xlu0 %v2518
        %v2520 = vpop.xlane.xlu0 %2519
        %v2521 = vsel %vm668, %v2470, 0.0
        %2522 = vadd.xlane.f32.xlu0 %v2521
        %v2523 = vpop.xlane.xlu0 %2522
        %v2524 = vsel %vm668, %v2472, 0.0
        %2525 = vadd.xlane.f32.xlu0 %v2524
        %v2526 = vpop.xlane.xlu0 %2525
        %v2527 = vsel %vm668, %v2474, 0.0
        %2528 = vadd.xlane.f32.xlu0 %v2527
        %v2529 = vpop.xlane.xlu0 %2528
        %v2530 = vsel %vm668, %v2476, 0.0
        %2531 = vadd.xlane.f32.xlu0 %v2530
        %v2532 = vpop.xlane.xlu0 %2531
        %v2533 = vsel %vm668, %v2478, 0.0
        %2534 = vadd.xlane.f32.xlu0 %v2533
        %v2535 = vpop.xlane.xlu0 %2534
        %v2536 = vsel %vm668, %v2480, 0.0
        %2537 = vadd.xlane.f32.xlu0 %v2536
        %v2538 = vpop.xlane.xlu0 %2537
        %v2539 = vsel %vm668, %v2482, 0.0
        %2540 = vadd.xlane.f32.xlu0 %v2539
        %v2541 = vpop.xlane.xlu0 %2540
        %v2542 = vsel %vm668, %v2484, 0.0
        %2543 = vadd.xlane.f32.xlu0 %v2542
        %v2544 = vpop.xlane.xlu0 %2543
        %v2545 = vsel %vm668, %v2486, 0.0
        %2546 = vadd.xlane.f32.xlu0 %v2545
        %v2547 = vpop.xlane.xlu0 %2546
        %v2548 = vsel %vm668, %v2488, 0.0
        %2549 = vadd.xlane.f32.xlu0 %v2548
        %v2550 = vpop.xlane.xlu0 %2549
        %v2551 = vsel %vm668, %v2490, 0.0
        %2552 = vadd.xlane.f32.xlu0 %v2551
        %v2553 = vpop.xlane.xlu0 %2552
        %v2554 = vsel %vm668, %v2492, 0.0
        %2555 = vadd.xlane.f32.xlu0 %v2554
        %v2556 = vpop.xlane.xlu0 %2555
        %vm2557 = vcmp.eq.s32.totalorder %v2325, 1
        %v2558 = vsel %vm2557, %v2511, 0.0
        %v2559 = vsel %vm2557, %v2514, 0.0
        %v2560 = vsel %vm2557, %v2517, 0.0
        %v2561 = vsel %vm2557, %v2520, 0.0
        %v2562 = vsel %vm2557, %v2523, 0.0
        %v2563 = vsel %vm2557, %v2526, 0.0
        %v2564 = vsel %vm2557, %v2529, 0.0
        %v2565 = vsel %vm2557, %v2532, 0.0
        %v2566 = vsel %vm2557, %v2535, 0.0
        %v2567 = vsel %vm2557, %v2538, 0.0
        %v2568 = vsel %vm2557, %v2541, 0.0
        %v2569 = vsel %vm2557, %v2544, 0.0
        %v2570 = vsel %vm2557, %v2547, 0.0
        %v2571 = vsel %vm2557, %v2550, 0.0
        %v2572 = vsel %vm2557, %v2553, 0.0
        %v2573 = vsel %vm2557, %v2556, 0.0
        %v2574 = vadd.f32 %v2408, %v2558
        %v2575 = vadd.f32 %v2409, %v2559
        %v2576 = vadd.f32 %v2410, %v2560
        %v2577 = vadd.f32 %v2411, %v2561
        %v2578 = vadd.f32 %v2412, %v2562
        %v2579 = vadd.f32 %v2413, %v2563
        %v2580 = vadd.f32 %v2414, %v2564
        %v2581 = vadd.f32 %v2415, %v2565
        %v2582 = vadd.f32 %v2416, %v2566
        %v2583 = vadd.f32 %v2417, %v2567
        %v2584 = vadd.f32 %v2418, %v2568
        %v2585 = vadd.f32 %v2419, %v2569
        %v2586 = vadd.f32 %v2420, %v2570
        %v2587 = vadd.f32 %v2421, %v2571
        %v2588 = vadd.f32 %v2422, %v2572
        %v2589 = vadd.f32 %v2423, %v2573
        %v2590 = vperm.slane %v2321, 2
        %v2591 = vmul.f32 %v2130, %v2590
        %v2592 = vmul.f32 %v2142, %v2590
        %v2593 = vmul.f32 %v2154, %v2590
        %v2594 = vmul.f32 %v2166, %v2590
        %v2595 = vmul.f32 %v2178, %v2590
        %v2596 = vmul.f32 %v2190, %v2590
        %v2597 = vmul.f32 %v2202, %v2590
        %v2598 = vmul.f32 %v2214, %v2590
        %v2599 = vmul.f32 %v2226, %v2590
        %v2600 = vmul.f32 %v2238, %v2590
        %v2601 = vmul.f32 %v2250, %v2590
        %v2602 = vmul.f32 %v2262, %v2590
        %v2603 = vmul.f32 %v2274, %v2590
        %v2604 = vmul.f32 %v2286, %v2590
        %v2605 = vmul.f32 %v2298, %v2590
        %v2606 = vmul.f32 %v2310, %v2590
        %v2607 = vsel %vm668, %v2591, 0.0
        %2608 = vadd.xlane.f32.xlu0 %v2607
        %v2609 = vpop.xlane.xlu0 %2608
        %v2610 = vsel %vm668, %v2592, 0.0
        %2611 = vadd.xlane.f32.xlu0 %v2610
        %v2612 = vpop.xlane.xlu0 %2611
        %v2613 = vsel %vm668, %v2593, 0.0
        %2614 = vadd.xlane.f32.xlu0 %v2613
        %v2615 = vpop.xlane.xlu0 %2614
        %v2616 = vsel %vm668, %v2594, 0.0
        %2617 = vadd.xlane.f32.xlu0 %v2616
        %v2618 = vpop.xlane.xlu0 %2617
        %v2619 = vsel %vm668, %v2595, 0.0
        %2620 = vadd.xlane.f32.xlu0 %v2619
        %v2621 = vpop.xlane.xlu0 %2620
        %v2622 = vsel %vm668, %v2596, 0.0
        %2623 = vadd.xlane.f32.xlu0 %v2622
        %v2624 = vpop.xlane.xlu0 %2623
        %v2625 = vsel %vm668, %v2597, 0.0
        %2626 = vadd.xlane.f32.xlu0 %v2625
        %v2627 = vpop.xlane.xlu0 %2626
        %v2628 = vsel %vm668, %v2598, 0.0
        %2629 = vadd.xlane.f32.xlu0 %v2628
        %v2630 = vpop.xlane.xlu0 %2629
        %v2631 = vsel %vm668, %v2599, 0.0
        %2632 = vadd.xlane.f32.xlu0 %v2631
        %v2633 = vpop.xlane.xlu0 %2632
        %v2634 = vsel %vm668, %v2600, 0.0
        %2635 = vadd.xlane.f32.xlu0 %v2634
        %v2636 = vpop.xlane.xlu0 %2635
        %v2637 = vsel %vm668, %v2601, 0.0
        %2638 = vadd.xlane.f32.xlu0 %v2637
        %v2639 = vpop.xlane.xlu0 %2638
        %v2640 = vsel %vm668, %v2602, 0.0
        %2641 = vadd.xlane.f32.xlu0 %v2640
        %v2642 = vpop.xlane.xlu0 %2641
        %v2643 = vsel %vm668, %v2603, 0.0
        %2644 = vadd.xlane.f32.xlu0 %v2643
        %v2645 = vpop.xlane.xlu0 %2644
        %v2646 = vsel %vm668, %v2604, 0.0
        %2647 = vadd.xlane.f32.xlu0 %v2646
        %v2648 = vpop.xlane.xlu0 %2647
        %v2649 = vsel %vm668, %v2605, 0.0
        %2650 = vadd.xlane.f32.xlu0 %v2649
        %v2651 = vpop.xlane.xlu0 %2650
        %v2652 = vsel %vm668, %v2606, 0.0
        %2653 = vadd.xlane.f32.xlu0 %v2652
        %v2654 = vpop.xlane.xlu0 %2653
        %vm2655 = vcmp.eq.s32.totalorder %v2325, 2
        %v2656 = vsel %vm2655, %v2609, 0.0
        %v2657 = vsel %vm2655, %v2612, 0.0
        %v2658 = vsel %vm2655, %v2615, 0.0
        %v2659 = vsel %vm2655, %v2618, 0.0
        %v2660 = vsel %vm2655, %v2621, 0.0
        %v2661 = vsel %vm2655, %v2624, 0.0
        %v2662 = vsel %vm2655, %v2627, 0.0
        %v2663 = vsel %vm2655, %v2630, 0.0
        %v2664 = vsel %vm2655, %v2633, 0.0
        %v2665 = vsel %vm2655, %v2636, 0.0
        %v2666 = vsel %vm2655, %v2639, 0.0
        %v2667 = vsel %vm2655, %v2642, 0.0
        %v2668 = vsel %vm2655, %v2645, 0.0
        %v2669 = vsel %vm2655, %v2648, 0.0
        %v2670 = vsel %vm2655, %v2651, 0.0
        %v2671 = vsel %vm2655, %v2654, 0.0
        %v2672 = vadd.f32 %v2574, %v2656
        %v2673 = vadd.f32 %v2575, %v2657
        %v2674 = vadd.f32 %v2576, %v2658
        %v2675 = vadd.f32 %v2577, %v2659
        %v2676 = vadd.f32 %v2578, %v2660
        %v2677 = vadd.f32 %v2579, %v2661
        %v2678 = vadd.f32 %v2580, %v2662
        %v2679 = vadd.f32 %v2581, %v2663
        %v2680 = vadd.f32 %v2582, %v2664
        %v2681 = vadd.f32 %v2583, %v2665
        %v2682 = vadd.f32 %v2584, %v2666
        %v2683 = vadd.f32 %v2585, %v2667
        %v2684 = vadd.f32 %v2586, %v2668
        %v2685 = vadd.f32 %v2587, %v2669
        %v2686 = vadd.f32 %v2588, %v2670
        %v2687 = vadd.f32 %v2589, %v2671
        %v2688 = vperm.slane %v2321, 3
        %2690 = vrot.lane.b32.xlu0 %v2688, 64
        %v2691 = vpop.permute.xlu0 %2690
        %v2693 = vmul.f32 %v2130, %v2691
        %v2694 = vmul.f32 %v2142, %v2691
        %v2695 = vmul.f32 %v2154, %v2691
        %v2696 = vmul.f32 %v2166, %v2691
        %v2697 = vmul.f32 %v2178, %v2691
        %v2698 = vmul.f32 %v2190, %v2691
        %v2699 = vmul.f32 %v2202, %v2691
        %v2700 = vmul.f32 %v2214, %v2691
        %v2701 = vmul.f32 %v2226, %v2691
        %v2702 = vmul.f32 %v2238, %v2691
        %v2703 = vmul.f32 %v2250, %v2691
        %v2704 = vmul.f32 %v2262, %v2691
        %v2705 = vmul.f32 %v2274, %v2691
        %v2706 = vmul.f32 %v2286, %v2691
        %v2707 = vmul.f32 %v2298, %v2691
        %v2708 = vmul.f32 %v2310, %v2691
        %2725 = vrot.lane.b32.xlu0 %v2693, 64
        %v2726 = vpop.permute.xlu0 %2725
        %2727 = vrot.lane.b32.xlu0 %v2694, 64
        %v2728 = vpop.permute.xlu0 %2727
        %2729 = vrot.lane.b32.xlu0 %v2695, 64
        %v2730 = vpop.permute.xlu0 %2729
        %2731 = vrot.lane.b32.xlu0 %v2696, 64
        %v2732 = vpop.permute.xlu0 %2731
        %2733 = vrot.lane.b32.xlu0 %v2697, 64
        %v2734 = vpop.permute.xlu0 %2733
        %2735 = vrot.lane.b32.xlu0 %v2698, 64
        %v2736 = vpop.permute.xlu0 %2735
        %2737 = vrot.lane.b32.xlu0 %v2699, 64
        %v2738 = vpop.permute.xlu0 %2737
        %2739 = vrot.lane.b32.xlu0 %v2700, 64
        %v2740 = vpop.permute.xlu0 %2739
        %2741 = vrot.lane.b32.xlu0 %v2701, 64
        %v2742 = vpop.permute.xlu0 %2741
        %2743 = vrot.lane.b32.xlu0 %v2702, 64
        %v2744 = vpop.permute.xlu0 %2743
        %2745 = vrot.lane.b32.xlu0 %v2703, 64
        %v2746 = vpop.permute.xlu0 %2745
        %2747 = vrot.lane.b32.xlu0 %v2704, 64
        %v2748 = vpop.permute.xlu0 %2747
        %2749 = vrot.lane.b32.xlu0 %v2705, 64
        %v2750 = vpop.permute.xlu0 %2749
        %2751 = vrot.lane.b32.xlu0 %v2706, 64
        %v2752 = vpop.permute.xlu0 %2751
        %2753 = vrot.lane.b32.xlu0 %v2707, 64
        %v2754 = vpop.permute.xlu0 %2753
        %2755 = vrot.lane.b32.xlu0 %v2708, 64
        %v2756 = vpop.permute.xlu0 %2755
        %v2773 = vsel %vm668, %v2726, 0.0
        %2774 = vadd.xlane.f32.xlu0 %v2773
        %v2775 = vpop.xlane.xlu0 %2774
        %v2776 = vsel %vm668, %v2728, 0.0
        %2777 = vadd.xlane.f32.xlu0 %v2776
        %v2778 = vpop.xlane.xlu0 %2777
        %v2779 = vsel %vm668, %v2730, 0.0
        %2780 = vadd.xlane.f32.xlu0 %v2779
        %v2781 = vpop.xlane.xlu0 %2780
        %v2782 = vsel %vm668, %v2732, 0.0
        %2783 = vadd.xlane.f32.xlu0 %v2782
        %v2784 = vpop.xlane.xlu0 %2783
        %v2785 = vsel %vm668, %v2734, 0.0
        %2786 = vadd.xlane.f32.xlu0 %v2785
        %v2787 = vpop.xlane.xlu0 %2786
        %v2788 = vsel %vm668, %v2736, 0.0
        %2789 = vadd.xlane.f32.xlu0 %v2788
        %v2790 = vpop.xlane.xlu0 %2789
        %v2791 = vsel %vm668, %v2738, 0.0
        %2792 = vadd.xlane.f32.xlu0 %v2791
        %v2793 = vpop.xlane.xlu0 %2792
        %v2794 = vsel %vm668, %v2740, 0.0
        %2795 = vadd.xlane.f32.xlu0 %v2794
        %v2796 = vpop.xlane.xlu0 %2795
        %v2797 = vsel %vm668, %v2742, 0.0
        %2798 = vadd.xlane.f32.xlu0 %v2797
        %v2799 = vpop.xlane.xlu0 %2798
        %v2800 = vsel %vm668, %v2744, 0.0
        %2801 = vadd.xlane.f32.xlu0 %v2800
        %v2802 = vpop.xlane.xlu0 %2801
        %v2803 = vsel %vm668, %v2746, 0.0
        %2804 = vadd.xlane.f32.xlu0 %v2803
        %v2805 = vpop.xlane.xlu0 %2804
        %v2806 = vsel %vm668, %v2748, 0.0
        %2807 = vadd.xlane.f32.xlu0 %v2806
        %v2808 = vpop.xlane.xlu0 %2807
        %v2809 = vsel %vm668, %v2750, 0.0
        %2810 = vadd.xlane.f32.xlu0 %v2809
        %v2811 = vpop.xlane.xlu0 %2810
        %v2812 = vsel %vm668, %v2752, 0.0
        %2813 = vadd.xlane.f32.xlu0 %v2812
        %v2814 = vpop.xlane.xlu0 %2813
        %v2815 = vsel %vm668, %v2754, 0.0
        %2816 = vadd.xlane.f32.xlu0 %v2815
        %v2817 = vpop.xlane.xlu0 %2816
        %v2818 = vsel %vm668, %v2756, 0.0
        %2819 = vadd.xlane.f32.xlu0 %v2818
        %v2820 = vpop.xlane.xlu0 %2819
        %vm2821 = vcmp.eq.s32.totalorder %v2325, 3
        %v2822 = vsel %vm2821, %v2775, 0.0
        %v2823 = vsel %vm2821, %v2778, 0.0
        %v2824 = vsel %vm2821, %v2781, 0.0
        %v2825 = vsel %vm2821, %v2784, 0.0
        %v2826 = vsel %vm2821, %v2787, 0.0
        %v2827 = vsel %vm2821, %v2790, 0.0
        %v2828 = vsel %vm2821, %v2793, 0.0
        %v2829 = vsel %vm2821, %v2796, 0.0
        %v2830 = vsel %vm2821, %v2799, 0.0
        %v2831 = vsel %vm2821, %v2802, 0.0
        %v2832 = vsel %vm2821, %v2805, 0.0
        %v2833 = vsel %vm2821, %v2808, 0.0
        %v2834 = vsel %vm2821, %v2811, 0.0
        %v2835 = vsel %vm2821, %v2814, 0.0
        %v2836 = vsel %vm2821, %v2817, 0.0
        %v2837 = vsel %vm2821, %v2820, 0.0
        %v2838 = vadd.f32 %v2672, %v2822
        %v2839 = vadd.f32 %v2673, %v2823
        %v2840 = vadd.f32 %v2674, %v2824
        %v2841 = vadd.f32 %v2675, %v2825
        %v2842 = vadd.f32 %v2676, %v2826
        %v2843 = vadd.f32 %v2677, %v2827
        %v2844 = vadd.f32 %v2678, %v2828
        %v2845 = vadd.f32 %v2679, %v2829
        %v2846 = vadd.f32 %v2680, %v2830
        %v2847 = vadd.f32 %v2681, %v2831
        %v2848 = vadd.f32 %v2682, %v2832
        %v2849 = vadd.f32 %v2683, %v2833
        %v2850 = vadd.f32 %v2684, %v2834
        %v2851 = vadd.f32 %v2685, %v2835
        %v2852 = vadd.f32 %v2686, %v2836
        %v2853 = vadd.f32 %v2687, %v2837
        %v2854 = vperm.slane %v2321, 4
        %v2855 = vmul.f32 %v2131, %v2854
        %v2856 = vmul.f32 %v2143, %v2854
        %v2857 = vmul.f32 %v2155, %v2854
        %v2858 = vmul.f32 %v2167, %v2854
        %v2859 = vmul.f32 %v2179, %v2854
        %v2860 = vmul.f32 %v2191, %v2854
        %v2861 = vmul.f32 %v2203, %v2854
        %v2862 = vmul.f32 %v2215, %v2854
        %v2863 = vmul.f32 %v2227, %v2854
        %v2864 = vmul.f32 %v2239, %v2854
        %v2865 = vmul.f32 %v2251, %v2854
        %v2866 = vmul.f32 %v2263, %v2854
        %v2867 = vmul.f32 %v2275, %v2854
        %v2868 = vmul.f32 %v2287, %v2854
        %v2869 = vmul.f32 %v2299, %v2854
        %v2870 = vmul.f32 %v2311, %v2854
        %v2871 = vsel %vm668, %v2855, 0.0
        %2872 = vadd.xlane.f32.xlu0 %v2871
        %v2873 = vpop.xlane.xlu0 %2872
        %v2874 = vsel %vm668, %v2856, 0.0
        %2875 = vadd.xlane.f32.xlu0 %v2874
        %v2876 = vpop.xlane.xlu0 %2875
        %v2877 = vsel %vm668, %v2857, 0.0
        %2878 = vadd.xlane.f32.xlu0 %v2877
        %v2879 = vpop.xlane.xlu0 %2878
        %v2880 = vsel %vm668, %v2858, 0.0
        %2881 = vadd.xlane.f32.xlu0 %v2880
        %v2882 = vpop.xlane.xlu0 %2881
        %v2883 = vsel %vm668, %v2859, 0.0
        %2884 = vadd.xlane.f32.xlu0 %v2883
        %v2885 = vpop.xlane.xlu0 %2884
        %v2886 = vsel %vm668, %v2860, 0.0
        %2887 = vadd.xlane.f32.xlu0 %v2886
        %v2888 = vpop.xlane.xlu0 %2887
        %v2889 = vsel %vm668, %v2861, 0.0
        %2890 = vadd.xlane.f32.xlu0 %v2889
        %v2891 = vpop.xlane.xlu0 %2890
        %v2892 = vsel %vm668, %v2862, 0.0
        %2893 = vadd.xlane.f32.xlu0 %v2892
        %v2894 = vpop.xlane.xlu0 %2893
        %v2895 = vsel %vm668, %v2863, 0.0
        %2896 = vadd.xlane.f32.xlu0 %v2895
        %v2897 = vpop.xlane.xlu0 %2896
        %v2898 = vsel %vm668, %v2864, 0.0
        %2899 = vadd.xlane.f32.xlu0 %v2898
        %v2900 = vpop.xlane.xlu0 %2899
        %v2901 = vsel %vm668, %v2865, 0.0
        %2902 = vadd.xlane.f32.xlu0 %v2901
        %v2903 = vpop.xlane.xlu0 %2902
        %v2904 = vsel %vm668, %v2866, 0.0
        %2905 = vadd.xlane.f32.xlu0 %v2904
        %v2906 = vpop.xlane.xlu0 %2905
        %v2907 = vsel %vm668, %v2867, 0.0
        %2908 = vadd.xlane.f32.xlu0 %v2907
        %v2909 = vpop.xlane.xlu0 %2908
        %v2910 = vsel %vm668, %v2868, 0.0
        %2911 = vadd.xlane.f32.xlu0 %v2910
        %v2912 = vpop.xlane.xlu0 %2911
        %v2913 = vsel %vm668, %v2869, 0.0
        %2914 = vadd.xlane.f32.xlu0 %v2913
        %v2915 = vpop.xlane.xlu0 %2914
        %v2916 = vsel %vm668, %v2870, 0.0
        %2917 = vadd.xlane.f32.xlu0 %v2916
        %v2918 = vpop.xlane.xlu0 %2917
        %vm2919 = vcmp.eq.s32.totalorder %v2325, 4
        %v2920 = vsel %vm2919, %v2873, 0.0
        %v2921 = vsel %vm2919, %v2876, 0.0
        %v2922 = vsel %vm2919, %v2879, 0.0
        %v2923 = vsel %vm2919, %v2882, 0.0
        %v2924 = vsel %vm2919, %v2885, 0.0
        %v2925 = vsel %vm2919, %v2888, 0.0
        %v2926 = vsel %vm2919, %v2891, 0.0
        %v2927 = vsel %vm2919, %v2894, 0.0
        %v2928 = vsel %vm2919, %v2897, 0.0
        %v2929 = vsel %vm2919, %v2900, 0.0
        %v2930 = vsel %vm2919, %v2903, 0.0
        %v2931 = vsel %vm2919, %v2906, 0.0
        %v2932 = vsel %vm2919, %v2909, 0.0
        %v2933 = vsel %vm2919, %v2912, 0.0
        %v2934 = vsel %vm2919, %v2915, 0.0
        %v2935 = vsel %vm2919, %v2918, 0.0
        %v2936 = vadd.f32 %v2838, %v2920
        %v2937 = vadd.f32 %v2839, %v2921
        %v2938 = vadd.f32 %v2840, %v2922
        %v2939 = vadd.f32 %v2841, %v2923
        %v2940 = vadd.f32 %v2842, %v2924
        %v2941 = vadd.f32 %v2843, %v2925
        %v2942 = vadd.f32 %v2844, %v2926
        %v2943 = vadd.f32 %v2845, %v2927
        %v2944 = vadd.f32 %v2846, %v2928
        %v2945 = vadd.f32 %v2847, %v2929
        %v2946 = vadd.f32 %v2848, %v2930
        %v2947 = vadd.f32 %v2849, %v2931
        %v2948 = vadd.f32 %v2850, %v2932
        %v2949 = vadd.f32 %v2851, %v2933
        %v2950 = vadd.f32 %v2852, %v2934
        %v2951 = vadd.f32 %v2853, %v2935
        %v2952 = vperm.slane %v2321, 5
        %2954 = vrot.lane.b32.xlu0 %v2952, 64
        %v2955 = vpop.permute.xlu0 %2954
        %v2957 = vmul.f32 %v2131, %v2955
        %v2958 = vmul.f32 %v2143, %v2955
        %v2959 = vmul.f32 %v2155, %v2955
        %v2960 = vmul.f32 %v2167, %v2955
        %v2961 = vmul.f32 %v2179, %v2955
        %v2962 = vmul.f32 %v2191, %v2955
        %v2963 = vmul.f32 %v2203, %v2955
        %v2964 = vmul.f32 %v2215, %v2955
        %v2965 = vmul.f32 %v2227, %v2955
        %v2966 = vmul.f32 %v2239, %v2955
        %v2967 = vmul.f32 %v2251, %v2955
        %v2968 = vmul.f32 %v2263, %v2955
        %v2969 = vmul.f32 %v2275, %v2955
        %v2970 = vmul.f32 %v2287, %v2955
        %v2971 = vmul.f32 %v2299, %v2955
        %v2972 = vmul.f32 %v2311, %v2955
        %2989 = vrot.lane.b32.xlu0 %v2957, 64
        %v2990 = vpop.permute.xlu0 %2989
        %2991 = vrot.lane.b32.xlu0 %v2958, 64
        %v2992 = vpop.permute.xlu0 %2991
        %2993 = vrot.lane.b32.xlu0 %v2959, 64
        %v2994 = vpop.permute.xlu0 %2993
        %2995 = vrot.lane.b32.xlu0 %v2960, 64
        %v2996 = vpop.permute.xlu0 %2995
        %2997 = vrot.lane.b32.xlu0 %v2961, 64
        %v2998 = vpop.permute.xlu0 %2997
        %2999 = vrot.lane.b32.xlu0 %v2962, 64
        %v3000 = vpop.permute.xlu0 %2999
        %3001 = vrot.lane.b32.xlu0 %v2963, 64
        %v3002 = vpop.permute.xlu0 %3001
        %3003 = vrot.lane.b32.xlu0 %v2964, 64
        %v3004 = vpop.permute.xlu0 %3003
        %3005 = vrot.lane.b32.xlu0 %v2965, 64
        %v3006 = vpop.permute.xlu0 %3005
        %3007 = vrot.lane.b32.xlu0 %v2966, 64
        %v3008 = vpop.permute.xlu0 %3007
        %3009 = vrot.lane.b32.xlu0 %v2967, 64
        %v3010 = vpop.permute.xlu0 %3009
        %3011 = vrot.lane.b32.xlu0 %v2968, 64
        %v3012 = vpop.permute.xlu0 %3011
        %3013 = vrot.lane.b32.xlu0 %v2969, 64
        %v3014 = vpop.permute.xlu0 %3013
        %3015 = vrot.lane.b32.xlu0 %v2970, 64
        %v3016 = vpop.permute.xlu0 %3015
        %3017 = vrot.lane.b32.xlu0 %v2971, 64
        %v3018 = vpop.permute.xlu0 %3017
        %3019 = vrot.lane.b32.xlu0 %v2972, 64
        %v3020 = vpop.permute.xlu0 %3019
        %v3037 = vsel %vm668, %v2990, 0.0
        %3038 = vadd.xlane.f32.xlu0 %v3037
        %v3039 = vpop.xlane.xlu0 %3038
        %v3040 = vsel %vm668, %v2992, 0.0
        %3041 = vadd.xlane.f32.xlu0 %v3040
        %v3042 = vpop.xlane.xlu0 %3041
        %v3043 = vsel %vm668, %v2994, 0.0
        %3044 = vadd.xlane.f32.xlu0 %v3043
        %v3045 = vpop.xlane.xlu0 %3044
        %v3046 = vsel %vm668, %v2996, 0.0
        %3047 = vadd.xlane.f32.xlu0 %v3046
        %v3048 = vpop.xlane.xlu0 %3047
        %v3049 = vsel %vm668, %v2998, 0.0
        %3050 = vadd.xlane.f32.xlu0 %v3049
        %v3051 = vpop.xlane.xlu0 %3050
        %v3052 = vsel %vm668, %v3000, 0.0
        %3053 = vadd.xlane.f32.xlu0 %v3052
        %v3054 = vpop.xlane.xlu0 %3053
        %v3055 = vsel %vm668, %v3002, 0.0
        %3056 = vadd.xlane.f32.xlu0 %v3055
        %v3057 = vpop.xlane.xlu0 %3056
        %v3058 = vsel %vm668, %v3004, 0.0
        %3059 = vadd.xlane.f32.xlu0 %v3058
        %v3060 = vpop.xlane.xlu0 %3059
        %v3061 = vsel %vm668, %v3006, 0.0
        %3062 = vadd.xlane.f32.xlu0 %v3061
        %v3063 = vpop.xlane.xlu0 %3062
        %v3064 = vsel %vm668, %v3008, 0.0
        %3065 = vadd.xlane.f32.xlu0 %v3064
        %v3066 = vpop.xlane.xlu0 %3065
        %v3067 = vsel %vm668, %v3010, 0.0
        %3068 = vadd.xlane.f32.xlu0 %v3067
        %v3069 = vpop.xlane.xlu0 %3068
        %v3070 = vsel %vm668, %v3012, 0.0
        %3071 = vadd.xlane.f32.xlu0 %v3070
        %v3072 = vpop.xlane.xlu0 %3071
        %v3073 = vsel %vm668, %v3014, 0.0
        %3074 = vadd.xlane.f32.xlu0 %v3073
        %v3075 = vpop.xlane.xlu0 %3074
        %v3076 = vsel %vm668, %v3016, 0.0
        %3077 = vadd.xlane.f32.xlu0 %v3076
        %v3078 = vpop.xlane.xlu0 %3077
        %v3079 = vsel %vm668, %v3018, 0.0
        %3080 = vadd.xlane.f32.xlu0 %v3079
        %v3081 = vpop.xlane.xlu0 %3080
        %v3082 = vsel %vm668, %v3020, 0.0
        %3083 = vadd.xlane.f32.xlu0 %v3082
        %v3084 = vpop.xlane.xlu0 %3083
        %vm3085 = vcmp.eq.s32.totalorder %v2325, 5
        %v3086 = vsel %vm3085, %v3039, 0.0
        %v3087 = vsel %vm3085, %v3042, 0.0
        %v3088 = vsel %vm3085, %v3045, 0.0
        %v3089 = vsel %vm3085, %v3048, 0.0
        %v3090 = vsel %vm3085, %v3051, 0.0
        %v3091 = vsel %vm3085, %v3054, 0.0
        %v3092 = vsel %vm3085, %v3057, 0.0
        %v3093 = vsel %vm3085, %v3060, 0.0
        %v3094 = vsel %vm3085, %v3063, 0.0
        %v3095 = vsel %vm3085, %v3066, 0.0
        %v3096 = vsel %vm3085, %v3069, 0.0
        %v3097 = vsel %vm3085, %v3072, 0.0
        %v3098 = vsel %vm3085, %v3075, 0.0
        %v3099 = vsel %vm3085, %v3078, 0.0
        %v3100 = vsel %vm3085, %v3081, 0.0
        %v3101 = vsel %vm3085, %v3084, 0.0
        %v3102 = vadd.f32 %v2936, %v3086
        %v3103 = vadd.f32 %v2937, %v3087
        %v3104 = vadd.f32 %v2938, %v3088
        %v3105 = vadd.f32 %v2939, %v3089
        %v3106 = vadd.f32 %v2940, %v3090
        %v3107 = vadd.f32 %v2941, %v3091
        %v3108 = vadd.f32 %v2942, %v3092
        %v3109 = vadd.f32 %v2943, %v3093
        %v3110 = vadd.f32 %v2944, %v3094
        %v3111 = vadd.f32 %v2945, %v3095
        %v3112 = vadd.f32 %v2946, %v3096
        %v3113 = vadd.f32 %v2947, %v3097
        %v3114 = vadd.f32 %v2948, %v3098
        %v3115 = vadd.f32 %v2949, %v3099
        %v3116 = vadd.f32 %v2950, %v3100
        %v3117 = vadd.f32 %v2951, %v3101
        %v3118 = vperm.slane %v2321, 6
        %v3119 = vmul.f32 %v2132, %v3118
        %v3120 = vmul.f32 %v2144, %v3118
        %v3121 = vmul.f32 %v2156, %v3118
        %v3122 = vmul.f32 %v2168, %v3118
        %v3123 = vmul.f32 %v2180, %v3118
        %v3124 = vmul.f32 %v2192, %v3118
        %v3125 = vmul.f32 %v2204, %v3118
        %v3126 = vmul.f32 %v2216, %v3118
        %v3127 = vmul.f32 %v2228, %v3118
        %v3128 = vmul.f32 %v2240, %v3118
        %v3129 = vmul.f32 %v2252, %v3118
        %v3130 = vmul.f32 %v2264, %v3118
        %v3131 = vmul.f32 %v2276, %v3118
        %v3132 = vmul.f32 %v2288, %v3118
        %v3133 = vmul.f32 %v2300, %v3118
        %v3134 = vmul.f32 %v2312, %v3118
        %v3135 = vsel %vm668, %v3119, 0.0
        %3136 = vadd.xlane.f32.xlu0 %v3135
        %v3137 = vpop.xlane.xlu0 %3136
        %v3138 = vsel %vm668, %v3120, 0.0
        %3139 = vadd.xlane.f32.xlu0 %v3138
        %v3140 = vpop.xlane.xlu0 %3139
        %v3141 = vsel %vm668, %v3121, 0.0
        %3142 = vadd.xlane.f32.xlu0 %v3141
        %v3143 = vpop.xlane.xlu0 %3142
        %v3144 = vsel %vm668, %v3122, 0.0
        %3145 = vadd.xlane.f32.xlu0 %v3144
        %v3146 = vpop.xlane.xlu0 %3145
        %v3147 = vsel %vm668, %v3123, 0.0
        %3148 = vadd.xlane.f32.xlu0 %v3147
        %v3149 = vpop.xlane.xlu0 %3148
        %v3150 = vsel %vm668, %v3124, 0.0
        %3151 = vadd.xlane.f32.xlu0 %v3150
        %v3152 = vpop.xlane.xlu0 %3151
        %v3153 = vsel %vm668, %v3125, 0.0
        %3154 = vadd.xlane.f32.xlu0 %v3153
        %v3155 = vpop.xlane.xlu0 %3154
        %v3156 = vsel %vm668, %v3126, 0.0
        %3157 = vadd.xlane.f32.xlu0 %v3156
        %v3158 = vpop.xlane.xlu0 %3157
        %v3159 = vsel %vm668, %v3127, 0.0
        %3160 = vadd.xlane.f32.xlu0 %v3159
        %v3161 = vpop.xlane.xlu0 %3160
        %v3162 = vsel %vm668, %v3128, 0.0
        %3163 = vadd.xlane.f32.xlu0 %v3162
        %v3164 = vpop.xlane.xlu0 %3163
        %v3165 = vsel %vm668, %v3129, 0.0
        %3166 = vadd.xlane.f32.xlu0 %v3165
        %v3167 = vpop.xlane.xlu0 %3166
        %v3168 = vsel %vm668, %v3130, 0.0
        %3169 = vadd.xlane.f32.xlu0 %v3168
        %v3170 = vpop.xlane.xlu0 %3169
        %v3171 = vsel %vm668, %v3131, 0.0
        %3172 = vadd.xlane.f32.xlu0 %v3171
        %v3173 = vpop.xlane.xlu0 %3172
        %v3174 = vsel %vm668, %v3132, 0.0
        %3175 = vadd.xlane.f32.xlu0 %v3174
        %v3176 = vpop.xlane.xlu0 %3175
        %v3177 = vsel %vm668, %v3133, 0.0
        %3178 = vadd.xlane.f32.xlu0 %v3177
        %v3179 = vpop.xlane.xlu0 %3178
        %v3180 = vsel %vm668, %v3134, 0.0
        %3181 = vadd.xlane.f32.xlu0 %v3180
        %v3182 = vpop.xlane.xlu0 %3181
        %vm3183 = vcmp.eq.s32.totalorder %v2325, 6
        %v3184 = vsel %vm3183, %v3137, 0.0
        %v3185 = vsel %vm3183, %v3140, 0.0
        %v3186 = vsel %vm3183, %v3143, 0.0
        %v3187 = vsel %vm3183, %v3146, 0.0
        %v3188 = vsel %vm3183, %v3149, 0.0
        %v3189 = vsel %vm3183, %v3152, 0.0
        %v3190 = vsel %vm3183, %v3155, 0.0
        %v3191 = vsel %vm3183, %v3158, 0.0
        %v3192 = vsel %vm3183, %v3161, 0.0
        %v3193 = vsel %vm3183, %v3164, 0.0
        %v3194 = vsel %vm3183, %v3167, 0.0
        %v3195 = vsel %vm3183, %v3170, 0.0
        %v3196 = vsel %vm3183, %v3173, 0.0
        %v3197 = vsel %vm3183, %v3176, 0.0
        %v3198 = vsel %vm3183, %v3179, 0.0
        %v3199 = vsel %vm3183, %v3182, 0.0
        %v3200 = vadd.f32 %v3102, %v3184
        %v3201 = vadd.f32 %v3103, %v3185
        %v3202 = vadd.f32 %v3104, %v3186
        %v3203 = vadd.f32 %v3105, %v3187
        %v3204 = vadd.f32 %v3106, %v3188
        %v3205 = vadd.f32 %v3107, %v3189
        %v3206 = vadd.f32 %v3108, %v3190
        %v3207 = vadd.f32 %v3109, %v3191
        %v3208 = vadd.f32 %v3110, %v3192
        %v3209 = vadd.f32 %v3111, %v3193
        %v3210 = vadd.f32 %v3112, %v3194
        %v3211 = vadd.f32 %v3113, %v3195
        %v3212 = vadd.f32 %v3114, %v3196
        %v3213 = vadd.f32 %v3115, %v3197
        %v3214 = vadd.f32 %v3116, %v3198
        %v3215 = vadd.f32 %v3117, %v3199
        %v3216 = vperm.slane %v2321, 7
        %3218 = vrot.lane.b32.xlu0 %v3216, 64
        %v3219 = vpop.permute.xlu0 %3218
        %v3221 = vmul.f32 %v2132, %v3219
        %v3222 = vmul.f32 %v2144, %v3219
        %v3223 = vmul.f32 %v2156, %v3219
        %v3224 = vmul.f32 %v2168, %v3219
        %v3225 = vmul.f32 %v2180, %v3219
        %v3226 = vmul.f32 %v2192, %v3219
        %v3227 = vmul.f32 %v2204, %v3219
        %v3228 = vmul.f32 %v2216, %v3219
        %v3229 = vmul.f32 %v2228, %v3219
        %v3230 = vmul.f32 %v2240, %v3219
        %v3231 = vmul.f32 %v2252, %v3219
        %v3232 = vmul.f32 %v2264, %v3219
        %v3233 = vmul.f32 %v2276, %v3219
        %v3234 = vmul.f32 %v2288, %v3219
        %v3235 = vmul.f32 %v2300, %v3219
        %v3236 = vmul.f32 %v2312, %v3219
        %3253 = vrot.lane.b32.xlu0 %v3221, 64
        %v3254 = vpop.permute.xlu0 %3253
        %3255 = vrot.lane.b32.xlu0 %v3222, 64
        %v3256 = vpop.permute.xlu0 %3255
        %3257 = vrot.lane.b32.xlu0 %v3223, 64
        %v3258 = vpop.permute.xlu0 %3257
        %3259 = vrot.lane.b32.xlu0 %v3224, 64
        %v3260 = vpop.permute.xlu0 %3259
        %3261 = vrot.lane.b32.xlu0 %v3225, 64
        %v3262 = vpop.permute.xlu0 %3261
        %3263 = vrot.lane.b32.xlu0 %v3226, 64
        %v3264 = vpop.permute.xlu0 %3263
        %3265 = vrot.lane.b32.xlu0 %v3227, 64
        %v3266 = vpop.permute.xlu0 %3265
        %3267 = vrot.lane.b32.xlu0 %v3228, 64
        %v3268 = vpop.permute.xlu0 %3267
        %3269 = vrot.lane.b32.xlu0 %v3229, 64
        %v3270 = vpop.permute.xlu0 %3269
        %3271 = vrot.lane.b32.xlu0 %v3230, 64
        %v3272 = vpop.permute.xlu0 %3271
        %3273 = vrot.lane.b32.xlu0 %v3231, 64
        %v3274 = vpop.permute.xlu0 %3273
        %3275 = vrot.lane.b32.xlu0 %v3232, 64
        %v3276 = vpop.permute.xlu0 %3275
        %3277 = vrot.lane.b32.xlu0 %v3233, 64
        %v3278 = vpop.permute.xlu0 %3277
        %3279 = vrot.lane.b32.xlu0 %v3234, 64
        %v3280 = vpop.permute.xlu0 %3279
        %3281 = vrot.lane.b32.xlu0 %v3235, 64
        %v3282 = vpop.permute.xlu0 %3281
        %3283 = vrot.lane.b32.xlu0 %v3236, 64
        %v3284 = vpop.permute.xlu0 %3283
        %v3301 = vsel %vm668, %v3254, 0.0
        %3302 = vadd.xlane.f32.xlu0 %v3301
        %v3303 = vpop.xlane.xlu0 %3302
        %v3304 = vsel %vm668, %v3256, 0.0
        %3305 = vadd.xlane.f32.xlu0 %v3304
        %v3306 = vpop.xlane.xlu0 %3305
        %v3307 = vsel %vm668, %v3258, 0.0
        %3308 = vadd.xlane.f32.xlu0 %v3307
        %v3309 = vpop.xlane.xlu0 %3308
        %v3310 = vsel %vm668, %v3260, 0.0
        %3311 = vadd.xlane.f32.xlu0 %v3310
        %v3312 = vpop.xlane.xlu0 %3311
        %v3313 = vsel %vm668, %v3262, 0.0
        %3314 = vadd.xlane.f32.xlu0 %v3313
        %v3315 = vpop.xlane.xlu0 %3314
        %v3316 = vsel %vm668, %v3264, 0.0
        %3317 = vadd.xlane.f32.xlu0 %v3316
        %v3318 = vpop.xlane.xlu0 %3317
        %v3319 = vsel %vm668, %v3266, 0.0
        %3320 = vadd.xlane.f32.xlu0 %v3319
        %v3321 = vpop.xlane.xlu0 %3320
        %v3322 = vsel %vm668, %v3268, 0.0
        %3323 = vadd.xlane.f32.xlu0 %v3322
        %v3324 = vpop.xlane.xlu0 %3323
        %v3325 = vsel %vm668, %v3270, 0.0
        %3326 = vadd.xlane.f32.xlu0 %v3325
        %v3327 = vpop.xlane.xlu0 %3326
        %v3328 = vsel %vm668, %v3272, 0.0
        %3329 = vadd.xlane.f32.xlu0 %v3328
        %v3330 = vpop.xlane.xlu0 %3329
        %v3331 = vsel %vm668, %v3274, 0.0
        %3332 = vadd.xlane.f32.xlu0 %v3331
        %v3333 = vpop.xlane.xlu0 %3332
        %v3334 = vsel %vm668, %v3276, 0.0
        %3335 = vadd.xlane.f32.xlu0 %v3334
        %v3336 = vpop.xlane.xlu0 %3335
        %v3337 = vsel %vm668, %v3278, 0.0
        %3338 = vadd.xlane.f32.xlu0 %v3337
        %v3339 = vpop.xlane.xlu0 %3338
        %v3340 = vsel %vm668, %v3280, 0.0
        %3341 = vadd.xlane.f32.xlu0 %v3340
        %v3342 = vpop.xlane.xlu0 %3341
        %v3343 = vsel %vm668, %v3282, 0.0
        %3344 = vadd.xlane.f32.xlu0 %v3343
        %v3345 = vpop.xlane.xlu0 %3344
        %v3346 = vsel %vm668, %v3284, 0.0
        %3347 = vadd.xlane.f32.xlu0 %v3346
        %v3348 = vpop.xlane.xlu0 %3347
        %vm3349 = vcmp.eq.s32.totalorder %v2325, 7
        %v3350 = vsel %vm3349, %v3303, 0.0
        %v3351 = vsel %vm3349, %v3306, 0.0
        %v3352 = vsel %vm3349, %v3309, 0.0
        %v3353 = vsel %vm3349, %v3312, 0.0
        %v3354 = vsel %vm3349, %v3315, 0.0
        %v3355 = vsel %vm3349, %v3318, 0.0
        %v3356 = vsel %vm3349, %v3321, 0.0
        %v3357 = vsel %vm3349, %v3324, 0.0
        %v3358 = vsel %vm3349, %v3327, 0.0
        %v3359 = vsel %vm3349, %v3330, 0.0
        %v3360 = vsel %vm3349, %v3333, 0.0
        %v3361 = vsel %vm3349, %v3336, 0.0
        %v3362 = vsel %vm3349, %v3339, 0.0
        %v3363 = vsel %vm3349, %v3342, 0.0
        %v3364 = vsel %vm3349, %v3345, 0.0
        %v3365 = vsel %vm3349, %v3348, 0.0
        %v3366 = vadd.f32 %v3200, %v3350
        %v3367 = vadd.f32 %v3201, %v3351
        %v3368 = vadd.f32 %v3202, %v3352
        %v3369 = vadd.f32 %v3203, %v3353
        %v3370 = vadd.f32 %v3204, %v3354
        %v3371 = vadd.f32 %v3205, %v3355
        %v3372 = vadd.f32 %v3206, %v3356
        %v3373 = vadd.f32 %v3207, %v3357
        %v3374 = vadd.f32 %v3208, %v3358
        %v3375 = vadd.f32 %v3209, %v3359
        %v3376 = vadd.f32 %v3210, %v3360
        %v3377 = vadd.f32 %v3211, %v3361
        %v3378 = vadd.f32 %v3212, %v3362
        %v3379 = vadd.f32 %v3213, %v3363
        %v3380 = vadd.f32 %v3214, %v3364
        %v3381 = vadd.f32 %v3215, %v3365
        %v3382 = vperm.slane %v2322, 0
        %v3383 = vmul.f32 %v2133, %v3382
        %v3384 = vmul.f32 %v2145, %v3382
        %v3385 = vmul.f32 %v2157, %v3382
        %v3386 = vmul.f32 %v2169, %v3382
        %v3387 = vmul.f32 %v2181, %v3382
        %v3388 = vmul.f32 %v2193, %v3382
        %v3389 = vmul.f32 %v2205, %v3382
        %v3390 = vmul.f32 %v2217, %v3382
        %v3391 = vmul.f32 %v2229, %v3382
        %v3392 = vmul.f32 %v2241, %v3382
        %v3393 = vmul.f32 %v2253, %v3382
        %v3394 = vmul.f32 %v2265, %v3382
        %v3395 = vmul.f32 %v2277, %v3382
        %v3396 = vmul.f32 %v2289, %v3382
        %v3397 = vmul.f32 %v2301, %v3382
        %v3398 = vmul.f32 %v2313, %v3382
        %v3399 = vsel %vm668, %v3383, 0.0
        %3400 = vadd.xlane.f32.xlu0 %v3399
        %v3401 = vpop.xlane.xlu0 %3400
        %v3402 = vsel %vm668, %v3384, 0.0
        %3403 = vadd.xlane.f32.xlu0 %v3402
        %v3404 = vpop.xlane.xlu0 %3403
        %v3405 = vsel %vm668, %v3385, 0.0
        %3406 = vadd.xlane.f32.xlu0 %v3405
        %v3407 = vpop.xlane.xlu0 %3406
        %v3408 = vsel %vm668, %v3386, 0.0
        %3409 = vadd.xlane.f32.xlu0 %v3408
        %v3410 = vpop.xlane.xlu0 %3409
        %v3411 = vsel %vm668, %v3387, 0.0
        %3412 = vadd.xlane.f32.xlu0 %v3411
        %v3413 = vpop.xlane.xlu0 %3412
        %v3414 = vsel %vm668, %v3388, 0.0
        %3415 = vadd.xlane.f32.xlu0 %v3414
        %v3416 = vpop.xlane.xlu0 %3415
        %v3417 = vsel %vm668, %v3389, 0.0
        %3418 = vadd.xlane.f32.xlu0 %v3417
        %v3419 = vpop.xlane.xlu0 %3418
        %v3420 = vsel %vm668, %v3390, 0.0
        %3421 = vadd.xlane.f32.xlu0 %v3420
        %v3422 = vpop.xlane.xlu0 %3421
        %v3423 = vsel %vm668, %v3391, 0.0
        %3424 = vadd.xlane.f32.xlu0 %v3423
        %v3425 = vpop.xlane.xlu0 %3424
        %v3426 = vsel %vm668, %v3392, 0.0
        %3427 = vadd.xlane.f32.xlu0 %v3426
        %v3428 = vpop.xlane.xlu0 %3427
        %v3429 = vsel %vm668, %v3393, 0.0
        %3430 = vadd.xlane.f32.xlu0 %v3429
        %v3431 = vpop.xlane.xlu0 %3430
        %v3432 = vsel %vm668, %v3394, 0.0
        %3433 = vadd.xlane.f32.xlu0 %v3432
        %v3434 = vpop.xlane.xlu0 %3433
        %v3435 = vsel %vm668, %v3395, 0.0
        %3436 = vadd.xlane.f32.xlu0 %v3435
        %v3437 = vpop.xlane.xlu0 %3436
        %v3438 = vsel %vm668, %v3396, 0.0
        %3439 = vadd.xlane.f32.xlu0 %v3438
        %v3440 = vpop.xlane.xlu0 %3439
        %v3441 = vsel %vm668, %v3397, 0.0
        %3442 = vadd.xlane.f32.xlu0 %v3441
        %v3443 = vpop.xlane.xlu0 %3442
        %v3444 = vsel %vm668, %v3398, 0.0
        %3445 = vadd.xlane.f32.xlu0 %v3444
        %v3446 = vpop.xlane.xlu0 %3445
        %vm3447 = vcmp.eq.s32.totalorder %v2325, 8
        %v3448 = vsel %vm3447, %v3401, 0.0
        %v3449 = vsel %vm3447, %v3404, 0.0
        %v3450 = vsel %vm3447, %v3407, 0.0
        %v3451 = vsel %vm3447, %v3410, 0.0
        %v3452 = vsel %vm3447, %v3413, 0.0
        %v3453 = vsel %vm3447, %v3416, 0.0
        %v3454 = vsel %vm3447, %v3419, 0.0
        %v3455 = vsel %vm3447, %v3422, 0.0
        %v3456 = vsel %vm3447, %v3425, 0.0
        %v3457 = vsel %vm3447, %v3428, 0.0
        %v3458 = vsel %vm3447, %v3431, 0.0
        %v3459 = vsel %vm3447, %v3434, 0.0
        %v3460 = vsel %vm3447, %v3437, 0.0
        %v3461 = vsel %vm3447, %v3440, 0.0
        %v3462 = vsel %vm3447, %v3443, 0.0
        %v3463 = vsel %vm3447, %v3446, 0.0
        %v3464 = vadd.f32 %v3366, %v3448
        %v3465 = vadd.f32 %v3367, %v3449
        %v3466 = vadd.f32 %v3368, %v3450
        %v3467 = vadd.f32 %v3369, %v3451
        %v3468 = vadd.f32 %v3370, %v3452
        %v3469 = vadd.f32 %v3371, %v3453
        %v3470 = vadd.f32 %v3372, %v3454
        %v3471 = vadd.f32 %v3373, %v3455
        %v3472 = vadd.f32 %v3374, %v3456
        %v3473 = vadd.f32 %v3375, %v3457
        %v3474 = vadd.f32 %v3376, %v3458
        %v3475 = vadd.f32 %v3377, %v3459
        %v3476 = vadd.f32 %v3378, %v3460
        %v3477 = vadd.f32 %v3379, %v3461
        %v3478 = vadd.f32 %v3380, %v3462
        %v3479 = vadd.f32 %v3381, %v3463
        %v3480 = vperm.slane %v2322, 1
        %3482 = vrot.lane.b32.xlu0 %v3480, 64
        %v3483 = vpop.permute.xlu0 %3482
        %v3485 = vmul.f32 %v2133, %v3483
        %v3486 = vmul.f32 %v2145, %v3483
        %v3487 = vmul.f32 %v2157, %v3483
        %v3488 = vmul.f32 %v2169, %v3483
        %v3489 = vmul.f32 %v2181, %v3483
        %v3490 = vmul.f32 %v2193, %v3483
        %v3491 = vmul.f32 %v2205, %v3483
        %v3492 = vmul.f32 %v2217, %v3483
        %v3493 = vmul.f32 %v2229, %v3483
        %v3494 = vmul.f32 %v2241, %v3483
        %v3495 = vmul.f32 %v2253, %v3483
        %v3496 = vmul.f32 %v2265, %v3483
        %v3497 = vmul.f32 %v2277, %v3483
        %v3498 = vmul.f32 %v2289, %v3483
        %v3499 = vmul.f32 %v2301, %v3483
        %v3500 = vmul.f32 %v2313, %v3483
        %3517 = vrot.lane.b32.xlu0 %v3485, 64
        %v3518 = vpop.permute.xlu0 %3517
        %3519 = vrot.lane.b32.xlu0 %v3486, 64
        %v3520 = vpop.permute.xlu0 %3519
        %3521 = vrot.lane.b32.xlu0 %v3487, 64
        %v3522 = vpop.permute.xlu0 %3521
        %3523 = vrot.lane.b32.xlu0 %v3488, 64
        %v3524 = vpop.permute.xlu0 %3523
        %3525 = vrot.lane.b32.xlu0 %v3489, 64
        %v3526 = vpop.permute.xlu0 %3525
        %3527 = vrot.lane.b32.xlu0 %v3490, 64
        %v3528 = vpop.permute.xlu0 %3527
        %3529 = vrot.lane.b32.xlu0 %v3491, 64
        %v3530 = vpop.permute.xlu0 %3529
        %3531 = vrot.lane.b32.xlu0 %v3492, 64
        %v3532 = vpop.permute.xlu0 %3531
        %3533 = vrot.lane.b32.xlu0 %v3493, 64
        %v3534 = vpop.permute.xlu0 %3533
        %3535 = vrot.lane.b32.xlu0 %v3494, 64
        %v3536 = vpop.permute.xlu0 %3535
        %3537 = vrot.lane.b32.xlu0 %v3495, 64
        %v3538 = vpop.permute.xlu0 %3537
        %3539 = vrot.lane.b32.xlu0 %v3496, 64
        %v3540 = vpop.permute.xlu0 %3539
        %3541 = vrot.lane.b32.xlu0 %v3497, 64
        %v3542 = vpop.permute.xlu0 %3541
        %3543 = vrot.lane.b32.xlu0 %v3498, 64
        %v3544 = vpop.permute.xlu0 %3543
        %3545 = vrot.lane.b32.xlu0 %v3499, 64
        %v3546 = vpop.permute.xlu0 %3545
        %3547 = vrot.lane.b32.xlu0 %v3500, 64
        %v3548 = vpop.permute.xlu0 %3547
        %v3565 = vsel %vm668, %v3518, 0.0
        %3566 = vadd.xlane.f32.xlu0 %v3565
        %v3567 = vpop.xlane.xlu0 %3566
        %v3568 = vsel %vm668, %v3520, 0.0
        %3569 = vadd.xlane.f32.xlu0 %v3568
        %v3570 = vpop.xlane.xlu0 %3569
        %v3571 = vsel %vm668, %v3522, 0.0
        %3572 = vadd.xlane.f32.xlu0 %v3571
        %v3573 = vpop.xlane.xlu0 %3572
        %v3574 = vsel %vm668, %v3524, 0.0
        %3575 = vadd.xlane.f32.xlu0 %v3574
        %v3576 = vpop.xlane.xlu0 %3575
        %v3577 = vsel %vm668, %v3526, 0.0
        %3578 = vadd.xlane.f32.xlu0 %v3577
        %v3579 = vpop.xlane.xlu0 %3578
        %v3580 = vsel %vm668, %v3528, 0.0
        %3581 = vadd.xlane.f32.xlu0 %v3580
        %v3582 = vpop.xlane.xlu0 %3581
        %v3583 = vsel %vm668, %v3530, 0.0
        %3584 = vadd.xlane.f32.xlu0 %v3583
        %v3585 = vpop.xlane.xlu0 %3584
        %v3586 = vsel %vm668, %v3532, 0.0
        %3587 = vadd.xlane.f32.xlu0 %v3586
        %v3588 = vpop.xlane.xlu0 %3587
        %v3589 = vsel %vm668, %v3534, 0.0
        %3590 = vadd.xlane.f32.xlu0 %v3589
        %v3591 = vpop.xlane.xlu0 %3590
        %v3592 = vsel %vm668, %v3536, 0.0
        %3593 = vadd.xlane.f32.xlu0 %v3592
        %v3594 = vpop.xlane.xlu0 %3593
        %v3595 = vsel %vm668, %v3538, 0.0
        %3596 = vadd.xlane.f32.xlu0 %v3595
        %v3597 = vpop.xlane.xlu0 %3596
        %v3598 = vsel %vm668, %v3540, 0.0
        %3599 = vadd.xlane.f32.xlu0 %v3598
        %v3600 = vpop.xlane.xlu0 %3599
        %v3601 = vsel %vm668, %v3542, 0.0
        %3602 = vadd.xlane.f32.xlu0 %v3601
        %v3603 = vpop.xlane.xlu0 %3602
        %v3604 = vsel %vm668, %v3544, 0.0
        %3605 = vadd.xlane.f32.xlu0 %v3604
        %v3606 = vpop.xlane.xlu0 %3605
        %v3607 = vsel %vm668, %v3546, 0.0
        %3608 = vadd.xlane.f32.xlu0 %v3607
        %v3609 = vpop.xlane.xlu0 %3608
        %v3610 = vsel %vm668, %v3548, 0.0
        %3611 = vadd.xlane.f32.xlu0 %v3610
        %v3612 = vpop.xlane.xlu0 %3611
        %vm3613 = vcmp.eq.s32.totalorder %v2325, 9
        %v3614 = vsel %vm3613, %v3567, 0.0
        %v3615 = vsel %vm3613, %v3570, 0.0
        %v3616 = vsel %vm3613, %v3573, 0.0
        %v3617 = vsel %vm3613, %v3576, 0.0
        %v3618 = vsel %vm3613, %v3579, 0.0
        %v3619 = vsel %vm3613, %v3582, 0.0
        %v3620 = vsel %vm3613, %v3585, 0.0
        %v3621 = vsel %vm3613, %v3588, 0.0
        %v3622 = vsel %vm3613, %v3591, 0.0
        %v3623 = vsel %vm3613, %v3594, 0.0
        %v3624 = vsel %vm3613, %v3597, 0.0
        %v3625 = vsel %vm3613, %v3600, 0.0
        %v3626 = vsel %vm3613, %v3603, 0.0
        %v3627 = vsel %vm3613, %v3606, 0.0
        %v3628 = vsel %vm3613, %v3609, 0.0
        %v3629 = vsel %vm3613, %v3612, 0.0
        %v3630 = vadd.f32 %v3464, %v3614
        %v3631 = vadd.f32 %v3465, %v3615
        %v3632 = vadd.f32 %v3466, %v3616
        %v3633 = vadd.f32 %v3467, %v3617
        %v3634 = vadd.f32 %v3468, %v3618
        %v3635 = vadd.f32 %v3469, %v3619
        %v3636 = vadd.f32 %v3470, %v3620
        %v3637 = vadd.f32 %v3471, %v3621
        %v3638 = vadd.f32 %v3472, %v3622
        %v3639 = vadd.f32 %v3473, %v3623
        %v3640 = vadd.f32 %v3474, %v3624
        %v3641 = vadd.f32 %v3475, %v3625
        %v3642 = vadd.f32 %v3476, %v3626
        %v3643 = vadd.f32 %v3477, %v3627
        %v3644 = vadd.f32 %v3478, %v3628
        %v3645 = vadd.f32 %v3479, %v3629
        %v3646 = vperm.slane %v2322, 2
        %v3647 = vmul.f32 %v2134, %v3646
        %v3648 = vmul.f32 %v2146, %v3646
        %v3649 = vmul.f32 %v2158, %v3646
        %v3650 = vmul.f32 %v2170, %v3646
        %v3651 = vmul.f32 %v2182, %v3646
        %v3652 = vmul.f32 %v2194, %v3646
        %v3653 = vmul.f32 %v2206, %v3646
        %v3654 = vmul.f32 %v2218, %v3646
        %v3655 = vmul.f32 %v2230, %v3646
        %v3656 = vmul.f32 %v2242, %v3646
        %v3657 = vmul.f32 %v2254, %v3646
        %v3658 = vmul.f32 %v2266, %v3646
        %v3659 = vmul.f32 %v2278, %v3646
        %v3660 = vmul.f32 %v2290, %v3646
        %v3661 = vmul.f32 %v2302, %v3646
        %v3662 = vmul.f32 %v2314, %v3646
        %v3663 = vsel %vm668, %v3647, 0.0
        %3664 = vadd.xlane.f32.xlu0 %v3663
        %v3665 = vpop.xlane.xlu0 %3664
        %v3666 = vsel %vm668, %v3648, 0.0
        %3667 = vadd.xlane.f32.xlu0 %v3666
        %v3668 = vpop.xlane.xlu0 %3667
        %v3669 = vsel %vm668, %v3649, 0.0
        %3670 = vadd.xlane.f32.xlu0 %v3669
        %v3671 = vpop.xlane.xlu0 %3670
        %v3672 = vsel %vm668, %v3650, 0.0
        %3673 = vadd.xlane.f32.xlu0 %v3672
        %v3674 = vpop.xlane.xlu0 %3673
        %v3675 = vsel %vm668, %v3651, 0.0
        %3676 = vadd.xlane.f32.xlu0 %v3675
        %v3677 = vpop.xlane.xlu0 %3676
        %v3678 = vsel %vm668, %v3652, 0.0
        %3679 = vadd.xlane.f32.xlu0 %v3678
        %v3680 = vpop.xlane.xlu0 %3679
        %v3681 = vsel %vm668, %v3653, 0.0
        %3682 = vadd.xlane.f32.xlu0 %v3681
        %v3683 = vpop.xlane.xlu0 %3682
        %v3684 = vsel %vm668, %v3654, 0.0
        %3685 = vadd.xlane.f32.xlu0 %v3684
        %v3686 = vpop.xlane.xlu0 %3685
        %v3687 = vsel %vm668, %v3655, 0.0
        %3688 = vadd.xlane.f32.xlu0 %v3687
        %v3689 = vpop.xlane.xlu0 %3688
        %v3690 = vsel %vm668, %v3656, 0.0
        %3691 = vadd.xlane.f32.xlu0 %v3690
        %v3692 = vpop.xlane.xlu0 %3691
        %v3693 = vsel %vm668, %v3657, 0.0
        %3694 = vadd.xlane.f32.xlu0 %v3693
        %v3695 = vpop.xlane.xlu0 %3694
        %v3696 = vsel %vm668, %v3658, 0.0
        %3697 = vadd.xlane.f32.xlu0 %v3696
        %v3698 = vpop.xlane.xlu0 %3697
        %v3699 = vsel %vm668, %v3659, 0.0
        %3700 = vadd.xlane.f32.xlu0 %v3699
        %v3701 = vpop.xlane.xlu0 %3700
        %v3702 = vsel %vm668, %v3660, 0.0
        %3703 = vadd.xlane.f32.xlu0 %v3702
        %v3704 = vpop.xlane.xlu0 %3703
        %v3705 = vsel %vm668, %v3661, 0.0
        %3706 = vadd.xlane.f32.xlu0 %v3705
        %v3707 = vpop.xlane.xlu0 %3706
        %v3708 = vsel %vm668, %v3662, 0.0
        %3709 = vadd.xlane.f32.xlu0 %v3708
        %v3710 = vpop.xlane.xlu0 %3709
        %vm3711 = vcmp.eq.s32.totalorder %v2325, 10
        %v3712 = vsel %vm3711, %v3665, 0.0
        %v3713 = vsel %vm3711, %v3668, 0.0
        %v3714 = vsel %vm3711, %v3671, 0.0
        %v3715 = vsel %vm3711, %v3674, 0.0
        %v3716 = vsel %vm3711, %v3677, 0.0
        %v3717 = vsel %vm3711, %v3680, 0.0
        %v3718 = vsel %vm3711, %v3683, 0.0
        %v3719 = vsel %vm3711, %v3686, 0.0
        %v3720 = vsel %vm3711, %v3689, 0.0
        %v3721 = vsel %vm3711, %v3692, 0.0
        %v3722 = vsel %vm3711, %v3695, 0.0
        %v3723 = vsel %vm3711, %v3698, 0.0
        %v3724 = vsel %vm3711, %v3701, 0.0
        %v3725 = vsel %vm3711, %v3704, 0.0
        %v3726 = vsel %vm3711, %v3707, 0.0
        %v3727 = vsel %vm3711, %v3710, 0.0
        %v3728 = vadd.f32 %v3630, %v3712
        %v3729 = vadd.f32 %v3631, %v3713
        %v3730 = vadd.f32 %v3632, %v3714
        %v3731 = vadd.f32 %v3633, %v3715
        %v3732 = vadd.f32 %v3634, %v3716
        %v3733 = vadd.f32 %v3635, %v3717
        %v3734 = vadd.f32 %v3636, %v3718
        %v3735 = vadd.f32 %v3637, %v3719
        %v3736 = vadd.f32 %v3638, %v3720
        %v3737 = vadd.f32 %v3639, %v3721
        %v3738 = vadd.f32 %v3640, %v3722
        %v3739 = vadd.f32 %v3641, %v3723
        %v3740 = vadd.f32 %v3642, %v3724
        %v3741 = vadd.f32 %v3643, %v3725
        %v3742 = vadd.f32 %v3644, %v3726
        %v3743 = vadd.f32 %v3645, %v3727
        %v3744 = vperm.slane %v2322, 3
        %3746 = vrot.lane.b32.xlu0 %v3744, 64
        %v3747 = vpop.permute.xlu0 %3746
        %v3749 = vmul.f32 %v2134, %v3747
        %v3750 = vmul.f32 %v2146, %v3747
        %v3751 = vmul.f32 %v2158, %v3747
        %v3752 = vmul.f32 %v2170, %v3747
        %v3753 = vmul.f32 %v2182, %v3747
        %v3754 = vmul.f32 %v2194, %v3747
        %v3755 = vmul.f32 %v2206, %v3747
        %v3756 = vmul.f32 %v2218, %v3747
        %v3757 = vmul.f32 %v2230, %v3747
        %v3758 = vmul.f32 %v2242, %v3747
        %v3759 = vmul.f32 %v2254, %v3747
        %v3760 = vmul.f32 %v2266, %v3747
        %v3761 = vmul.f32 %v2278, %v3747
        %v3762 = vmul.f32 %v2290, %v3747
        %v3763 = vmul.f32 %v2302, %v3747
        %v3764 = vmul.f32 %v2314, %v3747
        %3781 = vrot.lane.b32.xlu0 %v3749, 64
        %v3782 = vpop.permute.xlu0 %3781
        %3783 = vrot.lane.b32.xlu0 %v3750, 64
        %v3784 = vpop.permute.xlu0 %3783
        %3785 = vrot.lane.b32.xlu0 %v3751, 64
        %v3786 = vpop.permute.xlu0 %3785
        %3787 = vrot.lane.b32.xlu0 %v3752, 64
        %v3788 = vpop.permute.xlu0 %3787
        %3789 = vrot.lane.b32.xlu0 %v3753, 64
        %v3790 = vpop.permute.xlu0 %3789
        %3791 = vrot.lane.b32.xlu0 %v3754, 64
        %v3792 = vpop.permute.xlu0 %3791
        %3793 = vrot.lane.b32.xlu0 %v3755, 64
        %v3794 = vpop.permute.xlu0 %3793
        %3795 = vrot.lane.b32.xlu0 %v3756, 64
        %v3796 = vpop.permute.xlu0 %3795
        %3797 = vrot.lane.b32.xlu0 %v3757, 64
        %v3798 = vpop.permute.xlu0 %3797
        %3799 = vrot.lane.b32.xlu0 %v3758, 64
        %v3800 = vpop.permute.xlu0 %3799
        %3801 = vrot.lane.b32.xlu0 %v3759, 64
        %v3802 = vpop.permute.xlu0 %3801
        %3803 = vrot.lane.b32.xlu0 %v3760, 64
        %v3804 = vpop.permute.xlu0 %3803
        %3805 = vrot.lane.b32.xlu0 %v3761, 64
        %v3806 = vpop.permute.xlu0 %3805
        %3807 = vrot.lane.b32.xlu0 %v3762, 64
        %v3808 = vpop.permute.xlu0 %3807
        %3809 = vrot.lane.b32.xlu0 %v3763, 64
        %v3810 = vpop.permute.xlu0 %3809
        %3811 = vrot.lane.b32.xlu0 %v3764, 64
        %v3812 = vpop.permute.xlu0 %3811
        %v3829 = vsel %vm668, %v3782, 0.0
        %3830 = vadd.xlane.f32.xlu0 %v3829
        %v3831 = vpop.xlane.xlu0 %3830
        %v3832 = vsel %vm668, %v3784, 0.0
        %3833 = vadd.xlane.f32.xlu0 %v3832
        %v3834 = vpop.xlane.xlu0 %3833
        %v3835 = vsel %vm668, %v3786, 0.0
        %3836 = vadd.xlane.f32.xlu0 %v3835
        %v3837 = vpop.xlane.xlu0 %3836
        %v3838 = vsel %vm668, %v3788, 0.0
        %3839 = vadd.xlane.f32.xlu0 %v3838
        %v3840 = vpop.xlane.xlu0 %3839
        %v3841 = vsel %vm668, %v3790, 0.0
        %3842 = vadd.xlane.f32.xlu0 %v3841
        %v3843 = vpop.xlane.xlu0 %3842
        %v3844 = vsel %vm668, %v3792, 0.0
        %3845 = vadd.xlane.f32.xlu0 %v3844
        %v3846 = vpop.xlane.xlu0 %3845
        %v3847 = vsel %vm668, %v3794, 0.0
        %3848 = vadd.xlane.f32.xlu0 %v3847
        %v3849 = vpop.xlane.xlu0 %3848
        %v3850 = vsel %vm668, %v3796, 0.0
        %3851 = vadd.xlane.f32.xlu0 %v3850
        %v3852 = vpop.xlane.xlu0 %3851
        %v3853 = vsel %vm668, %v3798, 0.0
        %3854 = vadd.xlane.f32.xlu0 %v3853
        %v3855 = vpop.xlane.xlu0 %3854
        %v3856 = vsel %vm668, %v3800, 0.0
        %3857 = vadd.xlane.f32.xlu0 %v3856
        %v3858 = vpop.xlane.xlu0 %3857
        %v3859 = vsel %vm668, %v3802, 0.0
        %3860 = vadd.xlane.f32.xlu0 %v3859
        %v3861 = vpop.xlane.xlu0 %3860
        %v3862 = vsel %vm668, %v3804, 0.0
        %3863 = vadd.xlane.f32.xlu0 %v3862
        %v3864 = vpop.xlane.xlu0 %3863
        %v3865 = vsel %vm668, %v3806, 0.0
        %3866 = vadd.xlane.f32.xlu0 %v3865
        %v3867 = vpop.xlane.xlu0 %3866
        %v3868 = vsel %vm668, %v3808, 0.0
        %3869 = vadd.xlane.f32.xlu0 %v3868
        %v3870 = vpop.xlane.xlu0 %3869
        %v3871 = vsel %vm668, %v3810, 0.0
        %3872 = vadd.xlane.f32.xlu0 %v3871
        %v3873 = vpop.xlane.xlu0 %3872
        %v3874 = vsel %vm668, %v3812, 0.0
        %3875 = vadd.xlane.f32.xlu0 %v3874
        %v3876 = vpop.xlane.xlu0 %3875
        %vm3877 = vcmp.eq.s32.totalorder %v2325, 11
        %v3878 = vsel %vm3877, %v3831, 0.0
        %v3879 = vsel %vm3877, %v3834, 0.0
        %v3880 = vsel %vm3877, %v3837, 0.0
        %v3881 = vsel %vm3877, %v3840, 0.0
        %v3882 = vsel %vm3877, %v3843, 0.0
        %v3883 = vsel %vm3877, %v3846, 0.0
        %v3884 = vsel %vm3877, %v3849, 0.0
        %v3885 = vsel %vm3877, %v3852, 0.0
        %v3886 = vsel %vm3877, %v3855, 0.0
        %v3887 = vsel %vm3877, %v3858, 0.0
        %v3888 = vsel %vm3877, %v3861, 0.0
        %v3889 = vsel %vm3877, %v3864, 0.0
        %v3890 = vsel %vm3877, %v3867, 0.0
        %v3891 = vsel %vm3877, %v3870, 0.0
        %v3892 = vsel %vm3877, %v3873, 0.0
        %v3893 = vsel %vm3877, %v3876, 0.0
        %v3894 = vadd.f32 %v3728, %v3878
        %v3895 = vadd.f32 %v3729, %v3879
        %v3896 = vadd.f32 %v3730, %v3880
        %v3897 = vadd.f32 %v3731, %v3881
        %v3898 = vadd.f32 %v3732, %v3882
        %v3899 = vadd.f32 %v3733, %v3883
        %v3900 = vadd.f32 %v3734, %v3884
        %v3901 = vadd.f32 %v3735, %v3885
        %v3902 = vadd.f32 %v3736, %v3886
        %v3903 = vadd.f32 %v3737, %v3887
        %v3904 = vadd.f32 %v3738, %v3888
        %v3905 = vadd.f32 %v3739, %v3889
        %v3906 = vadd.f32 %v3740, %v3890
        %v3907 = vadd.f32 %v3741, %v3891
        %v3908 = vadd.f32 %v3742, %v3892
        %v3909 = vadd.f32 %v3743, %v3893
        %v3910 = vperm.slane %v2322, 4
        %v3911 = vmul.f32 %v2135, %v3910
        %v3912 = vmul.f32 %v2147, %v3910
        %v3913 = vmul.f32 %v2159, %v3910
        %v3914 = vmul.f32 %v2171, %v3910
        %v3915 = vmul.f32 %v2183, %v3910
        %v3916 = vmul.f32 %v2195, %v3910
        %v3917 = vmul.f32 %v2207, %v3910
        %v3918 = vmul.f32 %v2219, %v3910
        %v3919 = vmul.f32 %v2231, %v3910
        %v3920 = vmul.f32 %v2243, %v3910
        %v3921 = vmul.f32 %v2255, %v3910
        %v3922 = vmul.f32 %v2267, %v3910
        %v3923 = vmul.f32 %v2279, %v3910
        %v3924 = vmul.f32 %v2291, %v3910
        %v3925 = vmul.f32 %v2303, %v3910
        %v3926 = vmul.f32 %v2315, %v3910
        %v3927 = vsel %vm668, %v3911, 0.0
        %3928 = vadd.xlane.f32.xlu0 %v3927
        %v3929 = vpop.xlane.xlu0 %3928
        %v3930 = vsel %vm668, %v3912, 0.0
        %3931 = vadd.xlane.f32.xlu0 %v3930
        %v3932 = vpop.xlane.xlu0 %3931
        %v3933 = vsel %vm668, %v3913, 0.0
        %3934 = vadd.xlane.f32.xlu0 %v3933
        %v3935 = vpop.xlane.xlu0 %3934
        %v3936 = vsel %vm668, %v3914, 0.0
        %3937 = vadd.xlane.f32.xlu0 %v3936
        %v3938 = vpop.xlane.xlu0 %3937
        %v3939 = vsel %vm668, %v3915, 0.0
        %3940 = vadd.xlane.f32.xlu0 %v3939
        %v3941 = vpop.xlane.xlu0 %3940
        %v3942 = vsel %vm668, %v3916, 0.0
        %3943 = vadd.xlane.f32.xlu0 %v3942
        %v3944 = vpop.xlane.xlu0 %3943
        %v3945 = vsel %vm668, %v3917, 0.0
        %3946 = vadd.xlane.f32.xlu0 %v3945
        %v3947 = vpop.xlane.xlu0 %3946
        %v3948 = vsel %vm668, %v3918, 0.0
        %3949 = vadd.xlane.f32.xlu0 %v3948
        %v3950 = vpop.xlane.xlu0 %3949
        %v3951 = vsel %vm668, %v3919, 0.0
        %3952 = vadd.xlane.f32.xlu0 %v3951
        %v3953 = vpop.xlane.xlu0 %3952
        %v3954 = vsel %vm668, %v3920, 0.0
        %3955 = vadd.xlane.f32.xlu0 %v3954
        %v3956 = vpop.xlane.xlu0 %3955
        %v3957 = vsel %vm668, %v3921, 0.0
        %3958 = vadd.xlane.f32.xlu0 %v3957
        %v3959 = vpop.xlane.xlu0 %3958
        %v3960 = vsel %vm668, %v3922, 0.0
        %3961 = vadd.xlane.f32.xlu0 %v3960
        %v3962 = vpop.xlane.xlu0 %3961
        %v3963 = vsel %vm668, %v3923, 0.0
        %3964 = vadd.xlane.f32.xlu0 %v3963
        %v3965 = vpop.xlane.xlu0 %3964
        %v3966 = vsel %vm668, %v3924, 0.0
        %3967 = vadd.xlane.f32.xlu0 %v3966
        %v3968 = vpop.xlane.xlu0 %3967
        %v3969 = vsel %vm668, %v3925, 0.0
        %3970 = vadd.xlane.f32.xlu0 %v3969
        %v3971 = vpop.xlane.xlu0 %3970
        %v3972 = vsel %vm668, %v3926, 0.0
        %3973 = vadd.xlane.f32.xlu0 %v3972
        %v3974 = vpop.xlane.xlu0 %3973
        %vm3975 = vcmp.eq.s32.totalorder %v2325, 12
        %v3976 = vsel %vm3975, %v3929, 0.0
        %v3977 = vsel %vm3975, %v3932, 0.0
        %v3978 = vsel %vm3975, %v3935, 0.0
        %v3979 = vsel %vm3975, %v3938, 0.0
        %v3980 = vsel %vm3975, %v3941, 0.0
        %v3981 = vsel %vm3975, %v3944, 0.0
        %v3982 = vsel %vm3975, %v3947, 0.0
        %v3983 = vsel %vm3975, %v3950, 0.0
        %v3984 = vsel %vm3975, %v3953, 0.0
        %v3985 = vsel %vm3975, %v3956, 0.0
        %v3986 = vsel %vm3975, %v3959, 0.0
        %v3987 = vsel %vm3975, %v3962, 0.0
        %v3988 = vsel %vm3975, %v3965, 0.0
        %v3989 = vsel %vm3975, %v3968, 0.0
        %v3990 = vsel %vm3975, %v3971, 0.0
        %v3991 = vsel %vm3975, %v3974, 0.0
        %v3992 = vadd.f32 %v3894, %v3976
        %v3993 = vadd.f32 %v3895, %v3977
        %v3994 = vadd.f32 %v3896, %v3978
        %v3995 = vadd.f32 %v3897, %v3979
        %v3996 = vadd.f32 %v3898, %v3980
        %v3997 = vadd.f32 %v3899, %v3981
        %v3998 = vadd.f32 %v3900, %v3982
        %v3999 = vadd.f32 %v3901, %v3983
        %v4000 = vadd.f32 %v3902, %v3984
        %v4001 = vadd.f32 %v3903, %v3985
        %v4002 = vadd.f32 %v3904, %v3986
        %v4003 = vadd.f32 %v3905, %v3987
        %v4004 = vadd.f32 %v3906, %v3988
        %v4005 = vadd.f32 %v3907, %v3989
        %v4006 = vadd.f32 %v3908, %v3990
        %v4007 = vadd.f32 %v3909, %v3991
        %v4008 = vperm.slane %v2322, 5
        %4010 = vrot.lane.b32.xlu0 %v4008, 64
        %v4011 = vpop.permute.xlu0 %4010
        %v4013 = vmul.f32 %v2135, %v4011
        %v4014 = vmul.f32 %v2147, %v4011
        %v4015 = vmul.f32 %v2159, %v4011
        %v4016 = vmul.f32 %v2171, %v4011
        %v4017 = vmul.f32 %v2183, %v4011
        %v4018 = vmul.f32 %v2195, %v4011
        %v4019 = vmul.f32 %v2207, %v4011
        %v4020 = vmul.f32 %v2219, %v4011
        %v4021 = vmul.f32 %v2231, %v4011
        %v4022 = vmul.f32 %v2243, %v4011
        %v4023 = vmul.f32 %v2255, %v4011
        %v4024 = vmul.f32 %v2267, %v4011
        %v4025 = vmul.f32 %v2279, %v4011
        %v4026 = vmul.f32 %v2291, %v4011
        %v4027 = vmul.f32 %v2303, %v4011
        %v4028 = vmul.f32 %v2315, %v4011
        %4045 = vrot.lane.b32.xlu0 %v4013, 64
        %v4046 = vpop.permute.xlu0 %4045
        %4047 = vrot.lane.b32.xlu0 %v4014, 64
        %v4048 = vpop.permute.xlu0 %4047
        %4049 = vrot.lane.b32.xlu0 %v4015, 64
        %v4050 = vpop.permute.xlu0 %4049
        %4051 = vrot.lane.b32.xlu0 %v4016, 64
        %v4052 = vpop.permute.xlu0 %4051
        %4053 = vrot.lane.b32.xlu0 %v4017, 64
        %v4054 = vpop.permute.xlu0 %4053
        %4055 = vrot.lane.b32.xlu0 %v4018, 64
        %v4056 = vpop.permute.xlu0 %4055
        %4057 = vrot.lane.b32.xlu0 %v4019, 64
        %v4058 = vpop.permute.xlu0 %4057
        %4059 = vrot.lane.b32.xlu0 %v4020, 64
        %v4060 = vpop.permute.xlu0 %4059
        %4061 = vrot.lane.b32.xlu0 %v4021, 64
        %v4062 = vpop.permute.xlu0 %4061
        %4063 = vrot.lane.b32.xlu0 %v4022, 64
        %v4064 = vpop.permute.xlu0 %4063
        %4065 = vrot.lane.b32.xlu0 %v4023, 64
        %v4066 = vpop.permute.xlu0 %4065
        %4067 = vrot.lane.b32.xlu0 %v4024, 64
        %v4068 = vpop.permute.xlu0 %4067
        %4069 = vrot.lane.b32.xlu0 %v4025, 64
        %v4070 = vpop.permute.xlu0 %4069
        %4071 = vrot.lane.b32.xlu0 %v4026, 64
        %v4072 = vpop.permute.xlu0 %4071
        %4073 = vrot.lane.b32.xlu0 %v4027, 64
        %v4074 = vpop.permute.xlu0 %4073
        %4075 = vrot.lane.b32.xlu0 %v4028, 64
        %v4076 = vpop.permute.xlu0 %4075
        %v4093 = vsel %vm668, %v4046, 0.0
        %4094 = vadd.xlane.f32.xlu0 %v4093
        %v4095 = vpop.xlane.xlu0 %4094
        %v4096 = vsel %vm668, %v4048, 0.0
        %4097 = vadd.xlane.f32.xlu0 %v4096
        %v4098 = vpop.xlane.xlu0 %4097
        %v4099 = vsel %vm668, %v4050, 0.0
        %4100 = vadd.xlane.f32.xlu0 %v4099
        %v4101 = vpop.xlane.xlu0 %4100
        %v4102 = vsel %vm668, %v4052, 0.0
        %4103 = vadd.xlane.f32.xlu0 %v4102
        %v4104 = vpop.xlane.xlu0 %4103
        %v4105 = vsel %vm668, %v4054, 0.0
        %4106 = vadd.xlane.f32.xlu0 %v4105
        %v4107 = vpop.xlane.xlu0 %4106
        %v4108 = vsel %vm668, %v4056, 0.0
        %4109 = vadd.xlane.f32.xlu0 %v4108
        %v4110 = vpop.xlane.xlu0 %4109
        %v4111 = vsel %vm668, %v4058, 0.0
        %4112 = vadd.xlane.f32.xlu0 %v4111
        %v4113 = vpop.xlane.xlu0 %4112
        %v4114 = vsel %vm668, %v4060, 0.0
        %4115 = vadd.xlane.f32.xlu0 %v4114
        %v4116 = vpop.xlane.xlu0 %4115
        %v4117 = vsel %vm668, %v4062, 0.0
        %4118 = vadd.xlane.f32.xlu0 %v4117
        %v4119 = vpop.xlane.xlu0 %4118
        %v4120 = vsel %vm668, %v4064, 0.0
        %4121 = vadd.xlane.f32.xlu0 %v4120
        %v4122 = vpop.xlane.xlu0 %4121
        %v4123 = vsel %vm668, %v4066, 0.0
        %4124 = vadd.xlane.f32.xlu0 %v4123
        %v4125 = vpop.xlane.xlu0 %4124
        %v4126 = vsel %vm668, %v4068, 0.0
        %4127 = vadd.xlane.f32.xlu0 %v4126
        %v4128 = vpop.xlane.xlu0 %4127
        %v4129 = vsel %vm668, %v4070, 0.0
        %4130 = vadd.xlane.f32.xlu0 %v4129
        %v4131 = vpop.xlane.xlu0 %4130
        %v4132 = vsel %vm668, %v4072, 0.0
        %4133 = vadd.xlane.f32.xlu0 %v4132
        %v4134 = vpop.xlane.xlu0 %4133
        %v4135 = vsel %vm668, %v4074, 0.0
        %4136 = vadd.xlane.f32.xlu0 %v4135
        %v4137 = vpop.xlane.xlu0 %4136
        %v4138 = vsel %vm668, %v4076, 0.0
        %4139 = vadd.xlane.f32.xlu0 %v4138
        %v4140 = vpop.xlane.xlu0 %4139
        %vm4141 = vcmp.eq.s32.totalorder %v2325, 13
        %v4142 = vsel %vm4141, %v4095, 0.0
        %v4143 = vsel %vm4141, %v4098, 0.0
        %v4144 = vsel %vm4141, %v4101, 0.0
        %v4145 = vsel %vm4141, %v4104, 0.0
        %v4146 = vsel %vm4141, %v4107, 0.0
        %v4147 = vsel %vm4141, %v4110, 0.0
        %v4148 = vsel %vm4141, %v4113, 0.0
        %v4149 = vsel %vm4141, %v4116, 0.0
        %v4150 = vsel %vm4141, %v4119, 0.0
        %v4151 = vsel %vm4141, %v4122, 0.0
        %v4152 = vsel %vm4141, %v4125, 0.0
        %v4153 = vsel %vm4141, %v4128, 0.0
        %v4154 = vsel %vm4141, %v4131, 0.0
        %v4155 = vsel %vm4141, %v4134, 0.0
        %v4156 = vsel %vm4141, %v4137, 0.0
        %v4157 = vsel %vm4141, %v4140, 0.0
        %v4158 = vadd.f32 %v3992, %v4142
        %v4159 = vadd.f32 %v3993, %v4143
        %v4160 = vadd.f32 %v3994, %v4144
        %v4161 = vadd.f32 %v3995, %v4145
        %v4162 = vadd.f32 %v3996, %v4146
        %v4163 = vadd.f32 %v3997, %v4147
        %v4164 = vadd.f32 %v3998, %v4148
        %v4165 = vadd.f32 %v3999, %v4149
        %v4166 = vadd.f32 %v4000, %v4150
        %v4167 = vadd.f32 %v4001, %v4151
        %v4168 = vadd.f32 %v4002, %v4152
        %v4169 = vadd.f32 %v4003, %v4153
        %v4170 = vadd.f32 %v4004, %v4154
        %v4171 = vadd.f32 %v4005, %v4155
        %v4172 = vadd.f32 %v4006, %v4156
        %v4173 = vadd.f32 %v4007, %v4157
        %v4174 = vperm.slane %v2322, 6
        %v4175 = vmul.f32 %v2136, %v4174
        %v4176 = vmul.f32 %v2148, %v4174
        %v4177 = vmul.f32 %v2160, %v4174
        %v4178 = vmul.f32 %v2172, %v4174
        %v4179 = vmul.f32 %v2184, %v4174
        %v4180 = vmul.f32 %v2196, %v4174
        %v4181 = vmul.f32 %v2208, %v4174
        %v4182 = vmul.f32 %v2220, %v4174
        %v4183 = vmul.f32 %v2232, %v4174
        %v4184 = vmul.f32 %v2244, %v4174
        %v4185 = vmul.f32 %v2256, %v4174
        %v4186 = vmul.f32 %v2268, %v4174
        %v4187 = vmul.f32 %v2280, %v4174
        %v4188 = vmul.f32 %v2292, %v4174
        %v4189 = vmul.f32 %v2304, %v4174
        %v4190 = vmul.f32 %v2316, %v4174
        %v4191 = vsel %vm668, %v4175, 0.0
        %4192 = vadd.xlane.f32.xlu0 %v4191
        %v4193 = vpop.xlane.xlu0 %4192
        %v4194 = vsel %vm668, %v4176, 0.0
        %4195 = vadd.xlane.f32.xlu0 %v4194
        %v4196 = vpop.xlane.xlu0 %4195
        %v4197 = vsel %vm668, %v4177, 0.0
        %4198 = vadd.xlane.f32.xlu0 %v4197
        %v4199 = vpop.xlane.xlu0 %4198
        %v4200 = vsel %vm668, %v4178, 0.0
        %4201 = vadd.xlane.f32.xlu0 %v4200
        %v4202 = vpop.xlane.xlu0 %4201
        %v4203 = vsel %vm668, %v4179, 0.0
        %4204 = vadd.xlane.f32.xlu0 %v4203
        %v4205 = vpop.xlane.xlu0 %4204
        %v4206 = vsel %vm668, %v4180, 0.0
        %4207 = vadd.xlane.f32.xlu0 %v4206
        %v4208 = vpop.xlane.xlu0 %4207
        %v4209 = vsel %vm668, %v4181, 0.0
        %4210 = vadd.xlane.f32.xlu0 %v4209
        %v4211 = vpop.xlane.xlu0 %4210
        %v4212 = vsel %vm668, %v4182, 0.0
        %4213 = vadd.xlane.f32.xlu0 %v4212
        %v4214 = vpop.xlane.xlu0 %4213
        %v4215 = vsel %vm668, %v4183, 0.0
        %4216 = vadd.xlane.f32.xlu0 %v4215
        %v4217 = vpop.xlane.xlu0 %4216
        %v4218 = vsel %vm668, %v4184, 0.0
        %4219 = vadd.xlane.f32.xlu0 %v4218
        %v4220 = vpop.xlane.xlu0 %4219
        %v4221 = vsel %vm668, %v4185, 0.0
        %4222 = vadd.xlane.f32.xlu0 %v4221
        %v4223 = vpop.xlane.xlu0 %4222
        %v4224 = vsel %vm668, %v4186, 0.0
        %4225 = vadd.xlane.f32.xlu0 %v4224
        %v4226 = vpop.xlane.xlu0 %4225
        %v4227 = vsel %vm668, %v4187, 0.0
        %4228 = vadd.xlane.f32.xlu0 %v4227
        %v4229 = vpop.xlane.xlu0 %4228
        %v4230 = vsel %vm668, %v4188, 0.0
        %4231 = vadd.xlane.f32.xlu0 %v4230
        %v4232 = vpop.xlane.xlu0 %4231
        %v4233 = vsel %vm668, %v4189, 0.0
        %4234 = vadd.xlane.f32.xlu0 %v4233
        %v4235 = vpop.xlane.xlu0 %4234
        %v4236 = vsel %vm668, %v4190, 0.0
        %4237 = vadd.xlane.f32.xlu0 %v4236
        %v4238 = vpop.xlane.xlu0 %4237
        %vm4239 = vcmp.eq.s32.totalorder %v2325, 14
        %v4240 = vsel %vm4239, %v4193, 0.0
        %v4241 = vsel %vm4239, %v4196, 0.0
        %v4242 = vsel %vm4239, %v4199, 0.0
        %v4243 = vsel %vm4239, %v4202, 0.0
        %v4244 = vsel %vm4239, %v4205, 0.0
        %v4245 = vsel %vm4239, %v4208, 0.0
        %v4246 = vsel %vm4239, %v4211, 0.0
        %v4247 = vsel %vm4239, %v4214, 0.0
        %v4248 = vsel %vm4239, %v4217, 0.0
        %v4249 = vsel %vm4239, %v4220, 0.0
        %v4250 = vsel %vm4239, %v4223, 0.0
        %v4251 = vsel %vm4239, %v4226, 0.0
        %v4252 = vsel %vm4239, %v4229, 0.0
        %v4253 = vsel %vm4239, %v4232, 0.0
        %v4254 = vsel %vm4239, %v4235, 0.0
        %v4255 = vsel %vm4239, %v4238, 0.0
        %v4256 = vadd.f32 %v4158, %v4240
        %v4257 = vadd.f32 %v4159, %v4241
        %v4258 = vadd.f32 %v4160, %v4242
        %v4259 = vadd.f32 %v4161, %v4243
        %v4260 = vadd.f32 %v4162, %v4244
        %v4261 = vadd.f32 %v4163, %v4245
        %v4262 = vadd.f32 %v4164, %v4246
        %v4263 = vadd.f32 %v4165, %v4247
        %v4264 = vadd.f32 %v4166, %v4248
        %v4265 = vadd.f32 %v4167, %v4249
        %v4266 = vadd.f32 %v4168, %v4250
        %v4267 = vadd.f32 %v4169, %v4251
        %v4268 = vadd.f32 %v4170, %v4252
        %v4269 = vadd.f32 %v4171, %v4253
        %v4270 = vadd.f32 %v4172, %v4254
        %v4271 = vadd.f32 %v4173, %v4255
        %v4272 = vperm.slane %v2322, 7
        %4274 = vrot.lane.b32.xlu0 %v4272, 64
        %v4275 = vpop.permute.xlu0 %4274
        %v4277 = vmul.f32 %v2136, %v4275
        %v4278 = vmul.f32 %v2148, %v4275
        %v4279 = vmul.f32 %v2160, %v4275
        %v4280 = vmul.f32 %v2172, %v4275
        %v4281 = vmul.f32 %v2184, %v4275
        %v4282 = vmul.f32 %v2196, %v4275
        %v4283 = vmul.f32 %v2208, %v4275
        %v4284 = vmul.f32 %v2220, %v4275
        %v4285 = vmul.f32 %v2232, %v4275
        %v4286 = vmul.f32 %v2244, %v4275
        %v4287 = vmul.f32 %v2256, %v4275
        %v4288 = vmul.f32 %v2268, %v4275
        %v4289 = vmul.f32 %v2280, %v4275
        %v4290 = vmul.f32 %v2292, %v4275
        %v4291 = vmul.f32 %v2304, %v4275
        %v4292 = vmul.f32 %v2316, %v4275
        %4309 = vrot.lane.b32.xlu0 %v4277, 64
        %v4310 = vpop.permute.xlu0 %4309
        %4311 = vrot.lane.b32.xlu0 %v4278, 64
        %v4312 = vpop.permute.xlu0 %4311
        %4313 = vrot.lane.b32.xlu0 %v4279, 64
        %v4314 = vpop.permute.xlu0 %4313
        %4315 = vrot.lane.b32.xlu0 %v4280, 64
        %v4316 = vpop.permute.xlu0 %4315
        %4317 = vrot.lane.b32.xlu0 %v4281, 64
        %v4318 = vpop.permute.xlu0 %4317
        %4319 = vrot.lane.b32.xlu0 %v4282, 64
        %v4320 = vpop.permute.xlu0 %4319
        %4321 = vrot.lane.b32.xlu0 %v4283, 64
        %v4322 = vpop.permute.xlu0 %4321
        %4323 = vrot.lane.b32.xlu0 %v4284, 64
        %v4324 = vpop.permute.xlu0 %4323
        %4325 = vrot.lane.b32.xlu0 %v4285, 64
        %v4326 = vpop.permute.xlu0 %4325
        %4327 = vrot.lane.b32.xlu0 %v4286, 64
        %v4328 = vpop.permute.xlu0 %4327
        %4329 = vrot.lane.b32.xlu0 %v4287, 64
        %v4330 = vpop.permute.xlu0 %4329
        %4331 = vrot.lane.b32.xlu0 %v4288, 64
        %v4332 = vpop.permute.xlu0 %4331
        %4333 = vrot.lane.b32.xlu0 %v4289, 64
        %v4334 = vpop.permute.xlu0 %4333
        %4335 = vrot.lane.b32.xlu0 %v4290, 64
        %v4336 = vpop.permute.xlu0 %4335
        %4337 = vrot.lane.b32.xlu0 %v4291, 64
        %v4338 = vpop.permute.xlu0 %4337
        %4339 = vrot.lane.b32.xlu0 %v4292, 64
        %v4340 = vpop.permute.xlu0 %4339
        %v4357 = vsel %vm668, %v4310, 0.0
        %4358 = vadd.xlane.f32.xlu0 %v4357
        %v4359 = vpop.xlane.xlu0 %4358
        %v4360 = vsel %vm668, %v4312, 0.0
        %4361 = vadd.xlane.f32.xlu0 %v4360
        %v4362 = vpop.xlane.xlu0 %4361
        %v4363 = vsel %vm668, %v4314, 0.0
        %4364 = vadd.xlane.f32.xlu0 %v4363
        %v4365 = vpop.xlane.xlu0 %4364
        %v4366 = vsel %vm668, %v4316, 0.0
        %4367 = vadd.xlane.f32.xlu0 %v4366
        %v4368 = vpop.xlane.xlu0 %4367
        %v4369 = vsel %vm668, %v4318, 0.0
        %4370 = vadd.xlane.f32.xlu0 %v4369
        %v4371 = vpop.xlane.xlu0 %4370
        %v4372 = vsel %vm668, %v4320, 0.0
        %4373 = vadd.xlane.f32.xlu0 %v4372
        %v4374 = vpop.xlane.xlu0 %4373
        %v4375 = vsel %vm668, %v4322, 0.0
        %4376 = vadd.xlane.f32.xlu0 %v4375
        %v4377 = vpop.xlane.xlu0 %4376
        %v4378 = vsel %vm668, %v4324, 0.0
        %4379 = vadd.xlane.f32.xlu0 %v4378
        %v4380 = vpop.xlane.xlu0 %4379
        %v4381 = vsel %vm668, %v4326, 0.0
        %4382 = vadd.xlane.f32.xlu0 %v4381
        %v4383 = vpop.xlane.xlu0 %4382
        %v4384 = vsel %vm668, %v4328, 0.0
        %4385 = vadd.xlane.f32.xlu0 %v4384
        %v4386 = vpop.xlane.xlu0 %4385
        %v4387 = vsel %vm668, %v4330, 0.0
        %4388 = vadd.xlane.f32.xlu0 %v4387
        %v4389 = vpop.xlane.xlu0 %4388
        %v4390 = vsel %vm668, %v4332, 0.0
        %4391 = vadd.xlane.f32.xlu0 %v4390
        %v4392 = vpop.xlane.xlu0 %4391
        %v4393 = vsel %vm668, %v4334, 0.0
        %4394 = vadd.xlane.f32.xlu0 %v4393
        %v4395 = vpop.xlane.xlu0 %4394
        %v4396 = vsel %vm668, %v4336, 0.0
        %4397 = vadd.xlane.f32.xlu0 %v4396
        %v4398 = vpop.xlane.xlu0 %4397
        %v4399 = vsel %vm668, %v4338, 0.0
        %4400 = vadd.xlane.f32.xlu0 %v4399
        %v4401 = vpop.xlane.xlu0 %4400
        %v4402 = vsel %vm668, %v4340, 0.0
        %4403 = vadd.xlane.f32.xlu0 %v4402
        %v4404 = vpop.xlane.xlu0 %4403
        %vm4405 = vcmp.eq.s32.totalorder %v2325, 15
        %v4406 = vsel %vm4405, %v4359, 0.0
        %v4407 = vsel %vm4405, %v4362, 0.0
        %v4408 = vsel %vm4405, %v4365, 0.0
        %v4409 = vsel %vm4405, %v4368, 0.0
        %v4410 = vsel %vm4405, %v4371, 0.0
        %v4411 = vsel %vm4405, %v4374, 0.0
        %v4412 = vsel %vm4405, %v4377, 0.0
        %v4413 = vsel %vm4405, %v4380, 0.0
        %v4414 = vsel %vm4405, %v4383, 0.0
        %v4415 = vsel %vm4405, %v4386, 0.0
        %v4416 = vsel %vm4405, %v4389, 0.0
        %v4417 = vsel %vm4405, %v4392, 0.0
        %v4418 = vsel %vm4405, %v4395, 0.0
        %v4419 = vsel %vm4405, %v4398, 0.0
        %v4420 = vsel %vm4405, %v4401, 0.0
        %v4421 = vsel %vm4405, %v4404, 0.0
        %v4422 = vadd.f32 %v4256, %v4406
        %v4423 = vadd.f32 %v4257, %v4407
        %v4424 = vadd.f32 %v4258, %v4408
        %v4425 = vadd.f32 %v4259, %v4409
        %v4426 = vadd.f32 %v4260, %v4410
        %v4427 = vadd.f32 %v4261, %v4411
        %v4428 = vadd.f32 %v4262, %v4412
        %v4429 = vadd.f32 %v4263, %v4413
        %v4430 = vadd.f32 %v4264, %v4414
        %v4431 = vadd.f32 %v4265, %v4415
        %v4432 = vadd.f32 %v4266, %v4416
        %v4433 = vadd.f32 %v4267, %v4417
        %v4434 = vadd.f32 %v4268, %v4418
        %v4435 = vadd.f32 %v4269, %v4419
        %v4436 = vadd.f32 %v4270, %v4420
        %v4437 = vadd.f32 %v4271, %v4421
        %v4438 = vperm.slane %v2323, 0
        %v4439 = vmul.f32 %v2137, %v4438
        %v4440 = vmul.f32 %v2149, %v4438
        %v4441 = vmul.f32 %v2161, %v4438
        %v4442 = vmul.f32 %v2173, %v4438
        %v4443 = vmul.f32 %v2185, %v4438
        %v4444 = vmul.f32 %v2197, %v4438
        %v4445 = vmul.f32 %v2209, %v4438
        %v4446 = vmul.f32 %v2221, %v4438
        %v4447 = vmul.f32 %v2233, %v4438
        %v4448 = vmul.f32 %v2245, %v4438
        %v4449 = vmul.f32 %v2257, %v4438
        %v4450 = vmul.f32 %v2269, %v4438
        %v4451 = vmul.f32 %v2281, %v4438
        %v4452 = vmul.f32 %v2293, %v4438
        %v4453 = vmul.f32 %v2305, %v4438
        %v4454 = vmul.f32 %v2317, %v4438
        %v4455 = vsel %vm668, %v4439, 0.0
        %4456 = vadd.xlane.f32.xlu0 %v4455
        %v4457 = vpop.xlane.xlu0 %4456
        %v4458 = vsel %vm668, %v4440, 0.0
        %4459 = vadd.xlane.f32.xlu0 %v4458
        %v4460 = vpop.xlane.xlu0 %4459
        %v4461 = vsel %vm668, %v4441, 0.0
        %4462 = vadd.xlane.f32.xlu0 %v4461
        %v4463 = vpop.xlane.xlu0 %4462
        %v4464 = vsel %vm668, %v4442, 0.0
        %4465 = vadd.xlane.f32.xlu0 %v4464
        %v4466 = vpop.xlane.xlu0 %4465
        %v4467 = vsel %vm668, %v4443, 0.0
        %4468 = vadd.xlane.f32.xlu0 %v4467
        %v4469 = vpop.xlane.xlu0 %4468
        %v4470 = vsel %vm668, %v4444, 0.0
        %4471 = vadd.xlane.f32.xlu0 %v4470
        %v4472 = vpop.xlane.xlu0 %4471
        %v4473 = vsel %vm668, %v4445, 0.0
        %4474 = vadd.xlane.f32.xlu0 %v4473
        %v4475 = vpop.xlane.xlu0 %4474
        %v4476 = vsel %vm668, %v4446, 0.0
        %4477 = vadd.xlane.f32.xlu0 %v4476
        %v4478 = vpop.xlane.xlu0 %4477
        %v4479 = vsel %vm668, %v4447, 0.0
        %4480 = vadd.xlane.f32.xlu0 %v4479
        %v4481 = vpop.xlane.xlu0 %4480
        %v4482 = vsel %vm668, %v4448, 0.0
        %4483 = vadd.xlane.f32.xlu0 %v4482
        %v4484 = vpop.xlane.xlu0 %4483
        %v4485 = vsel %vm668, %v4449, 0.0
        %4486 = vadd.xlane.f32.xlu0 %v4485
        %v4487 = vpop.xlane.xlu0 %4486
        %v4488 = vsel %vm668, %v4450, 0.0
        %4489 = vadd.xlane.f32.xlu0 %v4488
        %v4490 = vpop.xlane.xlu0 %4489
        %v4491 = vsel %vm668, %v4451, 0.0
        %4492 = vadd.xlane.f32.xlu0 %v4491
        %v4493 = vpop.xlane.xlu0 %4492
        %v4494 = vsel %vm668, %v4452, 0.0
        %4495 = vadd.xlane.f32.xlu0 %v4494
        %v4496 = vpop.xlane.xlu0 %4495
        %v4497 = vsel %vm668, %v4453, 0.0
        %4498 = vadd.xlane.f32.xlu0 %v4497
        %v4499 = vpop.xlane.xlu0 %4498
        %v4500 = vsel %vm668, %v4454, 0.0
        %4501 = vadd.xlane.f32.xlu0 %v4500
        %v4502 = vpop.xlane.xlu0 %4501
        %vm4503 = vcmp.eq.s32.totalorder %v2325, 16
        %v4504 = vsel %vm4503, %v4457, 0.0
        %v4505 = vsel %vm4503, %v4460, 0.0
        %v4506 = vsel %vm4503, %v4463, 0.0
        %v4507 = vsel %vm4503, %v4466, 0.0
        %v4508 = vsel %vm4503, %v4469, 0.0
        %v4509 = vsel %vm4503, %v4472, 0.0
        %v4510 = vsel %vm4503, %v4475, 0.0
        %v4511 = vsel %vm4503, %v4478, 0.0
        %v4512 = vsel %vm4503, %v4481, 0.0
        %v4513 = vsel %vm4503, %v4484, 0.0
        %v4514 = vsel %vm4503, %v4487, 0.0
        %v4515 = vsel %vm4503, %v4490, 0.0
        %v4516 = vsel %vm4503, %v4493, 0.0
        %v4517 = vsel %vm4503, %v4496, 0.0
        %v4518 = vsel %vm4503, %v4499, 0.0
        %v4519 = vsel %vm4503, %v4502, 0.0
        %v4520 = vadd.f32 %v4422, %v4504
        %v4521 = vadd.f32 %v4423, %v4505
        %v4522 = vadd.f32 %v4424, %v4506
        %v4523 = vadd.f32 %v4425, %v4507
        %v4524 = vadd.f32 %v4426, %v4508
        %v4525 = vadd.f32 %v4427, %v4509
        %v4526 = vadd.f32 %v4428, %v4510
        %v4527 = vadd.f32 %v4429, %v4511
        %v4528 = vadd.f32 %v4430, %v4512
        %v4529 = vadd.f32 %v4431, %v4513
        %v4530 = vadd.f32 %v4432, %v4514
        %v4531 = vadd.f32 %v4433, %v4515
        %v4532 = vadd.f32 %v4434, %v4516
        %v4533 = vadd.f32 %v4435, %v4517
        %v4534 = vadd.f32 %v4436, %v4518
        %v4535 = vadd.f32 %v4437, %v4519
        %v4536 = vperm.slane %v2323, 1
        %4538 = vrot.lane.b32.xlu0 %v4536, 64
        %v4539 = vpop.permute.xlu0 %4538
        %v4541 = vmul.f32 %v2137, %v4539
        %v4542 = vmul.f32 %v2149, %v4539
        %v4543 = vmul.f32 %v2161, %v4539
        %v4544 = vmul.f32 %v2173, %v4539
        %v4545 = vmul.f32 %v2185, %v4539
        %v4546 = vmul.f32 %v2197, %v4539
        %v4547 = vmul.f32 %v2209, %v4539
        %v4548 = vmul.f32 %v2221, %v4539
        %v4549 = vmul.f32 %v2233, %v4539
        %v4550 = vmul.f32 %v2245, %v4539
        %v4551 = vmul.f32 %v2257, %v4539
        %v4552 = vmul.f32 %v2269, %v4539
        %v4553 = vmul.f32 %v2281, %v4539
        %v4554 = vmul.f32 %v2293, %v4539
        %v4555 = vmul.f32 %v2305, %v4539
        %v4556 = vmul.f32 %v2317, %v4539
        %4573 = vrot.lane.b32.xlu0 %v4541, 64
        %v4574 = vpop.permute.xlu0 %4573
        %4575 = vrot.lane.b32.xlu0 %v4542, 64
        %v4576 = vpop.permute.xlu0 %4575
        %4577 = vrot.lane.b32.xlu0 %v4543, 64
        %v4578 = vpop.permute.xlu0 %4577
        %4579 = vrot.lane.b32.xlu0 %v4544, 64
        %v4580 = vpop.permute.xlu0 %4579
        %4581 = vrot.lane.b32.xlu0 %v4545, 64
        %v4582 = vpop.permute.xlu0 %4581
        %4583 = vrot.lane.b32.xlu0 %v4546, 64
        %v4584 = vpop.permute.xlu0 %4583
        %4585 = vrot.lane.b32.xlu0 %v4547, 64
        %v4586 = vpop.permute.xlu0 %4585
        %4587 = vrot.lane.b32.xlu0 %v4548, 64
        %v4588 = vpop.permute.xlu0 %4587
        %4589 = vrot.lane.b32.xlu0 %v4549, 64
        %v4590 = vpop.permute.xlu0 %4589
        %4591 = vrot.lane.b32.xlu0 %v4550, 64
        %v4592 = vpop.permute.xlu0 %4591
        %4593 = vrot.lane.b32.xlu0 %v4551, 64
        %v4594 = vpop.permute.xlu0 %4593
        %4595 = vrot.lane.b32.xlu0 %v4552, 64
        %v4596 = vpop.permute.xlu0 %4595
        %4597 = vrot.lane.b32.xlu0 %v4553, 64
        %v4598 = vpop.permute.xlu0 %4597
        %4599 = vrot.lane.b32.xlu0 %v4554, 64
        %v4600 = vpop.permute.xlu0 %4599
        %4601 = vrot.lane.b32.xlu0 %v4555, 64
        %v4602 = vpop.permute.xlu0 %4601
        %4603 = vrot.lane.b32.xlu0 %v4556, 64
        %v4604 = vpop.permute.xlu0 %4603
        %v4621 = vsel %vm668, %v4574, 0.0
        %4622 = vadd.xlane.f32.xlu0 %v4621
        %v4623 = vpop.xlane.xlu0 %4622
        %v4624 = vsel %vm668, %v4576, 0.0
        %4625 = vadd.xlane.f32.xlu0 %v4624
        %v4626 = vpop.xlane.xlu0 %4625
        %v4627 = vsel %vm668, %v4578, 0.0
        %4628 = vadd.xlane.f32.xlu0 %v4627
        %v4629 = vpop.xlane.xlu0 %4628
        %v4630 = vsel %vm668, %v4580, 0.0
        %4631 = vadd.xlane.f32.xlu0 %v4630
        %v4632 = vpop.xlane.xlu0 %4631
        %v4633 = vsel %vm668, %v4582, 0.0
        %4634 = vadd.xlane.f32.xlu0 %v4633
        %v4635 = vpop.xlane.xlu0 %4634
        %v4636 = vsel %vm668, %v4584, 0.0
        %4637 = vadd.xlane.f32.xlu0 %v4636
        %v4638 = vpop.xlane.xlu0 %4637
        %v4639 = vsel %vm668, %v4586, 0.0
        %4640 = vadd.xlane.f32.xlu0 %v4639
        %v4641 = vpop.xlane.xlu0 %4640
        %v4642 = vsel %vm668, %v4588, 0.0
        %4643 = vadd.xlane.f32.xlu0 %v4642
        %v4644 = vpop.xlane.xlu0 %4643
        %v4645 = vsel %vm668, %v4590, 0.0
        %4646 = vadd.xlane.f32.xlu0 %v4645
        %v4647 = vpop.xlane.xlu0 %4646
        %v4648 = vsel %vm668, %v4592, 0.0
        %4649 = vadd.xlane.f32.xlu0 %v4648
        %v4650 = vpop.xlane.xlu0 %4649
        %v4651 = vsel %vm668, %v4594, 0.0
        %4652 = vadd.xlane.f32.xlu0 %v4651
        %v4653 = vpop.xlane.xlu0 %4652
        %v4654 = vsel %vm668, %v4596, 0.0
        %4655 = vadd.xlane.f32.xlu0 %v4654
        %v4656 = vpop.xlane.xlu0 %4655
        %v4657 = vsel %vm668, %v4598, 0.0
        %4658 = vadd.xlane.f32.xlu0 %v4657
        %v4659 = vpop.xlane.xlu0 %4658
        %v4660 = vsel %vm668, %v4600, 0.0
        %4661 = vadd.xlane.f32.xlu0 %v4660
        %v4662 = vpop.xlane.xlu0 %4661
        %v4663 = vsel %vm668, %v4602, 0.0
        %4664 = vadd.xlane.f32.xlu0 %v4663
        %v4665 = vpop.xlane.xlu0 %4664
        %v4666 = vsel %vm668, %v4604, 0.0
        %4667 = vadd.xlane.f32.xlu0 %v4666
        %v4668 = vpop.xlane.xlu0 %4667
        %vm4669 = vcmp.eq.s32.totalorder %v2325, 17
        %v4670 = vsel %vm4669, %v4623, 0.0
        %v4671 = vsel %vm4669, %v4626, 0.0
        %v4672 = vsel %vm4669, %v4629, 0.0
        %v4673 = vsel %vm4669, %v4632, 0.0
        %v4674 = vsel %vm4669, %v4635, 0.0
        %v4675 = vsel %vm4669, %v4638, 0.0
        %v4676 = vsel %vm4669, %v4641, 0.0
        %v4677 = vsel %vm4669, %v4644, 0.0
        %v4678 = vsel %vm4669, %v4647, 0.0
        %v4679 = vsel %vm4669, %v4650, 0.0
        %v4680 = vsel %vm4669, %v4653, 0.0
        %v4681 = vsel %vm4669, %v4656, 0.0
        %v4682 = vsel %vm4669, %v4659, 0.0
        %v4683 = vsel %vm4669, %v4662, 0.0
        %v4684 = vsel %vm4669, %v4665, 0.0
        %v4685 = vsel %vm4669, %v4668, 0.0
        %v4686 = vadd.f32 %v4520, %v4670
        %v4687 = vadd.f32 %v4521, %v4671
        %v4688 = vadd.f32 %v4522, %v4672
        %v4689 = vadd.f32 %v4523, %v4673
        %v4690 = vadd.f32 %v4524, %v4674
        %v4691 = vadd.f32 %v4525, %v4675
        %v4692 = vadd.f32 %v4526, %v4676
        %v4693 = vadd.f32 %v4527, %v4677
        %v4694 = vadd.f32 %v4528, %v4678
        %v4695 = vadd.f32 %v4529, %v4679
        %v4696 = vadd.f32 %v4530, %v4680
        %v4697 = vadd.f32 %v4531, %v4681
        %v4698 = vadd.f32 %v4532, %v4682
        %v4699 = vadd.f32 %v4533, %v4683
        %v4700 = vadd.f32 %v4534, %v4684
        %v4701 = vadd.f32 %v4535, %v4685
        %v4702 = vperm.slane %v2323, 2
        %v4703 = vmul.f32 %v2138, %v4702
        %v4704 = vmul.f32 %v2150, %v4702
        %v4705 = vmul.f32 %v2162, %v4702
        %v4706 = vmul.f32 %v2174, %v4702
        %v4707 = vmul.f32 %v2186, %v4702
        %v4708 = vmul.f32 %v2198, %v4702
        %v4709 = vmul.f32 %v2210, %v4702
        %v4710 = vmul.f32 %v2222, %v4702
        %v4711 = vmul.f32 %v2234, %v4702
        %v4712 = vmul.f32 %v2246, %v4702
        %v4713 = vmul.f32 %v2258, %v4702
        %v4714 = vmul.f32 %v2270, %v4702
        %v4715 = vmul.f32 %v2282, %v4702
        %v4716 = vmul.f32 %v2294, %v4702
        %v4717 = vmul.f32 %v2306, %v4702
        %v4718 = vmul.f32 %v2318, %v4702
        %v4719 = vsel %vm668, %v4703, 0.0
        %4720 = vadd.xlane.f32.xlu0 %v4719
        %v4721 = vpop.xlane.xlu0 %4720
        %v4722 = vsel %vm668, %v4704, 0.0
        %4723 = vadd.xlane.f32.xlu0 %v4722
        %v4724 = vpop.xlane.xlu0 %4723
        %v4725 = vsel %vm668, %v4705, 0.0
        %4726 = vadd.xlane.f32.xlu0 %v4725
        %v4727 = vpop.xlane.xlu0 %4726
        %v4728 = vsel %vm668, %v4706, 0.0
        %4729 = vadd.xlane.f32.xlu0 %v4728
        %v4730 = vpop.xlane.xlu0 %4729
        %v4731 = vsel %vm668, %v4707, 0.0
        %4732 = vadd.xlane.f32.xlu0 %v4731
        %v4733 = vpop.xlane.xlu0 %4732
        %v4734 = vsel %vm668, %v4708, 0.0
        %4735 = vadd.xlane.f32.xlu0 %v4734
        %v4736 = vpop.xlane.xlu0 %4735
        %v4737 = vsel %vm668, %v4709, 0.0
        %4738 = vadd.xlane.f32.xlu0 %v4737
        %v4739 = vpop.xlane.xlu0 %4738
        %v4740 = vsel %vm668, %v4710, 0.0
        %4741 = vadd.xlane.f32.xlu0 %v4740
        %v4742 = vpop.xlane.xlu0 %4741
        %v4743 = vsel %vm668, %v4711, 0.0
        %4744 = vadd.xlane.f32.xlu0 %v4743
        %v4745 = vpop.xlane.xlu0 %4744
        %v4746 = vsel %vm668, %v4712, 0.0
        %4747 = vadd.xlane.f32.xlu0 %v4746
        %v4748 = vpop.xlane.xlu0 %4747
        %v4749 = vsel %vm668, %v4713, 0.0
        %4750 = vadd.xlane.f32.xlu0 %v4749
        %v4751 = vpop.xlane.xlu0 %4750
        %v4752 = vsel %vm668, %v4714, 0.0
        %4753 = vadd.xlane.f32.xlu0 %v4752
        %v4754 = vpop.xlane.xlu0 %4753
        %v4755 = vsel %vm668, %v4715, 0.0
        %4756 = vadd.xlane.f32.xlu0 %v4755
        %v4757 = vpop.xlane.xlu0 %4756
        %v4758 = vsel %vm668, %v4716, 0.0
        %4759 = vadd.xlane.f32.xlu0 %v4758
        %v4760 = vpop.xlane.xlu0 %4759
        %v4761 = vsel %vm668, %v4717, 0.0
        %4762 = vadd.xlane.f32.xlu0 %v4761
        %v4763 = vpop.xlane.xlu0 %4762
        %v4764 = vsel %vm668, %v4718, 0.0
        %4765 = vadd.xlane.f32.xlu0 %v4764
        %v4766 = vpop.xlane.xlu0 %4765
        %vm4767 = vcmp.eq.s32.totalorder %v2325, 18
        %v4768 = vsel %vm4767, %v4721, 0.0
        %v4769 = vsel %vm4767, %v4724, 0.0
        %v4770 = vsel %vm4767, %v4727, 0.0
        %v4771 = vsel %vm4767, %v4730, 0.0
        %v4772 = vsel %vm4767, %v4733, 0.0
        %v4773 = vsel %vm4767, %v4736, 0.0
        %v4774 = vsel %vm4767, %v4739, 0.0
        %v4775 = vsel %vm4767, %v4742, 0.0
        %v4776 = vsel %vm4767, %v4745, 0.0
        %v4777 = vsel %vm4767, %v4748, 0.0
        %v4778 = vsel %vm4767, %v4751, 0.0
        %v4779 = vsel %vm4767, %v4754, 0.0
        %v4780 = vsel %vm4767, %v4757, 0.0
        %v4781 = vsel %vm4767, %v4760, 0.0
        %v4782 = vsel %vm4767, %v4763, 0.0
        %v4783 = vsel %vm4767, %v4766, 0.0
        %v4784 = vadd.f32 %v4686, %v4768
        %v4785 = vadd.f32 %v4687, %v4769
        %v4786 = vadd.f32 %v4688, %v4770
        %v4787 = vadd.f32 %v4689, %v4771
        %v4788 = vadd.f32 %v4690, %v4772
        %v4789 = vadd.f32 %v4691, %v4773
        %v4790 = vadd.f32 %v4692, %v4774
        %v4791 = vadd.f32 %v4693, %v4775
        %v4792 = vadd.f32 %v4694, %v4776
        %v4793 = vadd.f32 %v4695, %v4777
        %v4794 = vadd.f32 %v4696, %v4778
        %v4795 = vadd.f32 %v4697, %v4779
        %v4796 = vadd.f32 %v4698, %v4780
        %v4797 = vadd.f32 %v4699, %v4781
        %v4798 = vadd.f32 %v4700, %v4782
        %v4799 = vadd.f32 %v4701, %v4783
        %v4800 = vperm.slane %v2323, 3
        %4802 = vrot.lane.b32.xlu0 %v4800, 64
        %v4803 = vpop.permute.xlu0 %4802
        %v4805 = vmul.f32 %v2138, %v4803
        %v4806 = vmul.f32 %v2150, %v4803
        %v4807 = vmul.f32 %v2162, %v4803
        %v4808 = vmul.f32 %v2174, %v4803
        %v4809 = vmul.f32 %v2186, %v4803
        %v4810 = vmul.f32 %v2198, %v4803
        %v4811 = vmul.f32 %v2210, %v4803
        %v4812 = vmul.f32 %v2222, %v4803
        %v4813 = vmul.f32 %v2234, %v4803
        %v4814 = vmul.f32 %v2246, %v4803
        %v4815 = vmul.f32 %v2258, %v4803
        %v4816 = vmul.f32 %v2270, %v4803
        %v4817 = vmul.f32 %v2282, %v4803
        %v4818 = vmul.f32 %v2294, %v4803
        %v4819 = vmul.f32 %v2306, %v4803
        %v4820 = vmul.f32 %v2318, %v4803
        %4837 = vrot.lane.b32.xlu0 %v4805, 64
        %v4838 = vpop.permute.xlu0 %4837
        %4839 = vrot.lane.b32.xlu0 %v4806, 64
        %v4840 = vpop.permute.xlu0 %4839
        %4841 = vrot.lane.b32.xlu0 %v4807, 64
        %v4842 = vpop.permute.xlu0 %4841
        %4843 = vrot.lane.b32.xlu0 %v4808, 64
        %v4844 = vpop.permute.xlu0 %4843
        %4845 = vrot.lane.b32.xlu0 %v4809, 64
        %v4846 = vpop.permute.xlu0 %4845
        %4847 = vrot.lane.b32.xlu0 %v4810, 64
        %v4848 = vpop.permute.xlu0 %4847
        %4849 = vrot.lane.b32.xlu0 %v4811, 64
        %v4850 = vpop.permute.xlu0 %4849
        %4851 = vrot.lane.b32.xlu0 %v4812, 64
        %v4852 = vpop.permute.xlu0 %4851
        %4853 = vrot.lane.b32.xlu0 %v4813, 64
        %v4854 = vpop.permute.xlu0 %4853
        %4855 = vrot.lane.b32.xlu0 %v4814, 64
        %v4856 = vpop.permute.xlu0 %4855
        %4857 = vrot.lane.b32.xlu0 %v4815, 64
        %v4858 = vpop.permute.xlu0 %4857
        %4859 = vrot.lane.b32.xlu0 %v4816, 64
        %v4860 = vpop.permute.xlu0 %4859
        %4861 = vrot.lane.b32.xlu0 %v4817, 64
        %v4862 = vpop.permute.xlu0 %4861
        %4863 = vrot.lane.b32.xlu0 %v4818, 64
        %v4864 = vpop.permute.xlu0 %4863
        %4865 = vrot.lane.b32.xlu0 %v4819, 64
        %v4866 = vpop.permute.xlu0 %4865
        %4867 = vrot.lane.b32.xlu0 %v4820, 64
        %v4868 = vpop.permute.xlu0 %4867
        %v4885 = vsel %vm668, %v4838, 0.0
        %4886 = vadd.xlane.f32.xlu0 %v4885
        %v4887 = vpop.xlane.xlu0 %4886
        %v4888 = vsel %vm668, %v4840, 0.0
        %4889 = vadd.xlane.f32.xlu0 %v4888
        %v4890 = vpop.xlane.xlu0 %4889
        %v4891 = vsel %vm668, %v4842, 0.0
        %4892 = vadd.xlane.f32.xlu0 %v4891
        %v4893 = vpop.xlane.xlu0 %4892
        %v4894 = vsel %vm668, %v4844, 0.0
        %4895 = vadd.xlane.f32.xlu0 %v4894
        %v4896 = vpop.xlane.xlu0 %4895
        %v4897 = vsel %vm668, %v4846, 0.0
        %4898 = vadd.xlane.f32.xlu0 %v4897
        %v4899 = vpop.xlane.xlu0 %4898
        %v4900 = vsel %vm668, %v4848, 0.0
        %4901 = vadd.xlane.f32.xlu0 %v4900
        %v4902 = vpop.xlane.xlu0 %4901
        %v4903 = vsel %vm668, %v4850, 0.0
        %4904 = vadd.xlane.f32.xlu0 %v4903
        %v4905 = vpop.xlane.xlu0 %4904
        %v4906 = vsel %vm668, %v4852, 0.0
        %4907 = vadd.xlane.f32.xlu0 %v4906
        %v4908 = vpop.xlane.xlu0 %4907
        %v4909 = vsel %vm668, %v4854, 0.0
        %4910 = vadd.xlane.f32.xlu0 %v4909
        %v4911 = vpop.xlane.xlu0 %4910
        %v4912 = vsel %vm668, %v4856, 0.0
        %4913 = vadd.xlane.f32.xlu0 %v4912
        %v4914 = vpop.xlane.xlu0 %4913
        %v4915 = vsel %vm668, %v4858, 0.0
        %4916 = vadd.xlane.f32.xlu0 %v4915
        %v4917 = vpop.xlane.xlu0 %4916
        %v4918 = vsel %vm668, %v4860, 0.0
        %4919 = vadd.xlane.f32.xlu0 %v4918
        %v4920 = vpop.xlane.xlu0 %4919
        %v4921 = vsel %vm668, %v4862, 0.0
        %4922 = vadd.xlane.f32.xlu0 %v4921
        %v4923 = vpop.xlane.xlu0 %4922
        %v4924 = vsel %vm668, %v4864, 0.0
        %4925 = vadd.xlane.f32.xlu0 %v4924
        %v4926 = vpop.xlane.xlu0 %4925
        %v4927 = vsel %vm668, %v4866, 0.0
        %4928 = vadd.xlane.f32.xlu0 %v4927
        %v4929 = vpop.xlane.xlu0 %4928
        %v4930 = vsel %vm668, %v4868, 0.0
        %4931 = vadd.xlane.f32.xlu0 %v4930
        %v4932 = vpop.xlane.xlu0 %4931
        %vm4933 = vcmp.eq.s32.totalorder %v2325, 19
        %v4934 = vsel %vm4933, %v4887, 0.0
        %v4935 = vsel %vm4933, %v4890, 0.0
        %v4936 = vsel %vm4933, %v4893, 0.0
        %v4937 = vsel %vm4933, %v4896, 0.0
        %v4938 = vsel %vm4933, %v4899, 0.0
        %v4939 = vsel %vm4933, %v4902, 0.0
        %v4940 = vsel %vm4933, %v4905, 0.0
        %v4941 = vsel %vm4933, %v4908, 0.0
        %v4942 = vsel %vm4933, %v4911, 0.0
        %v4943 = vsel %vm4933, %v4914, 0.0
        %v4944 = vsel %vm4933, %v4917, 0.0
        %v4945 = vsel %vm4933, %v4920, 0.0
        %v4946 = vsel %vm4933, %v4923, 0.0
        %v4947 = vsel %vm4933, %v4926, 0.0
        %v4948 = vsel %vm4933, %v4929, 0.0
        %v4949 = vsel %vm4933, %v4932, 0.0
        %v4950 = vadd.f32 %v4784, %v4934
        %v4951 = vadd.f32 %v4785, %v4935
        %v4952 = vadd.f32 %v4786, %v4936
        %v4953 = vadd.f32 %v4787, %v4937
        %v4954 = vadd.f32 %v4788, %v4938
        %v4955 = vadd.f32 %v4789, %v4939
        %v4956 = vadd.f32 %v4790, %v4940
        %v4957 = vadd.f32 %v4791, %v4941
        %v4958 = vadd.f32 %v4792, %v4942
        %v4959 = vadd.f32 %v4793, %v4943
        %v4960 = vadd.f32 %v4794, %v4944
        %v4961 = vadd.f32 %v4795, %v4945
        %v4962 = vadd.f32 %v4796, %v4946
        %v4963 = vadd.f32 %v4797, %v4947
        %v4964 = vadd.f32 %v4798, %v4948
        %v4965 = vadd.f32 %v4799, %v4949
        %v4966 = vperm.slane %v2323, 4
        %v4967 = vmul.f32 %v2139, %v4966
        %v4968 = vmul.f32 %v2151, %v4966
        %v4969 = vmul.f32 %v2163, %v4966
        %v4970 = vmul.f32 %v2175, %v4966
        %v4971 = vmul.f32 %v2187, %v4966
        %v4972 = vmul.f32 %v2199, %v4966
        %v4973 = vmul.f32 %v2211, %v4966
        %v4974 = vmul.f32 %v2223, %v4966
        %v4975 = vmul.f32 %v2235, %v4966
        %v4976 = vmul.f32 %v2247, %v4966
        %v4977 = vmul.f32 %v2259, %v4966
        %v4978 = vmul.f32 %v2271, %v4966
        %v4979 = vmul.f32 %v2283, %v4966
        %v4980 = vmul.f32 %v2295, %v4966
        %v4981 = vmul.f32 %v2307, %v4966
        %v4982 = vmul.f32 %v2319, %v4966
        %v4983 = vsel %vm668, %v4967, 0.0
        %4984 = vadd.xlane.f32.xlu0 %v4983
        %v4985 = vpop.xlane.xlu0 %4984
        %v4986 = vsel %vm668, %v4968, 0.0
        %4987 = vadd.xlane.f32.xlu0 %v4986
        %v4988 = vpop.xlane.xlu0 %4987
        %v4989 = vsel %vm668, %v4969, 0.0
        %4990 = vadd.xlane.f32.xlu0 %v4989
        %v4991 = vpop.xlane.xlu0 %4990
        %v4992 = vsel %vm668, %v4970, 0.0
        %4993 = vadd.xlane.f32.xlu0 %v4992
        %v4994 = vpop.xlane.xlu0 %4993
        %v4995 = vsel %vm668, %v4971, 0.0
        %4996 = vadd.xlane.f32.xlu0 %v4995
        %v4997 = vpop.xlane.xlu0 %4996
        %v4998 = vsel %vm668, %v4972, 0.0
        %4999 = vadd.xlane.f32.xlu0 %v4998
        %v5000 = vpop.xlane.xlu0 %4999
        %v5001 = vsel %vm668, %v4973, 0.0
        %5002 = vadd.xlane.f32.xlu0 %v5001
        %v5003 = vpop.xlane.xlu0 %5002
        %v5004 = vsel %vm668, %v4974, 0.0
        %5005 = vadd.xlane.f32.xlu0 %v5004
        %v5006 = vpop.xlane.xlu0 %5005
        %v5007 = vsel %vm668, %v4975, 0.0
        %5008 = vadd.xlane.f32.xlu0 %v5007
        %v5009 = vpop.xlane.xlu0 %5008
        %v5010 = vsel %vm668, %v4976, 0.0
        %5011 = vadd.xlane.f32.xlu0 %v5010
        %v5012 = vpop.xlane.xlu0 %5011
        %v5013 = vsel %vm668, %v4977, 0.0
        %5014 = vadd.xlane.f32.xlu0 %v5013
        %v5015 = vpop.xlane.xlu0 %5014
        %v5016 = vsel %vm668, %v4978, 0.0
        %5017 = vadd.xlane.f32.xlu0 %v5016
        %v5018 = vpop.xlane.xlu0 %5017
        %v5019 = vsel %vm668, %v4979, 0.0
        %5020 = vadd.xlane.f32.xlu0 %v5019
        %v5021 = vpop.xlane.xlu0 %5020
        %v5022 = vsel %vm668, %v4980, 0.0
        %5023 = vadd.xlane.f32.xlu0 %v5022
        %v5024 = vpop.xlane.xlu0 %5023
        %v5025 = vsel %vm668, %v4981, 0.0
        %5026 = vadd.xlane.f32.xlu0 %v5025
        %v5027 = vpop.xlane.xlu0 %5026
        %v5028 = vsel %vm668, %v4982, 0.0
        %5029 = vadd.xlane.f32.xlu0 %v5028
        %v5030 = vpop.xlane.xlu0 %5029
        %vm5031 = vcmp.eq.s32.totalorder %v2325, 20
        %v5032 = vsel %vm5031, %v4985, 0.0
        %v5033 = vsel %vm5031, %v4988, 0.0
        %v5034 = vsel %vm5031, %v4991, 0.0
        %v5035 = vsel %vm5031, %v4994, 0.0
        %v5036 = vsel %vm5031, %v4997, 0.0
        %v5037 = vsel %vm5031, %v5000, 0.0
        %v5038 = vsel %vm5031, %v5003, 0.0
        %v5039 = vsel %vm5031, %v5006, 0.0
        %v5040 = vsel %vm5031, %v5009, 0.0
        %v5041 = vsel %vm5031, %v5012, 0.0
        %v5042 = vsel %vm5031, %v5015, 0.0
        %v5043 = vsel %vm5031, %v5018, 0.0
        %v5044 = vsel %vm5031, %v5021, 0.0
        %v5045 = vsel %vm5031, %v5024, 0.0
        %v5046 = vsel %vm5031, %v5027, 0.0
        %v5047 = vsel %vm5031, %v5030, 0.0
        %v5048 = vadd.f32 %v4950, %v5032
        %v5049 = vadd.f32 %v4951, %v5033
        %v5050 = vadd.f32 %v4952, %v5034
        %v5051 = vadd.f32 %v4953, %v5035
        %v5052 = vadd.f32 %v4954, %v5036
        %v5053 = vadd.f32 %v4955, %v5037
        %v5054 = vadd.f32 %v4956, %v5038
        %v5055 = vadd.f32 %v4957, %v5039
        %v5056 = vadd.f32 %v4958, %v5040
        %v5057 = vadd.f32 %v4959, %v5041
        %v5058 = vadd.f32 %v4960, %v5042
        %v5059 = vadd.f32 %v4961, %v5043
        %v5060 = vadd.f32 %v4962, %v5044
        %v5061 = vadd.f32 %v4963, %v5045
        %v5062 = vadd.f32 %v4964, %v5046
        %v5063 = vadd.f32 %v4965, %v5047
        %v5064 = vperm.slane %v2323, 5
        %5066 = vrot.lane.b32.xlu0 %v5064, 64
        %v5067 = vpop.permute.xlu0 %5066
        %v5069 = vmul.f32 %v2139, %v5067
        %v5070 = vmul.f32 %v2151, %v5067
        %v5071 = vmul.f32 %v2163, %v5067
        %v5072 = vmul.f32 %v2175, %v5067
        %v5073 = vmul.f32 %v2187, %v5067
        %v5074 = vmul.f32 %v2199, %v5067
        %v5075 = vmul.f32 %v2211, %v5067
        %v5076 = vmul.f32 %v2223, %v5067
        %v5077 = vmul.f32 %v2235, %v5067
        %v5078 = vmul.f32 %v2247, %v5067
        %v5079 = vmul.f32 %v2259, %v5067
        %v5080 = vmul.f32 %v2271, %v5067
        %v5081 = vmul.f32 %v2283, %v5067
        %v5082 = vmul.f32 %v2295, %v5067
        %v5083 = vmul.f32 %v2307, %v5067
        %v5084 = vmul.f32 %v2319, %v5067
        %5101 = vrot.lane.b32.xlu0 %v5069, 64
        %v5102 = vpop.permute.xlu0 %5101
        %5103 = vrot.lane.b32.xlu0 %v5070, 64
        %v5104 = vpop.permute.xlu0 %5103
        %5105 = vrot.lane.b32.xlu0 %v5071, 64
        %v5106 = vpop.permute.xlu0 %5105
        %5107 = vrot.lane.b32.xlu0 %v5072, 64
        %v5108 = vpop.permute.xlu0 %5107
        %5109 = vrot.lane.b32.xlu0 %v5073, 64
        %v5110 = vpop.permute.xlu0 %5109
        %5111 = vrot.lane.b32.xlu0 %v5074, 64
        %v5112 = vpop.permute.xlu0 %5111
        %5113 = vrot.lane.b32.xlu0 %v5075, 64
        %v5114 = vpop.permute.xlu0 %5113
        %5115 = vrot.lane.b32.xlu0 %v5076, 64
        %v5116 = vpop.permute.xlu0 %5115
        %5117 = vrot.lane.b32.xlu0 %v5077, 64
        %v5118 = vpop.permute.xlu0 %5117
        %5119 = vrot.lane.b32.xlu0 %v5078, 64
        %v5120 = vpop.permute.xlu0 %5119
        %5121 = vrot.lane.b32.xlu0 %v5079, 64
        %v5122 = vpop.permute.xlu0 %5121
        %5123 = vrot.lane.b32.xlu0 %v5080, 64
        %v5124 = vpop.permute.xlu0 %5123
        %5125 = vrot.lane.b32.xlu0 %v5081, 64
        %v5126 = vpop.permute.xlu0 %5125
        %5127 = vrot.lane.b32.xlu0 %v5082, 64
        %v5128 = vpop.permute.xlu0 %5127
        %5129 = vrot.lane.b32.xlu0 %v5083, 64
        %v5130 = vpop.permute.xlu0 %5129
        %5131 = vrot.lane.b32.xlu0 %v5084, 64
        %v5132 = vpop.permute.xlu0 %5131
        %v5149 = vsel %vm668, %v5102, 0.0
        %5150 = vadd.xlane.f32.xlu0 %v5149
        %v5151 = vpop.xlane.xlu0 %5150
        %v5152 = vsel %vm668, %v5104, 0.0
        %5153 = vadd.xlane.f32.xlu0 %v5152
        %v5154 = vpop.xlane.xlu0 %5153
        %v5155 = vsel %vm668, %v5106, 0.0
        %5156 = vadd.xlane.f32.xlu0 %v5155
        %v5157 = vpop.xlane.xlu0 %5156
        %v5158 = vsel %vm668, %v5108, 0.0
        %5159 = vadd.xlane.f32.xlu0 %v5158
        %v5160 = vpop.xlane.xlu0 %5159
        %v5161 = vsel %vm668, %v5110, 0.0
        %5162 = vadd.xlane.f32.xlu0 %v5161
        %v5163 = vpop.xlane.xlu0 %5162
        %v5164 = vsel %vm668, %v5112, 0.0
        %5165 = vadd.xlane.f32.xlu0 %v5164
        %v5166 = vpop.xlane.xlu0 %5165
        %v5167 = vsel %vm668, %v5114, 0.0
        %5168 = vadd.xlane.f32.xlu0 %v5167
        %v5169 = vpop.xlane.xlu0 %5168
        %v5170 = vsel %vm668, %v5116, 0.0
        %5171 = vadd.xlane.f32.xlu0 %v5170
        %v5172 = vpop.xlane.xlu0 %5171
        %v5173 = vsel %vm668, %v5118, 0.0
        %5174 = vadd.xlane.f32.xlu0 %v5173
        %v5175 = vpop.xlane.xlu0 %5174
        %v5176 = vsel %vm668, %v5120, 0.0
        %5177 = vadd.xlane.f32.xlu0 %v5176
        %v5178 = vpop.xlane.xlu0 %5177
        %v5179 = vsel %vm668, %v5122, 0.0
        %5180 = vadd.xlane.f32.xlu0 %v5179
        %v5181 = vpop.xlane.xlu0 %5180
        %v5182 = vsel %vm668, %v5124, 0.0
        %5183 = vadd.xlane.f32.xlu0 %v5182
        %v5184 = vpop.xlane.xlu0 %5183
        %v5185 = vsel %vm668, %v5126, 0.0
        %5186 = vadd.xlane.f32.xlu0 %v5185
        %v5187 = vpop.xlane.xlu0 %5186
        %v5188 = vsel %vm668, %v5128, 0.0
        %5189 = vadd.xlane.f32.xlu0 %v5188
        %v5190 = vpop.xlane.xlu0 %5189
        %v5191 = vsel %vm668, %v5130, 0.0
        %5192 = vadd.xlane.f32.xlu0 %v5191
        %v5193 = vpop.xlane.xlu0 %5192
        %v5194 = vsel %vm668, %v5132, 0.0
        %5195 = vadd.xlane.f32.xlu0 %v5194
        %v5196 = vpop.xlane.xlu0 %5195
        %vm5197 = vcmp.eq.s32.totalorder %v2325, 21
        %v5198 = vsel %vm5197, %v5151, 0.0
        %v5199 = vsel %vm5197, %v5154, 0.0
        %v5200 = vsel %vm5197, %v5157, 0.0
        %v5201 = vsel %vm5197, %v5160, 0.0
        %v5202 = vsel %vm5197, %v5163, 0.0
        %v5203 = vsel %vm5197, %v5166, 0.0
        %v5204 = vsel %vm5197, %v5169, 0.0
        %v5205 = vsel %vm5197, %v5172, 0.0
        %v5206 = vsel %vm5197, %v5175, 0.0
        %v5207 = vsel %vm5197, %v5178, 0.0
        %v5208 = vsel %vm5197, %v5181, 0.0
        %v5209 = vsel %vm5197, %v5184, 0.0
        %v5210 = vsel %vm5197, %v5187, 0.0
        %v5211 = vsel %vm5197, %v5190, 0.0
        %v5212 = vsel %vm5197, %v5193, 0.0
        %v5213 = vsel %vm5197, %v5196, 0.0
        %v5214 = vadd.f32 %v5048, %v5198
        %v5215 = vadd.f32 %v5049, %v5199
        %v5216 = vadd.f32 %v5050, %v5200
        %v5217 = vadd.f32 %v5051, %v5201
        %v5218 = vadd.f32 %v5052, %v5202
        %v5219 = vadd.f32 %v5053, %v5203
        %v5220 = vadd.f32 %v5054, %v5204
        %v5221 = vadd.f32 %v5055, %v5205
        %v5222 = vadd.f32 %v5056, %v5206
        %v5223 = vadd.f32 %v5057, %v5207
        %v5224 = vadd.f32 %v5058, %v5208
        %v5225 = vadd.f32 %v5059, %v5209
        %v5226 = vadd.f32 %v5060, %v5210
        %v5227 = vadd.f32 %v5061, %v5211
        %v5228 = vadd.f32 %v5062, %v5212
        %v5229 = vadd.f32 %v5063, %v5213
        %v5230 = vperm.slane %v2323, 6
        %v5231 = vmul.f32 %v2140, %v5230
        %v5232 = vmul.f32 %v2152, %v5230
        %v5233 = vmul.f32 %v2164, %v5230
        %v5234 = vmul.f32 %v2176, %v5230
        %v5235 = vmul.f32 %v2188, %v5230
        %v5236 = vmul.f32 %v2200, %v5230
        %v5237 = vmul.f32 %v2212, %v5230
        %v5238 = vmul.f32 %v2224, %v5230
        %v5239 = vmul.f32 %v2236, %v5230
        %v5240 = vmul.f32 %v2248, %v5230
        %v5241 = vmul.f32 %v2260, %v5230
        %v5242 = vmul.f32 %v2272, %v5230
        %v5243 = vmul.f32 %v2284, %v5230
        %v5244 = vmul.f32 %v2296, %v5230
        %v5245 = vmul.f32 %v2308, %v5230
        %v5246 = vmul.f32 %v2320, %v5230
        %v5247 = vsel %vm668, %v5231, 0.0
        %5248 = vadd.xlane.f32.xlu0 %v5247
        %v5249 = vpop.xlane.xlu0 %5248
        %v5250 = vsel %vm668, %v5232, 0.0
        %5251 = vadd.xlane.f32.xlu0 %v5250
        %v5252 = vpop.xlane.xlu0 %5251
        %v5253 = vsel %vm668, %v5233, 0.0
        %5254 = vadd.xlane.f32.xlu0 %v5253
        %v5255 = vpop.xlane.xlu0 %5254
        %v5256 = vsel %vm668, %v5234, 0.0
        %5257 = vadd.xlane.f32.xlu0 %v5256
        %v5258 = vpop.xlane.xlu0 %5257
        %v5259 = vsel %vm668, %v5235, 0.0
        %5260 = vadd.xlane.f32.xlu0 %v5259
        %v5261 = vpop.xlane.xlu0 %5260
        %v5262 = vsel %vm668, %v5236, 0.0
        %5263 = vadd.xlane.f32.xlu0 %v5262
        %v5264 = vpop.xlane.xlu0 %5263
        %v5265 = vsel %vm668, %v5237, 0.0
        %5266 = vadd.xlane.f32.xlu0 %v5265
        %v5267 = vpop.xlane.xlu0 %5266
        %v5268 = vsel %vm668, %v5238, 0.0
        %5269 = vadd.xlane.f32.xlu0 %v5268
        %v5270 = vpop.xlane.xlu0 %5269
        %v5271 = vsel %vm668, %v5239, 0.0
        %5272 = vadd.xlane.f32.xlu0 %v5271
        %v5273 = vpop.xlane.xlu0 %5272
        %v5274 = vsel %vm668, %v5240, 0.0
        %5275 = vadd.xlane.f32.xlu0 %v5274
        %v5276 = vpop.xlane.xlu0 %5275
        %v5277 = vsel %vm668, %v5241, 0.0
        %5278 = vadd.xlane.f32.xlu0 %v5277
        %v5279 = vpop.xlane.xlu0 %5278
        %v5280 = vsel %vm668, %v5242, 0.0
        %5281 = vadd.xlane.f32.xlu0 %v5280
        %v5282 = vpop.xlane.xlu0 %5281
        %v5283 = vsel %vm668, %v5243, 0.0
        %5284 = vadd.xlane.f32.xlu0 %v5283
        %v5285 = vpop.xlane.xlu0 %5284
        %v5286 = vsel %vm668, %v5244, 0.0
        %5287 = vadd.xlane.f32.xlu0 %v5286
        %v5288 = vpop.xlane.xlu0 %5287
        %v5289 = vsel %vm668, %v5245, 0.0
        %5290 = vadd.xlane.f32.xlu0 %v5289
        %v5291 = vpop.xlane.xlu0 %5290
        %v5292 = vsel %vm668, %v5246, 0.0
        %5293 = vadd.xlane.f32.xlu0 %v5292
        %v5294 = vpop.xlane.xlu0 %5293
        %vm5295 = vcmp.eq.s32.totalorder %v2325, 22
        %v5296 = vsel %vm5295, %v5249, 0.0
        %v5297 = vsel %vm5295, %v5252, 0.0
        %v5298 = vsel %vm5295, %v5255, 0.0
        %v5299 = vsel %vm5295, %v5258, 0.0
        %v5300 = vsel %vm5295, %v5261, 0.0
        %v5301 = vsel %vm5295, %v5264, 0.0
        %v5302 = vsel %vm5295, %v5267, 0.0
        %v5303 = vsel %vm5295, %v5270, 0.0
        %v5304 = vsel %vm5295, %v5273, 0.0
        %v5305 = vsel %vm5295, %v5276, 0.0
        %v5306 = vsel %vm5295, %v5279, 0.0
        %v5307 = vsel %vm5295, %v5282, 0.0
        %v5308 = vsel %vm5295, %v5285, 0.0
        %v5309 = vsel %vm5295, %v5288, 0.0
        %v5310 = vsel %vm5295, %v5291, 0.0
        %v5311 = vsel %vm5295, %v5294, 0.0
        %v5312 = vadd.f32 %v5214, %v5296
        %v5313 = vadd.f32 %v5215, %v5297
        %v5314 = vadd.f32 %v5216, %v5298
        %v5315 = vadd.f32 %v5217, %v5299
        %v5316 = vadd.f32 %v5218, %v5300
        %v5317 = vadd.f32 %v5219, %v5301
        %v5318 = vadd.f32 %v5220, %v5302
        %v5319 = vadd.f32 %v5221, %v5303
        %v5320 = vadd.f32 %v5222, %v5304
        %v5321 = vadd.f32 %v5223, %v5305
        %v5322 = vadd.f32 %v5224, %v5306
        %v5323 = vadd.f32 %v5225, %v5307
        %v5324 = vadd.f32 %v5226, %v5308
        %v5325 = vadd.f32 %v5227, %v5309
        %v5326 = vadd.f32 %v5228, %v5310
        %v5327 = vadd.f32 %v5229, %v5311
        %v5328 = vld [vmem:[%s10] sm:$0x1]
        %v5330 = vperm.slane %v5328, 0
        %v5332 = vadd.f32 %v5312, %v5330
        %v5333 = vadd.f32 %v5313, %v5330
        %v5334 = vadd.f32 %v5314, %v5330
        %v5335 = vadd.f32 %v5315, %v5330
        %v5336 = vadd.f32 %v5316, %v5330
        %v5337 = vadd.f32 %v5317, %v5330
        %v5338 = vadd.f32 %v5318, %v5330
        %v5339 = vadd.f32 %v5319, %v5330
        %v5340 = vadd.f32 %v5320, %v5330
        %v5341 = vadd.f32 %v5321, %v5330
        %v5342 = vadd.f32 %v5322, %v5330
        %v5343 = vadd.f32 %v5323, %v5330
        %v5344 = vadd.f32 %v5324, %v5330
        %v5345 = vadd.f32 %v5325, %v5330
        %v5346 = vadd.f32 %v5326, %v5330
        %v5347 = vadd.f32 %v5327, %v5330
        %v5348 = vxor.u32 %v5332, 2147483648
        %v5349 = vxor.u32 %v5333, 2147483648
        %v5350 = vxor.u32 %v5334, 2147483648
        %v5351 = vxor.u32 %v5335, 2147483648
        %v5352 = vxor.u32 %v5336, 2147483648
        %v5353 = vxor.u32 %v5337, 2147483648
        %v5354 = vxor.u32 %v5338, 2147483648
        %v5355 = vxor.u32 %v5339, 2147483648
        %v5356 = vxor.u32 %v5340, 2147483648
        %v5357 = vxor.u32 %v5341, 2147483648
        %v5358 = vxor.u32 %v5342, 2147483648
        %v5359 = vxor.u32 %v5343, 2147483648
        %v5360 = vxor.u32 %v5344, 2147483648
        %v5361 = vxor.u32 %v5345, 2147483648
        %v5362 = vxor.u32 %v5346, 2147483648
        %v5363 = vxor.u32 %v5347, 2147483648
        %v5364 = vmul.f32 %v5348, 1.442695
        %v5365 = vpow.pop %v5364
        %v5366 = vmul.f32 %v5349, 1.442695
        %v5367 = vpow.pop %v5366
        %v5368 = vmul.f32 %v5350, 1.442695
        %v5369 = vpow.pop %v5368
        %v5370 = vmul.f32 %v5351, 1.442695
        %v5371 = vpow.pop %v5370
        %v5372 = vmul.f32 %v5352, 1.442695
        %v5373 = vpow.pop %v5372
        %v5374 = vmul.f32 %v5353, 1.442695
        %v5375 = vpow.pop %v5374
        %v5376 = vmul.f32 %v5354, 1.442695
        %v5377 = vpow.pop %v5376
        %v5378 = vmul.f32 %v5355, 1.442695
        %v5379 = vpow.pop %v5378
        %v5380 = vmul.f32 %v5356, 1.442695
        %v5381 = vpow.pop %v5380
        %v5382 = vmul.f32 %v5357, 1.442695
        %v5383 = vpow.pop %v5382
        %v5384 = vmul.f32 %v5358, 1.442695
        %v5385 = vpow.pop %v5384
        %v5386 = vmul.f32 %v5359, 1.442695
        %v5387 = vpow.pop %v5386
        %v5388 = vmul.f32 %v5360, 1.442695
        %v5389 = vpow.pop %v5388
        %v5390 = vmul.f32 %v5361, 1.442695
        %v5391 = vpow.pop %v5390
        %v5392 = vmul.f32 %v5362, 1.442695
        %v5393 = vpow.pop %v5392
        %v5394 = vmul.f32 %v5363, 1.442695
        %v5395 = vpow.pop %v5394
        %v5396 = vadd.f32 %v5365, 1.0
        %v5397 = vadd.f32 %v5367, 1.0
        %v5398 = vadd.f32 %v5369, 1.0
        %v5399 = vadd.f32 %v5371, 1.0
        %v5400 = vadd.f32 %v5373, 1.0
        %v5401 = vadd.f32 %v5375, 1.0
        %v5402 = vadd.f32 %v5377, 1.0
        %v5403 = vadd.f32 %v5379, 1.0
        %v5404 = vadd.f32 %v5381, 1.0
        %v5405 = vadd.f32 %v5383, 1.0
        %v5406 = vadd.f32 %v5385, 1.0
        %v5407 = vadd.f32 %v5387, 1.0
        %v5408 = vadd.f32 %v5389, 1.0
        %v5409 = vadd.f32 %v5391, 1.0
        %v5410 = vadd.f32 %v5393, 1.0
        %v5411 = vadd.f32 %v5395, 1.0
        %v5412 = vrcp.pop %v5396
        %v5413 = vmul.f32 %v5396, %v5412
        %v5414 = vsub.f32 1.0, %v5413
        %v5415 = vmul.f32 %v5412, %v5414
        %v5416 = vadd.f32 %v5412, %v5415
        %vm5417 = vweird.f32 %v5396
        %vm5418 = vweird.f32 %v5412
        %vm5419 = vmor %vm5417, %vm5418
        %v5420 = vsel %vm5419, %v5412, %v5416
        %v5421 = vand.u32 2147483647, %v5396
        %vm5422 = vcmp.eq.f32.partialorder %v5421, 8.507059e+37
        %v5423 = vand.u32 %v5396, 2147483648
        %v5424 = vor.u32 1.1754944e-38, %v5423
        %v5425 = vsel %vm5422, %v5424, %v5420
        %v5426 = vmul.f32 1.0, %v5425
        %v5427 = vrcp.pop %v5397
        %v5428 = vmul.f32 %v5397, %v5427
        %v5429 = vsub.f32 1.0, %v5428
        %v5430 = vmul.f32 %v5427, %v5429
        %v5431 = vadd.f32 %v5427, %v5430
        %vm5432 = vweird.f32 %v5397
        %vm5433 = vweird.f32 %v5427
        %vm5434 = vmor %vm5432, %vm5433
        %v5435 = vsel %vm5434, %v5427, %v5431
        %v5436 = vand.u32 2147483647, %v5397
        %vm5437 = vcmp.eq.f32.partialorder %v5436, 8.507059e+37
        %v5438 = vand.u32 %v5397, 2147483648
        %v5439 = vor.u32 1.1754944e-38, %v5438
        %v5440 = vsel %vm5437, %v5439, %v5435
        %v5441 = vmul.f32 1.0, %v5440
        %v5442 = vrcp.pop %v5398
        %v5443 = vmul.f32 %v5398, %v5442
        %v5444 = vsub.f32 1.0, %v5443
        %v5445 = vmul.f32 %v5442, %v5444
        %v5446 = vadd.f32 %v5442, %v5445
        %vm5447 = vweird.f32 %v5398
        %vm5448 = vweird.f32 %v5442
        %vm5449 = vmor %vm5447, %vm5448
        %v5450 = vsel %vm5449, %v5442, %v5446
        %v5451 = vand.u32 2147483647, %v5398
        %vm5452 = vcmp.eq.f32.partialorder %v5451, 8.507059e+37
        %v5453 = vand.u32 %v5398, 2147483648
        %v5454 = vor.u32 1.1754944e-38, %v5453
        %v5455 = vsel %vm5452, %v5454, %v5450
        %v5456 = vmul.f32 1.0, %v5455
        %v5457 = vrcp.pop %v5399
        %v5458 = vmul.f32 %v5399, %v5457
        %v5459 = vsub.f32 1.0, %v5458
        %v5460 = vmul.f32 %v5457, %v5459
        %v5461 = vadd.f32 %v5457, %v5460
        %vm5462 = vweird.f32 %v5399
        %vm5463 = vweird.f32 %v5457
        %vm5464 = vmor %vm5462, %vm5463
        %v5465 = vsel %vm5464, %v5457, %v5461
        %v5466 = vand.u32 2147483647, %v5399
        %vm5467 = vcmp.eq.f32.partialorder %v5466, 8.507059e+37
        %v5468 = vand.u32 %v5399, 2147483648
        %v5469 = vor.u32 1.1754944e-38, %v5468
        %v5470 = vsel %vm5467, %v5469, %v5465
        %v5471 = vmul.f32 1.0, %v5470
        %v5472 = vrcp.pop %v5400
        %v5473 = vmul.f32 %v5400, %v5472
        %v5474 = vsub.f32 1.0, %v5473
        %v5475 = vmul.f32 %v5472, %v5474
        %v5476 = vadd.f32 %v5472, %v5475
        %vm5477 = vweird.f32 %v5400
        %vm5478 = vweird.f32 %v5472
        %vm5479 = vmor %vm5477, %vm5478
        %v5480 = vsel %vm5479, %v5472, %v5476
        %v5481 = vand.u32 2147483647, %v5400
        %vm5482 = vcmp.eq.f32.partialorder %v5481, 8.507059e+37
        %v5483 = vand.u32 %v5400, 2147483648
        %v5484 = vor.u32 1.1754944e-38, %v5483
        %v5485 = vsel %vm5482, %v5484, %v5480
        %v5486 = vmul.f32 1.0, %v5485
        %v5487 = vrcp.pop %v5401
        %v5488 = vmul.f32 %v5401, %v5487
        %v5489 = vsub.f32 1.0, %v5488
        %v5490 = vmul.f32 %v5487, %v5489
        %v5491 = vadd.f32 %v5487, %v5490
        %vm5492 = vweird.f32 %v5401
        %vm5493 = vweird.f32 %v5487
        %vm5494 = vmor %vm5492, %vm5493
        %v5495 = vsel %vm5494, %v5487, %v5491
        %v5496 = vand.u32 2147483647, %v5401
        %vm5497 = vcmp.eq.f32.partialorder %v5496, 8.507059e+37
        %v5498 = vand.u32 %v5401, 2147483648
        %v5499 = vor.u32 1.1754944e-38, %v5498
        %v5500 = vsel %vm5497, %v5499, %v5495
        %v5501 = vmul.f32 1.0, %v5500
        %v5502 = vrcp.pop %v5402
        %v5503 = vmul.f32 %v5402, %v5502
        %v5504 = vsub.f32 1.0, %v5503
        %v5505 = vmul.f32 %v5502, %v5504
        %v5506 = vadd.f32 %v5502, %v5505
        %vm5507 = vweird.f32 %v5402
        %vm5508 = vweird.f32 %v5502
        %vm5509 = vmor %vm5507, %vm5508
        %v5510 = vsel %vm5509, %v5502, %v5506
        %v5511 = vand.u32 2147483647, %v5402
        %vm5512 = vcmp.eq.f32.partialorder %v5511, 8.507059e+37
        %v5513 = vand.u32 %v5402, 2147483648
        %v5514 = vor.u32 1.1754944e-38, %v5513
        %v5515 = vsel %vm5512, %v5514, %v5510
        %v5516 = vmul.f32 1.0, %v5515
        %v5517 = vrcp.pop %v5403
        %v5518 = vmul.f32 %v5403, %v5517
        %v5519 = vsub.f32 1.0, %v5518
        %v5520 = vmul.f32 %v5517, %v5519
        %v5521 = vadd.f32 %v5517, %v5520
        %vm5522 = vweird.f32 %v5403
        %vm5523 = vweird.f32 %v5517
        %vm5524 = vmor %vm5522, %vm5523
        %v5525 = vsel %vm5524, %v5517, %v5521
        %v5526 = vand.u32 2147483647, %v5403
        %vm5527 = vcmp.eq.f32.partialorder %v5526, 8.507059e+37
        %v5528 = vand.u32 %v5403, 2147483648
        %v5529 = vor.u32 1.1754944e-38, %v5528
        %v5530 = vsel %vm5527, %v5529, %v5525
        %v5531 = vmul.f32 1.0, %v5530
        %v5532 = vrcp.pop %v5404
        %v5533 = vmul.f32 %v5404, %v5532
        %v5534 = vsub.f32 1.0, %v5533
        %v5535 = vmul.f32 %v5532, %v5534
        %v5536 = vadd.f32 %v5532, %v5535
        %vm5537 = vweird.f32 %v5404
        %vm5538 = vweird.f32 %v5532
        %vm5539 = vmor %vm5537, %vm5538
        %v5540 = vsel %vm5539, %v5532, %v5536
        %v5541 = vand.u32 2147483647, %v5404
        %vm5542 = vcmp.eq.f32.partialorder %v5541, 8.507059e+37
        %v5543 = vand.u32 %v5404, 2147483648
        %v5544 = vor.u32 1.1754944e-38, %v5543
        %v5545 = vsel %vm5542, %v5544, %v5540
        %v5546 = vmul.f32 1.0, %v5545
        %v5547 = vrcp.pop %v5405
        %v5548 = vmul.f32 %v5405, %v5547
        %v5549 = vsub.f32 1.0, %v5548
        %v5550 = vmul.f32 %v5547, %v5549
        %v5551 = vadd.f32 %v5547, %v5550
        %vm5552 = vweird.f32 %v5405
        %vm5553 = vweird.f32 %v5547
        %vm5554 = vmor %vm5552, %vm5553
        %v5555 = vsel %vm5554, %v5547, %v5551
        %v5556 = vand.u32 2147483647, %v5405
        %vm5557 = vcmp.eq.f32.partialorder %v5556, 8.507059e+37
        %v5558 = vand.u32 %v5405, 2147483648
        %v5559 = vor.u32 1.1754944e-38, %v5558
        %v5560 = vsel %vm5557, %v5559, %v5555
        %v5561 = vmul.f32 1.0, %v5560
        %v5562 = vrcp.pop %v5406
        %v5563 = vmul.f32 %v5406, %v5562
        %v5564 = vsub.f32 1.0, %v5563
        %v5565 = vmul.f32 %v5562, %v5564
        %v5566 = vadd.f32 %v5562, %v5565
        %vm5567 = vweird.f32 %v5406
        %vm5568 = vweird.f32 %v5562
        %vm5569 = vmor %vm5567, %vm5568
        %v5570 = vsel %vm5569, %v5562, %v5566
        %v5571 = vand.u32 2147483647, %v5406
        %vm5572 = vcmp.eq.f32.partialorder %v5571, 8.507059e+37
        %v5573 = vand.u32 %v5406, 2147483648
        %v5574 = vor.u32 1.1754944e-38, %v5573
        %v5575 = vsel %vm5572, %v5574, %v5570
        %v5576 = vmul.f32 1.0, %v5575
        %v5577 = vrcp.pop %v5407
        %v5578 = vmul.f32 %v5407, %v5577
        %v5579 = vsub.f32 1.0, %v5578
        %v5580 = vmul.f32 %v5577, %v5579
        %v5581 = vadd.f32 %v5577, %v5580
        %vm5582 = vweird.f32 %v5407
        %vm5583 = vweird.f32 %v5577
        %vm5584 = vmor %vm5582, %vm5583
        %v5585 = vsel %vm5584, %v5577, %v5581
        %v5586 = vand.u32 2147483647, %v5407
        %vm5587 = vcmp.eq.f32.partialorder %v5586, 8.507059e+37
        %v5588 = vand.u32 %v5407, 2147483648
        %v5589 = vor.u32 1.1754944e-38, %v5588
        %v5590 = vsel %vm5587, %v5589, %v5585
        %v5591 = vmul.f32 1.0, %v5590
        %v5592 = vrcp.pop %v5408
        %v5593 = vmul.f32 %v5408, %v5592
        %v5594 = vsub.f32 1.0, %v5593
        %v5595 = vmul.f32 %v5592, %v5594
        %v5596 = vadd.f32 %v5592, %v5595
        %vm5597 = vweird.f32 %v5408
        %vm5598 = vweird.f32 %v5592
        %vm5599 = vmor %vm5597, %vm5598
        %v5600 = vsel %vm5599, %v5592, %v5596
        %v5601 = vand.u32 2147483647, %v5408
        %vm5602 = vcmp.eq.f32.partialorder %v5601, 8.507059e+37
        %v5603 = vand.u32 %v5408, 2147483648
        %v5604 = vor.u32 1.1754944e-38, %v5603
        %v5605 = vsel %vm5602, %v5604, %v5600
        %v5606 = vmul.f32 1.0, %v5605
        %v5607 = vrcp.pop %v5409
        %v5608 = vmul.f32 %v5409, %v5607
        %v5609 = vsub.f32 1.0, %v5608
        %v5610 = vmul.f32 %v5607, %v5609
        %v5611 = vadd.f32 %v5607, %v5610
        %vm5612 = vweird.f32 %v5409
        %vm5613 = vweird.f32 %v5607
        %vm5614 = vmor %vm5612, %vm5613
        %v5615 = vsel %vm5614, %v5607, %v5611
        %v5616 = vand.u32 2147483647, %v5409
        %vm5617 = vcmp.eq.f32.partialorder %v5616, 8.507059e+37
        %v5618 = vand.u32 %v5409, 2147483648
        %v5619 = vor.u32 1.1754944e-38, %v5618
        %v5620 = vsel %vm5617, %v5619, %v5615
        %v5621 = vmul.f32 1.0, %v5620
        %v5622 = vrcp.pop %v5410
        %v5623 = vmul.f32 %v5410, %v5622
        %v5624 = vsub.f32 1.0, %v5623
        %v5625 = vmul.f32 %v5622, %v5624
        %v5626 = vadd.f32 %v5622, %v5625
        %vm5627 = vweird.f32 %v5410
        %vm5628 = vweird.f32 %v5622
        %vm5629 = vmor %vm5627, %vm5628
        %v5630 = vsel %vm5629, %v5622, %v5626
        %v5631 = vand.u32 2147483647, %v5410
        %vm5632 = vcmp.eq.f32.partialorder %v5631, 8.507059e+37
        %v5633 = vand.u32 %v5410, 2147483648
        %v5634 = vor.u32 1.1754944e-38, %v5633
        %v5635 = vsel %vm5632, %v5634, %v5630
        %v5636 = vmul.f32 1.0, %v5635
        %v5637 = vrcp.pop %v5411
        %v5638 = vmul.f32 %v5411, %v5637
        %v5639 = vsub.f32 1.0, %v5638
        %v5640 = vmul.f32 %v5637, %v5639
        %v5641 = vadd.f32 %v5637, %v5640
        %vm5642 = vweird.f32 %v5411
        %vm5643 = vweird.f32 %v5637
        %vm5644 = vmor %vm5642, %vm5643
        %v5645 = vsel %vm5644, %v5637, %v5641
        %v5646 = vand.u32 2147483647, %v5411
        %vm5647 = vcmp.eq.f32.partialorder %v5646, 8.507059e+37
        %v5648 = vand.u32 %v5411, 2147483648
        %v5649 = vor.u32 1.1754944e-38, %v5648
        %v5650 = vsel %vm5647, %v5649, %v5645
        %v5651 = vmul.f32 1.0, %v5650
        %vm5652 = vcmask 187392
        %5653 = vst.msk [vmem:[%s455] sm:$0xff] %vm5652, %v5426
        %5654 = vst.msk [vmem:[%s455 + $0x8] sm:$0xff] %vm5652, %v5441
        %5655 = vst.msk [vmem:[%s455 + $0x10] sm:$0xff] %vm5652, %v5456
        %5656 = vst.msk [vmem:[%s455 + $0x18] sm:$0xff] %vm5652, %v5471
        %5657 = vst.msk [vmem:[%s455 + $0x20] sm:$0xff] %vm5652, %v5486
        %5658 = vst.msk [vmem:[%s455 + $0x28] sm:$0xff] %vm5652, %v5501
        %5659 = vst.msk [vmem:[%s455 + $0x30] sm:$0xff] %vm5652, %v5516
        %5660 = vst.msk [vmem:[%s455 + $0x38] sm:$0xff] %vm5652, %v5531
        %5661 = vst.msk [vmem:[%s455 + $0x40] sm:$0xff] %vm5652, %v5546
        %5662 = vst.msk [vmem:[%s455 + $0x48] sm:$0xff] %vm5652, %v5561
        %5663 = vst.msk [vmem:[%s455 + $0x50] sm:$0xff] %vm5652, %v5576
        %5664 = vst.msk [vmem:[%s455 + $0x58] sm:$0xff] %vm5652, %v5591
        %5665 = vst.msk [vmem:[%s455 + $0x60] sm:$0xff] %vm5652, %v5606
        %5666 = vst.msk [vmem:[%s455 + $0x68] sm:$0xff] %vm5652, %v5621
        %5667 = vst.msk [vmem:[%s455 + $0x70] sm:$0xff] %vm5652, %v5636
        %5668 = vst.msk [vmem:[%s455 + $0x78] sm:$0xff] %vm5652, %v5651
        %s5669 = smul.u32 16, %s25
        %p5670 = scmp.lt.s32.totalorder %s5669, 31
        %s5671 = scalar_select %p5670, %s5669, 31
        %s5672 = smul.addr %s5671, 8
        %s5673 = scalar_lea.vmem %s11, %s5672
        // Predicated region
        $region81: #{tpu_custom_call.1} parent=63 // pred_check
          %p5674 = pneg %p279
        $region82: #{tpu_custom_call.1} parent=63 // pred_check_branch
          %5676 = sbr.rel (%p5674) target = $region84
        $region83: #{tpu_custom_call.1} parent=63 // pred_region
          %s5677 = smul.u32 16, %s25
        $region84: #{tpu_custom_call.1} parent=63 // pred_fallthru
          _
      $region64: #{tpu_custom_call.1} parent=5 // pred_fallthru
        _
      %p5678 = scmp.le.s32.totalorder 2, %s20
      // Predicated region
      $region85: #{tpu_custom_call.1} parent=5 // pred_check
        %p5679 = pneg %p5678
      $region86: #{tpu_custom_call.1} parent=5 // pred_check_branch
        %5681 = sbr.rel (%p5679) target = $region88
      $region87: #{tpu_custom_call.1} parent=5 // pred_region
        %s5682 = ssub.s32 %s20, 2
        // Predicated region
        $region89: #{tpu_custom_call.1} parent=87 // pred_check
          %p5683 = pneg %p285
        $region90: #{tpu_custom_call.1} parent=87 // pred_check_branch
          %5685 = sbr.rel (%p5683) target = $region92
        $region91: #{tpu_custom_call.1} parent=87 // pred_region
          %s5686 = smul.u32 16, %s26
          %p5687 = scmp.lt.s32.totalorder %s5686, 31
          %s5688 = scalar_select %p5687, %s5686, 31
          %s5689 = smul.addr %s5688, 8
          %s5690 = scalar_lea.vmem %s11, %s5689
        $region92: #{tpu_custom_call.1} parent=87 // pred_fallthru
          _
      $region88: #{tpu_custom_call.1} parent=5 // pred_fallthru
        _
    $region6: #{tpu_custom_call.1} parent=1 // loop_footer
      %s24 = sadd.s32 1, %s20
    $region7: #{tpu_custom_call.1} parent=1 // loop_footer_branch
      %19 = sbr.rel target = $region3
    $region8: #{tpu_custom_call.1} parent=1 // loop_exit
      _
    %5691 = vsyncpa [#allocation3], 1
    %s5692 = scalar_lea.sflag [#allocation3], 1
    %5693 = vsyncpa %s5692, 1
    %5694 = vsyncpa [#allocation5], 1
    %5695 = vsyncpa [#allocation8], 1

</llo_original>
